<compile_context>
chip_gen: v5e
topology: v5e:2x2
jax: 0.10.0
libtpu: 0.0.40
codegen_flags: <defaults>
</compile_context>

<pallas_src>
import math
import functools

import jax
import jax.numpy as jnp
from jax.experimental import pallas as pl
from jax.experimental.pallas import tpu as pltpu


def _char_matching_kernel(*refs, eps, fuse_kv):
    if fuse_kv:
        (mlen_ref, q_ref, kv_ref,
         wq_ref, bq_ref, wkv_ref, bkv_ref,
         wo_ref, bo_ref, alpha_ref, beta_ref,
         hs_ref, hst_ref, out_ref) = refs
    else:
        (mlen_ref, q_ref, kv_ref,
         wq_ref, bq_ref, wk_ref, bk_ref, wv_ref, bv_ref,
         wo_ref, bo_ref, alpha_ref, beta_ref,
         hs_ref, hst_ref, out_ref) = refs

    TB, L, D = kv_ref.shape
    TBL = TB * L
    H = wq_ref.shape[1]
    heads = hs_ref.shape[1]
    mm_dtype = wq_ref.dtype

    kv3 = kv_ref[...]                                   # (TB, L, D) f32, kept for residual
    kv2 = kv3.reshape(TBL, D)
    kv_mm = kv2.astype(mm_dtype)
    q_mm = q_ref[...].astype(mm_dtype)                  # (TB, D)

    # Linear projections (nn.Linear: y = x @ W^T + b; W^T pre-transposed on host).
    Q = jnp.dot(q_mm, wq_ref[...], preferred_element_type=jnp.float32) + bq_ref[...]    # (TB, H)
    if fuse_kv:
        # Single (TBL, D) x (D, 2H) matmul; split is tile-aligned since H % 128 == 0.
        KV = jnp.dot(kv_mm, wkv_ref[...], preferred_element_type=jnp.float32) + bkv_ref[...]
        K = KV[:, :H]
        V = KV[:, H:]
    else:
        K = jnp.dot(kv_mm, wk_ref[...], preferred_element_type=jnp.float32) + bk_ref[...]   # (TBL, H)
        V = jnp.dot(kv_mm, wv_ref[...], preferred_element_type=jnp.float32) + bv_ref[...]   # (TBL, H)

    # Per-head dot products via the block-one-hot selector (1/sqrt(d_k) pre-folded):
    #   scores[b,j,h] = sum_d Q[b, h*dk+d] * K[b*L+j, h*dk+d] / sqrt(dk)
    kq = (K.reshape(TB, L, H) * Q[:, None, :]).reshape(TBL, H)
    scores = jnp.dot(kq, hs_ref[...], preferred_element_type=jnp.float32)                # (TBL, heads)
    scores = scores.reshape(TB, L, heads)

    # Length mask (j >= mask_len[b]).
    mlen = mlen_ref[...]                                                                 # (TB, 1) i32
    pos = jax.lax.broadcasted_iota(jnp.int32, (TB, L, 1), 1)
    masked = pos >= mlen[:, :, None]                                                     # (TB, L, 1)

    # Softmax over the key axis (L).  Fully-masked rows (mask_len==0) end up NaN and are
    # zeroed by the final mask, matching the PyTorch reference.  The approx reciprocal is
    # intentional (EUP slot, ~free; ~1e-3 relative error covered by the test tolerances).
    scores = jnp.where(masked, jnp.float32(-1e30), scores)
    m = jnp.max(scores, axis=1, keepdims=True)                                           # (TB, 1, heads)
    p = jnp.exp(scores - m)
    p = jnp.where(masked, 0.0, p)
    denom = jnp.sum(p, axis=1, keepdims=True)                                            # (TB, 1, heads)
    attw = p * pl.reciprocal(denom, approx=True)                                         # (TB, L, heads)

    # Broadcast per-head weight across its d_k lanes and scale V elementwise (no sum).
    w_full = jnp.dot(attw.reshape(TBL, heads), hst_ref[...],
                     preferred_element_type=jnp.float32)                                 # (TBL, H)
    sv = (w_full * V).astype(mm_dtype)
    attn = jnp.dot(sv, wo_ref[...], preferred_element_type=jnp.float32) + bo_ref[...]    # (TBL, D)

    # Residual + Norm (torch.std => unbiased, ddof = 1).  Per-row reciprocal on the EUP
    # path instead of a (rows x D) divide; approx=False keeps full f32 accuracy.
    x = kv2 + attn
    mean = jnp.sum(x, axis=-1, keepdims=True) * jnp.float32(1.0 / D)
    xc = x - mean
    var = jnp.sum(xc * xc, axis=-1, keepdims=True) * jnp.float32(1.0 / (D - 1))
    inv = pl.reciprocal(jnp.sqrt(var) + jnp.float32(eps), approx=False)                  # (TBL, 1)
    y = alpha_ref[...] * (xc * inv) + beta_ref[...]                                      # (TBL, D)

    # Zero out padded sequence positions.
    y = jnp.where(masked, 0.0, y.reshape(TB, L, D))
    out_ref[...] = y.astype(out_ref.dtype)


def _safe_vmem_limit_bytes():
    """Requested VMEM limit: ~75% of physical per-TC VMEM, capped at 96 MiB.
    v7x (64 MiB physical) -> 48 MiB; v5e/v6e (128 MiB) -> 96 MiB; fallback 48 MiB."""
    cap = 64 * 1024 * 1024
    try:
        info = pltpu.get_tpu_info()
        cap = int(getattr(info, "vmem_capacity_bytes", cap))
    except Exception:
        pass
    return min(int(cap * 3 // 4), 96 * 1024 * 1024)


def _pick_batch_tile(B, L, D, H, budget_bytes):
    """Largest batch tile (multiple of 8 dividing B, or B itself) whose working set fits
    the budget, preferring >= 2 (even) grid steps (v7x megacore) and >= 256 MXU rows."""
    def tile_bytes(t):
        rows = t * L
        io = 2 * 2 * rows * D * 4 + 2 * 2 * t * (D + 1) * 4   # kv/out (+q,mask), double-buffered
        tmp = 10 * rows * (D + H) * 4                          # live f32 temporaries in the body
        return io + tmp

    cands = sorted({t for t in range(8, B + 1, 8) if B % t == 0} | {B})
    fit = [t for t in cands if tile_bytes(t) <= budget_bytes] or [min(cands)]
    multi = [t for t in fit if B // t >= 2]
    even = [t for t in multi if (B // t) % 2 == 0]
    pool = even or multi or fit
    big = [t for t in pool if t * L >= 256]
    return max(big) if big else max(pool)


def prepare_char_matching_params(params, *, heads, matmul_dtype=jnp.bfloat16):
    """One-time host-side conversion: transpose, bf16 cast, K/V fusion, head selectors.
    Call once and reuse so repeated kernel invocations don't re-emit these ops."""
    H, D = params["wq"].shape
    assert H % heads == 0
    d_k = H // heads
    wdt = jnp.float32 if matmul_dtype is None else matmul_dtype
    fuse_kv = (H % 128 == 0)   # fuse only when the in-kernel split is lane-tile aligned

    prep = {
        "heads": heads, "hidden": H, "d_model": D, "fuse_kv": fuse_kv,
        "wq_t": params["wq"].T.astype(wdt),                           # (D, H)
        "bq": params["bq"].reshape(1, H).astype(jnp.float32),
        "wo_t": params["wo"].T.astype(wdt),                           # (H, D)
        "bo": params["bo"].reshape(1, D).astype(jnp.float32),
        "alpha": params["alpha"].reshape(1, D).astype(jnp.float32),
        "beta": params["beta"].reshape(1, D).astype(jnp.float32),
    }
    if fuse_kv:
        prep["wkv_t"] = jnp.concatenate([params["wk"].T, params["wv"].T], axis=1).astype(wdt)
        prep["bkv"] = jnp.concatenate([params["bk"], params["bv"]]).reshape(1, 2 * H).astype(jnp.float32)
    else:
        prep["wk_t"] = params["wk"].T.astype(wdt)
        prep["bk"] = params["bk"].reshape(1, H).astype(jnp.float32)
        prep["wv_t"] = params["wv"].T.astype(wdt)
        prep["bv"] = params["bv"].reshape(1, H).astype(jnp.float32)

    # Head selector: headsum[h*d_k + d, h'] = 1 iff h == h'; 1/sqrt(d_k) folded into the
    # score-side selector (host side, exact in f32).
    headsum = jnp.repeat(jnp.eye(heads, dtype=jnp.float32), d_k, axis=0)  # (H, heads)
    prep["headsum_scaled"] = headsum * jnp.float32(1.0 / math.sqrt(d_k))
    prep["headsum_t"] = headsum.T                                         # (heads, H), unscaled
    return prep


def char_matching_pallas(q, kv, mask_len, params, *, heads=None, eps=1e-6,
                         batch_tile=None, matmul_dtype=jnp.bfloat16,
                         out_dtype=jnp.float32):
    """q: (B, d_model), kv: (B, L, d_model), mask_len: (B,) int.

    `params` may be the raw PyTorch-style dict (needs `heads=`) or the output of
    prepare_char_matching_params (preferred for repeated calls)."""
    if "wq_t" not in params:
        params = prepare_char_matching_params(params, heads=heads, matmul_dtype=matmul_dtype)
    p = params
    H, fuse_kv = p["hidden"], p["fuse_kv"]

    B, L, D = kv.shape
    assert p["d_model"] == D
    mask2 = mask_len.astype(jnp.int32).reshape(B, 1)

    if fuse_kv:
        weight_args = (p["wq_t"], p["bq"], p["wkv_t"], p["bkv"],
                       p["wo_t"], p["bo"], p["alpha"], p["beta"],
                       p["headsum_scaled"], p["headsum_t"])
    else:
        weight_args = (p["wq_t"], p["bq"], p["wk_t"], p["bk"], p["wv_t"], p["bv"],
                       p["wo_t"], p["bo"], p["alpha"], p["beta"],
                       p["headsum_scaled"], p["headsum_t"])

    vmem_limit = _safe_vmem_limit_bytes()
    if batch_tile is None:
        weight_bytes = sum(int(w.size) * w.dtype.itemsize for w in weight_args)
        budget = max(int(vmem_limit * 0.6) - 2 * weight_bytes, 1 << 20)
        batch_tile = _pick_batch_tile(B, L, D, H, budget)
    TB = batch_tile
    assert B % TB == 0 and (TB % 8 == 0 or TB == B), (B, TB)

    kernel = functools.partial(_char_matching_kernel, eps=eps, fuse_kv=fuse_kv)

    # Batch-tiled activations (last block dims equal full array dims -> no lane padding,
    # no wrapper-side pad/slice HBM round trips).
    base_specs = [
        pl.BlockSpec((TB, 1), lambda i: (i, 0)),            # mask_len
        pl.BlockSpec((TB, D), lambda i: (i, 0)),            # q
        pl.BlockSpec((TB, L, D), lambda i: (i, 0, 0)),      # kv
    ]
    out_specs = pl.BlockSpec((TB, L, D), lambda i: (i, 0, 0))

    def run(weight_specs):
        f = pl.pallas_call(
            kernel,
            out_shape=jax.ShapeDtypeStruct((B, L, D), out_dtype),
            grid_spec=pltpu.PrefetchScalarGridSpec(
                num_scalar_prefetch=0,
                grid=(B // TB,),
                in_specs=base_specs + list(weight_specs),
                out_specs=out_specs,
            ),
            compiler_params=pltpu.CompilerParams(
                # Batch tiles are independent -> shard across TCs on v7x megacore.
                dimension_semantics=("parallel",),
                vmem_limit_bytes=vmem_limit,
            ),
        )
        return f(mask2, q, kv, *weight_args)

    try:
        # Preferred: grid-invariant operands resident in VMEM, single copy, no
        # per-step DMA, no double-buffer duplication.
        vspec = pl.BlockSpec(memory_space=pltpu.MemorySpace.VMEM)
        return run([vspec] * len(weight_args))
    except Exception:
        # Fallback: replicated blocked specs (constant index_map), as in the previous
        # validated version.  Correctness identical; only VMEM footprint differs.
        return run([pl.BlockSpec(tuple(w.shape), lambda i: (0, 0)) for w in weight_args])


def char_matching_reference(q, kv, mask_len, p, *, heads, eps=1e-6, matmul_dtype=None):
    """Pure-JAX re-implementation of the PyTorch forward (eval mode).

    matmul_dtype=jnp.bfloat16 mirrors the kernel's mixed-precision projections
    (f32 accumulation); matmul_dtype=None is the exact f32 PyTorch semantics."""
    B, L, D = kv.shape
    H = p["wq"].shape[0]
    d_k = H // heads

    def lin(x, w, b):
        if matmul_dtype is not None:
            x = x.astype(matmul_dtype)
            w = w.astype(matmul_dtype)
        return jnp.dot(x, w.T, preferred_element_type=jnp.float32) + b

    Q = lin(q, p["wq"], p["bq"])                                   # (B, H)
    K = lin(kv, p["wk"], p["bk"])                                  # (B, L, H)
    V = lin(kv, p["wv"], p["bv"])
    Qh = Q.reshape(B, 1, heads, d_k).transpose(0, 2, 1, 3)         # (B, h, 1, dk)
    Kh = K.reshape(B, L, heads, d_k).transpose(0, 2, 1, 3)         # (B, h, L, dk)
    Vh = V.reshape(B, L, heads, d_k).transpose(0, 2, 1, 3)
    scores = jnp.einsum("bhqd,bhkd->bhqk", Qh, Kh) / math.sqrt(d_k)    # (B,h,1,L)
    mask = jnp.arange(L)[None, :] >= mask_len[:, None]             # (B, L)
    scores = jnp.where(mask[:, None, None, :], -jnp.inf, scores)
    sm = jax.nn.softmax(scores, axis=-1)                           # (B,h,1,L)
    w = jnp.transpose(sm, (0, 1, 3, 2))                            # (B,h,L,1)
    outh = w * Vh                                                  # (B,h,L,dk)
    concat = outh.transpose(0, 2, 1, 3).reshape(B, L, H)
    attn = lin(concat, p["wo"], p["bo"])
    x = kv + attn
    mean = x.mean(-1, keepdims=True)
    std = jnp.sqrt(jnp.sum((x - mean) ** 2, -1, keepdims=True) / (D - 1))
    y = p["alpha"] * (x - mean) / (std + eps) + p["beta"]
    return jnp.where(mask[:, :, None], 0.0, y)


def make_params(key, d_model, hidden):
    ks = jax.random.split(key, 8)
    s = 0.1
    return {
        "wq": s * jax.random.normal(ks[0], (hidden, d_model), jnp.float32),
        "bq": s * jax.random.normal(ks[1], (hidden,), jnp.float32),
        "wk": s * jax.random.normal(ks[2], (hidden, d_model), jnp.float32),
        "bk": s * jax.random.normal(ks[3], (hidden,), jnp.float32),
        "wv": s * jax.random.normal(ks[4], (hidden, d_model), jnp.float32),
        "bv": s * jax.random.normal(ks[5], (hidden,), jnp.float32),
        "wo": s * jax.random.normal(ks[6], (d_model, hidden), jnp.float32),
        "bo": s * jax.random.normal(ks[7], (d_model,), jnp.float32),
        "alpha": jnp.ones((d_model,), jnp.float32),
        "beta": jnp.zeros((d_model,), jnp.float32),
    }


if __name__ == "__main__":
    # Small shapes; B=32 with L=8 lets the auto batch-tile pick TB=16 (2 parallel grid
    # steps), and D=32 exercises the unpadded (full-D) block path.
    B, L, d_model, hidden, heads = 32, 8, 32, 32, 4

    key = jax.random.PRNGKey(0)
    kq, kkv, kp = jax.random.split(key, 3)
    q = jax.random.normal(kq, (B, d_model), jnp.float32)          # single query per batch
    kv = jax.random.normal(kkv, (B, L, d_model), jnp.float32)
    mask_len = (jnp.arange(B, dtype=jnp.int32) % L) + 1           # lengths in [1, L]
    params = make_params(kp, d_model, hidden)

    prepared = prepare_char_matching_params(params, heads=heads, matmul_dtype=jnp.bfloat16)
    out = char_matching_pallas(q, kv, mask_len, prepared)
    out = jax.block_until_ready(out)
    assert out.shape == (B, L, d_model)

    # Tight check vs. a reference that mirrors the kernel's bf16 matmul operands
    # (remaining delta: accumulation order + intentional approx softmax reciprocal).
    ref_bf16 = char_matching_reference(q, kv, mask_len, params, heads=heads,
                                       matmul_dtype=jnp.bfloat16)
    err_bf16 = float(jnp.max(jnp.abs(out - ref_bf16)))
    assert jnp.allclose(out, ref_bf16, rtol=2e-3, atol=2e-3), err_bf16

    # Looser check vs. the exact f32 PyTorch semantics (bounds the deliberate
    # bf16 projection quantization).
    ref_f32 = char_matching_reference(q, kv, mask_len, params, heads=heads)
    err_f32 = float(jnp.max(jnp.abs(out - ref_f32)))
    assert jnp.allclose(out, ref_f32, rtol=2e-2, atol=2e-2), err_f32

    print("KERNEL_OK")
</pallas_src>

<mosaic_0001>
module attributes {stable_mosaic.version = 11 : i64} {
  func.func @_char_matching_kernel(%arg0: i32, %arg1: memref<16x1xi32, #tpu.memory_space<vmem>>, %arg2: memref<16x32xf32, #tpu.memory_space<vmem>>, %arg3: memref<16x8x32xf32, #tpu.memory_space<vmem>>, %arg4: memref<32x32xbf16, #tpu.memory_space<vmem>>, %arg5: memref<1x32xf32, #tpu.memory_space<vmem>>, %arg6: memref<32x32xbf16, #tpu.memory_space<vmem>>, %arg7: memref<1x32xf32, #tpu.memory_space<vmem>>, %arg8: memref<32x32xbf16, #tpu.memory_space<vmem>>, %arg9: memref<1x32xf32, #tpu.memory_space<vmem>>, %arg10: memref<32x32xbf16, #tpu.memory_space<vmem>>, %arg11: memref<1x32xf32, #tpu.memory_space<vmem>>, %arg12: memref<1x32xf32, #tpu.memory_space<vmem>>, %arg13: memref<1x32xf32, #tpu.memory_space<vmem>>, %arg14: memref<32x4xf32, #tpu.memory_space<vmem>>, %arg15: memref<4x32xf32, #tpu.memory_space<vmem>>, %arg16: memref<16x8x32xf32, #tpu.memory_space<vmem>>) attributes {dimension_semantics = [#tpu.dimension_semantics<parallel>], iteration_bounds = array<i64: 2>, scalar_prefetch = 0 : i64, scratch_operands = 0 : i64, tpu.core_type = #tpu.core_type<tc>, window_params = [{transform_indices = @transform_0, window_bounds = array<i64: 16, 1>}, {transform_indices = @transform_1, window_bounds = array<i64: 16, 32>}, {transform_indices = @transform_2, window_bounds = array<i64: 16, 8, 32>}, {pipeline_mode = #tpu.pipeline_mode<synchronous>, transform_indices = @transform_3, window_bounds = array<i64: 32, 32>}, {pipeline_mode = #tpu.pipeline_mode<synchronous>, transform_indices = @transform_4, window_bounds = array<i64: 1, 32>}, {pipeline_mode = #tpu.pipeline_mode<synchronous>, transform_indices = @transform_5, window_bounds = array<i64: 32, 32>}, {pipeline_mode = #tpu.pipeline_mode<synchronous>, transform_indices = @transform_6, window_bounds = array<i64: 1, 32>}, {pipeline_mode = #tpu.pipeline_mode<synchronous>, transform_indices = @transform_7, window_bounds = array<i64: 32, 32>}, {pipeline_mode = #tpu.pipeline_mode<synchronous>, transform_indices = @transform_8, window_bounds = array<i64: 1, 32>}, {pipeline_mode = #tpu.pipeline_mode<synchronous>, transform_indices = @transform_9, window_bounds = array<i64: 32, 32>}, {pipeline_mode = #tpu.pipeline_mode<synchronous>, transform_indices = @transform_10, window_bounds = array<i64: 1, 32>}, {pipeline_mode = #tpu.pipeline_mode<synchronous>, transform_indices = @transform_11, window_bounds = array<i64: 1, 32>}, {pipeline_mode = #tpu.pipeline_mode<synchronous>, transform_indices = @transform_12, window_bounds = array<i64: 1, 32>}, {pipeline_mode = #tpu.pipeline_mode<synchronous>, transform_indices = @transform_13, window_bounds = array<i64: 32, 4>}, {pipeline_mode = #tpu.pipeline_mode<synchronous>, transform_indices = @transform_14, window_bounds = array<i64: 4, 32>}, {transform_indices = @transform_15, window_bounds = array<i64: 16, 8, 32>}]} {
    %c0 = arith.constant 0 : index
    %c0_0 = arith.constant 0 : index
    %c0_1 = arith.constant 0 : index
    %0 = vector.load %arg3[%c0, %c0_0, %c0_1] : memref<16x8x32xf32, #tpu.memory_space<vmem>>, vector<16x8x32xf32>
    %1 = vector.shape_cast %0 : vector<16x8x32xf32> to vector<128x32xf32>
    %2 = arith.truncf %1 : vector<128x32xf32> to vector<128x32xbf16>
    %c0_2 = arith.constant 0 : index
    %c0_3 = arith.constant 0 : index
    %3 = vector.load %arg2[%c0_2, %c0_3] : memref<16x32xf32, #tpu.memory_space<vmem>>, vector<16x32xf32>
    %4 = arith.truncf %3 : vector<16x32xf32> to vector<16x32xbf16>
    %c0_4 = arith.constant 0 : index
    %c0_5 = arith.constant 0 : index
    %5 = vector.load %arg4[%c0_4, %c0_5] : memref<32x32xbf16, #tpu.memory_space<vmem>>, vector<32x32xbf16>
    %cst = arith.constant dense<0.000000e+00> : vector<16x32xf32>
    %6 = tpu.matmul %4, %5, %cst {dimension_numbers = #tpu.dot_dimension_numbers<[1], [0], [0], [1], [0, 0, 1, 1], [], []>} : vector<16x32xbf16>, vector<32x32xbf16>, vector<16x32xf32> -> vector<16x32xf32>
    %c0_6 = arith.constant 0 : index
    %c0_7 = arith.constant 0 : index
    %7 = vector.load %arg5[%c0_6, %c0_7] : memref<1x32xf32, #tpu.memory_space<vmem>>, vector<1x32xf32>
    %8 = vector.broadcast %7 : vector<1x32xf32> to vector<16x32xf32>
    %9 = arith.addf %6, %8 : vector<16x32xf32>
    %c0_8 = arith.constant 0 : index
    %c0_9 = arith.constant 0 : index
    %10 = vector.load %arg6[%c0_8, %c0_9] : memref<32x32xbf16, #tpu.memory_space<vmem>>, vector<32x32xbf16>
    %cst_10 = arith.constant dense<0.000000e+00> : vector<128x32xf32>
    %11 = tpu.matmul %2, %10, %cst_10 {dimension_numbers = #tpu.dot_dimension_numbers<[1], [0], [0], [1], [0, 0, 1, 1], [], []>} : vector<128x32xbf16>, vector<32x32xbf16>, vector<128x32xf32> -> vector<128x32xf32>
    %c0_11 = arith.constant 0 : index
    %c0_12 = arith.constant 0 : index
    %12 = vector.load %arg7[%c0_11, %c0_12] : memref<1x32xf32, #tpu.memory_space<vmem>>, vector<1x32xf32>
    %13 = vector.broadcast %12 : vector<1x32xf32> to vector<128x32xf32>
    %14 = arith.addf %11, %13 : vector<128x32xf32>
    %c0_13 = arith.constant 0 : index
    %c0_14 = arith.constant 0 : index
    %15 = vector.load %arg8[%c0_13, %c0_14] : memref<32x32xbf16, #tpu.memory_space<vmem>>, vector<32x32xbf16>
    %cst_15 = arith.constant dense<0.000000e+00> : vector<128x32xf32>
    %16 = tpu.matmul %2, %15, %cst_15 {dimension_numbers = #tpu.dot_dimension_numbers<[1], [0], [0], [1], [0, 0, 1, 1], [], []>} : vector<128x32xbf16>, vector<32x32xbf16>, vector<128x32xf32> -> vector<128x32xf32>
    %c0_16 = arith.constant 0 : index
    %c0_17 = arith.constant 0 : index
    %17 = vector.load %arg9[%c0_16, %c0_17] : memref<1x32xf32, #tpu.memory_space<vmem>>, vector<1x32xf32>
    %18 = vector.broadcast %17 : vector<1x32xf32> to vector<128x32xf32>
    %19 = arith.addf %16, %18 : vector<128x32xf32>
    %20 = vector.shape_cast %14 : vector<128x32xf32> to vector<16x8x32xf32>
    %21 = vector.shape_cast %9 : vector<16x32xf32> to vector<16x1x32xf32>
    %22 = vector.broadcast %21 : vector<16x1x32xf32> to vector<16x8x32xf32>
    %23 = arith.mulf %20, %22 : vector<16x8x32xf32>
    %24 = vector.shape_cast %23 : vector<16x8x32xf32> to vector<128x32xf32>
    %c0_18 = arith.constant 0 : index
    %c0_19 = arith.constant 0 : index
    %25 = vector.load %arg14[%c0_18, %c0_19] : memref<32x4xf32, #tpu.memory_space<vmem>>, vector<32x4xf32>
    %cst_20 = arith.constant dense<0.000000e+00> : vector<128x4xf32>
    %26 = tpu.matmul %24, %25, %cst_20 {dimension_numbers = #tpu.dot_dimension_numbers<[1], [0], [0], [1], [0, 0, 1, 1], [], []>} : vector<128x32xf32>, vector<32x4xf32>, vector<128x4xf32> -> vector<128x4xf32>
    %27 = vector.shape_cast %26 : vector<128x4xf32> to vector<16x8x4xf32>
    %c0_21 = arith.constant 0 : index
    %c0_22 = arith.constant 0 : index
    %28 = vector.load %arg1[%c0_21, %c0_22] : memref<16x1xi32, #tpu.memory_space<vmem>>, vector<16x1xi32>
    %29 = tpu.iota {dimensions = array<i32: 1>} : vector<16x8x1xi32>
    %30 = vector.shape_cast %28 : vector<16x1xi32> to vector<16x1x1xi32>
    %31 = vector.broadcast %30 : vector<16x1x1xi32> to vector<16x8x1xi32>
    %32 = arith.cmpi sge, %29, %31 : vector<16x8x1xi32>
    %cst_23 = arith.constant -1.000000e+30 : f32
    %33 = vector.shape_cast %32 : vector<16x8x1xi1> to vector<16x8x1xi1>
    %34 = vector.broadcast %33 : vector<16x8x1xi1> to vector<16x8x4xi1>
    %35 = vector.broadcast %cst_23 : f32 to vector<16x8x4xf32>
    %36 = arith.select %34, %35, %27 : vector<16x8x4xi1>, vector<16x8x4xf32>
    %cst_24 = arith.constant dense<0xFF800000> : vector<16x4xf32>
    %37 = vector.multi_reduction <maximumf>, %36, %cst_24 [1] : vector<16x8x4xf32> to vector<16x4xf32>
    %38 = vector.shape_cast %37 : vector<16x4xf32> to vector<16x1x4xf32>
    %39 = vector.broadcast %38 : vector<16x1x4xf32> to vector<16x8x4xf32>
    %40 = arith.subf %36, %39 : vector<16x8x4xf32>
    %41 = math.exp %40 : vector<16x8x4xf32>
    %cst_25 = arith.constant 0.000000e+00 : f32
    %42 = vector.shape_cast %32 : vector<16x8x1xi1> to vector<16x8x1xi1>
    %43 = vector.broadcast %42 : vector<16x8x1xi1> to vector<16x8x4xi1>
    %44 = vector.broadcast %cst_25 : f32 to vector<16x8x4xf32>
    %45 = arith.select %43, %44, %41 : vector<16x8x4xi1>, vector<16x8x4xf32>
    %cst_26 = arith.constant dense<0.000000e+00> : vector<16x4xf32>
    %46 = vector.multi_reduction <add>, %45, %cst_26 [1] : vector<16x8x4xf32> to vector<16x4xf32>
    %47 = vector.shape_cast %46 : vector<16x4xf32> to vector<16x1x4xf32>
    %48 = tpu.reciprocal %47 {approx = true} : vector<16x1x4xf32> -> vector<16x1x4xf32>
    %49 = vector.broadcast %48 : vector<16x1x4xf32> to vector<16x8x4xf32>
    %50 = arith.mulf %45, %49 : vector<16x8x4xf32>
    %51 = vector.shape_cast %50 : vector<16x8x4xf32> to vector<128x4xf32>
    %c0_27 = arith.constant 0 : index
    %c0_28 = arith.constant 0 : index
    %52 = vector.load %arg15[%c0_27, %c0_28] : memref<4x32xf32, #tpu.memory_space<vmem>>, vector<4x32xf32>
    %cst_29 = arith.constant dense<0.000000e+00> : vector<128x32xf32>
    %53 = tpu.matmul %51, %52, %cst_29 {dimension_numbers = #tpu.dot_dimension_numbers<[1], [0], [0], [1], [0, 0, 1, 1], [], []>} : vector<128x4xf32>, vector<4x32xf32>, vector<128x32xf32> -> vector<128x32xf32>
    %54 = arith.mulf %53, %19 : vector<128x32xf32>
    %55 = arith.truncf %54 : vector<128x32xf32> to vector<128x32xbf16>
    %c0_30 = arith.constant 0 : index
    %c0_31 = arith.constant 0 : index
    %56 = vector.load %arg10[%c0_30, %c0_31] : memref<32x32xbf16, #tpu.memory_space<vmem>>, vector<32x32xbf16>
    %cst_32 = arith.constant dense<0.000000e+00> : vector<128x32xf32>
    %57 = tpu.matmul %55, %56, %cst_32 {dimension_numbers = #tpu.dot_dimension_numbers<[1], [0], [0], [1], [0, 0, 1, 1], [], []>} : vector<128x32xbf16>, vector<32x32xbf16>, vector<128x32xf32> -> vector<128x32xf32>
    %c0_33 = arith.constant 0 : index
    %c0_34 = arith.constant 0 : index
    %58 = vector.load %arg11[%c0_33, %c0_34] : memref<1x32xf32, #tpu.memory_space<vmem>>, vector<1x32xf32>
    %59 = vector.broadcast %58 : vector<1x32xf32> to vector<128x32xf32>
    %60 = arith.addf %57, %59 : vector<128x32xf32>
    %61 = arith.addf %1, %60 : vector<128x32xf32>
    %cst_35 = arith.constant dense<0.000000e+00> : vector<128xf32>
    %62 = vector.multi_reduction <add>, %61, %cst_35 [1] : vector<128x32xf32> to vector<128xf32>
    %63 = vector.shape_cast %62 : vector<128xf32> to vector<128x1xf32>
    %cst_36 = arith.constant 3.125000e-02 : f32
    %64 = vector.broadcast %cst_36 : f32 to vector<128x1xf32>
    %65 = arith.mulf %63, %64 : vector<128x1xf32>
    %66 = vector.broadcast %65 : vector<128x1xf32> to vector<128x32xf32>
    %67 = arith.subf %61, %66 : vector<128x32xf32>
    %68 = arith.mulf %67, %67 : vector<128x32xf32>
    %cst_37 = arith.constant dense<0.000000e+00> : vector<128xf32>
    %69 = vector.multi_reduction <add>, %68, %cst_37 [1] : vector<128x32xf32> to vector<128xf32>
    %70 = vector.shape_cast %69 : vector<128xf32> to vector<128x1xf32>
    %cst_38 = arith.constant 0.0322580636 : f32
    %71 = vector.broadcast %cst_38 : f32 to vector<128x1xf32>
    %72 = arith.mulf %70, %71 : vector<128x1xf32>
    %73 = math.sqrt %72 : vector<128x1xf32>
    %cst_39 = arith.constant 9.99999997E-7 : f32
    %74 = vector.broadcast %cst_39 : f32 to vector<128x1xf32>
    %75 = arith.addf %73, %74 : vector<128x1xf32>
    %76 = tpu.reciprocal %75 : vector<128x1xf32> -> vector<128x1xf32>
    %c0_40 = arith.constant 0 : index
    %c0_41 = arith.constant 0 : index
    %77 = vector.load %arg12[%c0_40, %c0_41] : memref<1x32xf32, #tpu.memory_space<vmem>>, vector<1x32xf32>
    %78 = vector.broadcast %76 : vector<128x1xf32> to vector<128x32xf32>
    %79 = arith.mulf %67, %78 : vector<128x32xf32>
    %80 = vector.broadcast %77 : vector<1x32xf32> to vector<128x32xf32>
    %81 = arith.mulf %80, %79 : vector<128x32xf32>
    %c0_42 = arith.constant 0 : index
    %c0_43 = arith.constant 0 : index
    %82 = vector.load %arg13[%c0_42, %c0_43] : memref<1x32xf32, #tpu.memory_space<vmem>>, vector<1x32xf32>
    %83 = vector.broadcast %82 : vector<1x32xf32> to vector<128x32xf32>
    %84 = arith.addf %81, %83 : vector<128x32xf32>
    %85 = vector.shape_cast %84 : vector<128x32xf32> to vector<16x8x32xf32>
    %cst_44 = arith.constant 0.000000e+00 : f32
    %86 = vector.shape_cast %32 : vector<16x8x1xi1> to vector<16x8x1xi1>
    %87 = vector.broadcast %86 : vector<16x8x1xi1> to vector<16x8x32xi1>
    %88 = vector.broadcast %cst_44 : f32 to vector<16x8x32xf32>
    %89 = arith.select %87, %88, %85 : vector<16x8x32xi1>, vector<16x8x32xf32>
    %c0_45 = arith.constant 0 : index
    %c0_46 = arith.constant 0 : index
    %c0_47 = arith.constant 0 : index
    %90 = vector.load %arg16[%c0_45, %c0_46, %c0_47] : memref<16x8x32xf32, #tpu.memory_space<vmem>>, vector<16x8x32xf32>
    tpu.vector_store %arg16[%c0_45, %c0_46, %c0_47], %89 {strides = array<i32>} : memref<16x8x32xf32, #tpu.memory_space<vmem>>, vector<16x8x32xf32>,
    return
  }
  func.func @transform_0(%arg0: i32) -> (i32, i32) {
    %c0_i32 = arith.constant 0 : i32
    %c0_i32_0 = arith.constant 0 : i32
    return %arg0, %c0_i32 : i32, i32
  }
  func.func @transform_1(%arg0: i32) -> (i32, i32) {
    %c0_i32 = arith.constant 0 : i32
    %c0_i32_0 = arith.constant 0 : i32
    return %arg0, %c0_i32 : i32, i32
  }
  func.func @transform_2(%arg0: i32) -> (i32, i32, i32) {
    %c0_i32 = arith.constant 0 : i32
    %c0_i32_0 = arith.constant 0 : i32
    %c0_i32_1 = arith.constant 0 : i32
    return %arg0, %c0_i32, %c0_i32_0 : i32, i32, i32
  }
  func.func @transform_3(%arg0: i32) -> (i32, i32) {
    %c0_i32 = arith.constant 0 : i32
    %c0_i32_0 = arith.constant 0 : i32
    %c0_i32_1 = arith.constant 0 : i32
    return %c0_i32, %c0_i32_0 : i32, i32
  }
  func.func @transform_4(%arg0: i32) -> (i32, i32) {
    %c0_i32 = arith.constant 0 : i32
    %c0_i32_0 = arith.constant 0 : i32
    %c0_i32_1 = arith.constant 0 : i32
    return %c0_i32, %c0_i32_0 : i32, i32
  }
  func.func @transform_5(%arg0: i32) -> (i32, i32) {
    %c0_i32 = arith.constant 0 : i32
    %c0_i32_0 = arith.constant 0 : i32
    %c0_i32_1 = arith.constant 0 : i32
    return %c0_i32, %c0_i32_0 : i32, i32
  }
  func.func @transform_6(%arg0: i32) -> (i32, i32) {
    %c0_i32 = arith.constant 0 : i32
    %c0_i32_0 = arith.constant 0 : i32
    %c0_i32_1 = arith.constant 0 : i32
    return %c0_i32, %c0_i32_0 : i32, i32
  }
  func.func @transform_7(%arg0: i32) -> (i32, i32) {
    %c0_i32 = arith.constant 0 : i32
    %c0_i32_0 = arith.constant 0 : i32
    %c0_i32_1 = arith.constant 0 : i32
    return %c0_i32, %c0_i32_0 : i32, i32
  }
  func.func @transform_8(%arg0: i32) -> (i32, i32) {
    %c0_i32 = arith.constant 0 : i32
    %c0_i32_0 = arith.constant 0 : i32
    %c0_i32_1 = arith.constant 0 : i32
    return %c0_i32, %c0_i32_0 : i32, i32
  }
  func.func @transform_9(%arg0: i32) -> (i32, i32) {
    %c0_i32 = arith.constant 0 : i32
    %c0_i32_0 = arith.constant 0 : i32
    %c0_i32_1 = arith.constant 0 : i32
    return %c0_i32, %c0_i32_0 : i32, i32
  }
  func.func @transform_10(%arg0: i32) -> (i32, i32) {
    %c0_i32 = arith.constant 0 : i32
    %c0_i32_0 = arith.constant 0 : i32
    %c0_i32_1 = arith.constant 0 : i32
    return %c0_i32, %c0_i32_0 : i32, i32
  }
  func.func @transform_11(%arg0: i32) -> (i32, i32) {
    %c0_i32 = arith.constant 0 : i32
    %c0_i32_0 = arith.constant 0 : i32
    %c0_i32_1 = arith.constant 0 : i32
    return %c0_i32, %c0_i32_0 : i32, i32
  }
  func.func @transform_12(%arg0: i32) -> (i32, i32) {
    %c0_i32 = arith.constant 0 : i32
    %c0_i32_0 = arith.constant 0 : i32
    %c0_i32_1 = arith.constant 0 : i32
    return %c0_i32, %c0_i32_0 : i32, i32
  }
  func.func @transform_13(%arg0: i32) -> (i32, i32) {
    %c0_i32 = arith.constant 0 : i32
    %c0_i32_0 = arith.constant 0 : i32
    %c0_i32_1 = arith.constant 0 : i32
    return %c0_i32, %c0_i32_0 : i32, i32
  }
  func.func @transform_14(%arg0: i32) -> (i32, i32) {
    %c0_i32 = arith.constant 0 : i32
    %c0_i32_0 = arith.constant 0 : i32
    %c0_i32_1 = arith.constant 0 : i32
    return %c0_i32, %c0_i32_0 : i32, i32
  }
  func.func @transform_15(%arg0: i32) -> (i32, i32, i32) {
    %c0_i32 = arith.constant 0 : i32
    %c0_i32_0 = arith.constant 0 : i32
    %c0_i32_1 = arith.constant 0 : i32
    return %arg0, %c0_i32, %c0_i32_0 : i32, i32, i32
  }
}

module attributes {stable_mosaic.version = 11 : i64} {
  func.func @_char_matching_kernel(%arg0: i32, %arg1: memref<16x1xi32, #tpu.memory_space<vmem>>, %arg2: memref<16x32xf32, #tpu.memory_space<vmem>>, %arg3: memref<16x8x32xf32, #tpu.memory_space<vmem>>, %arg4: memref<32x32xbf16, #tpu.memory_space<vmem>>, %arg5: memref<1x32xf32, #tpu.memory_space<vmem>>, %arg6: memref<32x32xbf16, #tpu.memory_space<vmem>>, %arg7: memref<1x32xf32, #tpu.memory_space<vmem>>, %arg8: memref<32x32xbf16, #tpu.memory_space<vmem>>, %arg9: memref<1x32xf32, #tpu.memory_space<vmem>>, %arg10: memref<32x32xbf16, #tpu.memory_space<vmem>>, %arg11: memref<1x32xf32, #tpu.memory_space<vmem>>, %arg12: memref<1x32xf32, #tpu.memory_space<vmem>>, %arg13: memref<1x32xf32, #tpu.memory_space<vmem>>, %arg14: memref<32x4xf32, #tpu.memory_space<vmem>>, %arg15: memref<4x32xf32, #tpu.memory_space<vmem>>, %arg16: memref<16x8x32xf32, #tpu.memory_space<vmem>>) attributes {dimension_semantics = [#tpu.dimension_semantics<parallel>], iteration_bounds = array<i64: 2>, scalar_prefetch = 0 : i64, scratch_operands = 0 : i64, tpu.core_type = #tpu.core_type<tc>, window_params = [{transform_indices = @transform_0, window_bounds = array<i64: 16, 1>}, {transform_indices = @transform_1, window_bounds = array<i64: 16, 32>}, {transform_indices = @transform_2, window_bounds = array<i64: 16, 8, 32>}, {pipeline_mode = #tpu.pipeline_mode<synchronous>, transform_indices = @transform_3, window_bounds = array<i64: 32, 32>}, {pipeline_mode = #tpu.pipeline_mode<synchronous>, transform_indices = @transform_4, window_bounds = array<i64: 1, 32>}, {pipeline_mode = #tpu.pipeline_mode<synchronous>, transform_indices = @transform_5, window_bounds = array<i64: 32, 32>}, {pipeline_mode = #tpu.pipeline_mode<synchronous>, transform_indices = @transform_6, window_bounds = array<i64: 1, 32>}, {pipeline_mode = #tpu.pipeline_mode<synchronous>, transform_indices = @transform_7, window_bounds = array<i64: 32, 32>}, {pipeline_mode = #tpu.pipeline_mode<synchronous>, transform_indices = @transform_8, window_bounds = array<i64: 1, 32>}, {pipeline_mode = #tpu.pipeline_mode<synchronous>, transform_indices = @transform_9, window_bounds = array<i64: 32, 32>}, {pipeline_mode = #tpu.pipeline_mode<synchronous>, transform_indices = @transform_10, window_bounds = array<i64: 1, 32>}, {pipeline_mode = #tpu.pipeline_mode<synchronous>, transform_indices = @transform_11, window_bounds = array<i64: 1, 32>}, {pipeline_mode = #tpu.pipeline_mode<synchronous>, transform_indices = @transform_12, window_bounds = array<i64: 1, 32>}, {pipeline_mode = #tpu.pipeline_mode<synchronous>, transform_indices = @transform_13, window_bounds = array<i64: 32, 4>}, {pipeline_mode = #tpu.pipeline_mode<synchronous>, transform_indices = @transform_14, window_bounds = array<i64: 4, 32>}, {transform_indices = @transform_15, window_bounds = array<i64: 16, 8, 32>}]} {
    %c0 = arith.constant 0 : index
    %c0_0 = arith.constant 0 : index
    %c0_1 = arith.constant 0 : index
    %0 = vector.load %arg3[%c0, %c0_0, %c0_1] : memref<16x8x32xf32, #tpu.memory_space<vmem>>, vector<16x8x32xf32>
    %1 = vector.shape_cast %0 : vector<16x8x32xf32> to vector<128x32xf32>
    %2 = arith.truncf %1 : vector<128x32xf32> to vector<128x32xbf16>
    %c0_2 = arith.constant 0 : index
    %c0_3 = arith.constant 0 : index
    %3 = vector.load %arg2[%c0_2, %c0_3] : memref<16x32xf32, #tpu.memory_space<vmem>>, vector<16x32xf32>
    %4 = arith.truncf %3 : vector<16x32xf32> to vector<16x32xbf16>
    %c0_4 = arith.constant 0 : index
    %c0_5 = arith.constant 0 : index
    %5 = vector.load %arg4[%c0_4, %c0_5] : memref<32x32xbf16, #tpu.memory_space<vmem>>, vector<32x32xbf16>
    %cst = arith.constant dense<0.000000e+00> : vector<16x32xf32>
    %6 = tpu.matmul %4, %5, %cst {dimension_numbers = #tpu.dot_dimension_numbers<[1], [0], [0], [1], [0, 0, 1, 1], [], []>} : vector<16x32xbf16>, vector<32x32xbf16>, vector<16x32xf32> -> vector<16x32xf32>
    %c0_6 = arith.constant 0 : index
    %c0_7 = arith.constant 0 : index
    %7 = vector.load %arg5[%c0_6, %c0_7] : memref<1x32xf32, #tpu.memory_space<vmem>>, vector<1x32xf32>
    %8 = vector.broadcast %7 : vector<1x32xf32> to vector<16x32xf32>
    %9 = arith.addf %6, %8 : vector<16x32xf32>
    %c0_8 = arith.constant 0 : index
    %c0_9 = arith.constant 0 : index
    %10 = vector.load %arg6[%c0_8, %c0_9] : memref<32x32xbf16, #tpu.memory_space<vmem>>, vector<32x32xbf16>
    %cst_10 = arith.constant dense<0.000000e+00> : vector<128x32xf32>
    %11 = tpu.matmul %2, %10, %cst_10 {dimension_numbers = #tpu.dot_dimension_numbers<[1], [0], [0], [1], [0, 0, 1, 1], [], []>} : vector<128x32xbf16>, vector<32x32xbf16>, vector<128x32xf32> -> vector<128x32xf32>
    %c0_11 = arith.constant 0 : index
    %c0_12 = arith.constant 0 : index
    %12 = vector.load %arg7[%c0_11, %c0_12] : memref<1x32xf32, #tpu.memory_space<vmem>>, vector<1x32xf32>
    %13 = vector.broadcast %12 : vector<1x32xf32> to vector<128x32xf32>
    %14 = arith.addf %11, %13 : vector<128x32xf32>
    %c0_13 = arith.constant 0 : index
    %c0_14 = arith.constant 0 : index
    %15 = vector.load %arg8[%c0_13, %c0_14] : memref<32x32xbf16, #tpu.memory_space<vmem>>, vector<32x32xbf16>
    %cst_15 = arith.constant dense<0.000000e+00> : vector<128x32xf32>
    %16 = tpu.matmul %2, %15, %cst_15 {dimension_numbers = #tpu.dot_dimension_numbers<[1], [0], [0], [1], [0, 0, 1, 1], [], []>} : vector<128x32xbf16>, vector<32x32xbf16>, vector<128x32xf32> -> vector<128x32xf32>
    %c0_16 = arith.constant 0 : index
    %c0_17 = arith.constant 0 : index
    %17 = vector.load %arg9[%c0_16, %c0_17] : memref<1x32xf32, #tpu.memory_space<vmem>>, vector<1x32xf32>
    %18 = vector.broadcast %17 : vector<1x32xf32> to vector<128x32xf32>
    %19 = arith.addf %16, %18 : vector<128x32xf32>
    %20 = vector.shape_cast %14 : vector<128x32xf32> to vector<16x8x32xf32>
    %21 = vector.shape_cast %9 : vector<16x32xf32> to vector<16x1x32xf32>
    %22 = vector.broadcast %21 : vector<16x1x32xf32> to vector<16x8x32xf32>
    %23 = arith.mulf %20, %22 : vector<16x8x32xf32>
    %24 = vector.shape_cast %23 : vector<16x8x32xf32> to vector<128x32xf32>
    %c0_18 = arith.constant 0 : index
    %c0_19 = arith.constant 0 : index
    %25 = vector.load %arg14[%c0_18, %c0_19] : memref<32x4xf32, #tpu.memory_space<vmem>>, vector<32x4xf32>
    %cst_20 = arith.constant dense<0.000000e+00> : vector<128x4xf32>
    %26 = tpu.matmul %24, %25, %cst_20 {dimension_numbers = #tpu.dot_dimension_numbers<[1], [0], [0], [1], [0, 0, 1, 1], [], []>} : vector<128x32xf32>, vector<32x4xf32>, vector<128x4xf32> -> vector<128x4xf32>
    %27 = vector.shape_cast %26 : vector<128x4xf32> to vector<16x8x4xf32>
    %c0_21 = arith.constant 0 : index
    %c0_22 = arith.constant 0 : index
    %28 = vector.load %arg1[%c0_21, %c0_22] : memref<16x1xi32, #tpu.memory_space<vmem>>, vector<16x1xi32>
    %29 = tpu.iota {dimensions = array<i32: 1>} : vector<16x8x1xi32>
    %30 = vector.shape_cast %28 : vector<16x1xi32> to vector<16x1x1xi32>
    %31 = vector.broadcast %30 : vector<16x1x1xi32> to vector<16x8x1xi32>
    %32 = arith.cmpi sge, %29, %31 : vector<16x8x1xi32>
    %cst_23 = arith.constant -1.000000e+30 : f32
    %33 = vector.shape_cast %32 : vector<16x8x1xi1> to vector<16x8x1xi1>
    %34 = vector.broadcast %33 : vector<16x8x1xi1> to vector<16x8x4xi1>
    %35 = vector.broadcast %cst_23 : f32 to vector<16x8x4xf32>
    %36 = arith.select %34, %35, %27 : vector<16x8x4xi1>, vector<16x8x4xf32>
    %cst_24 = arith.constant dense<0xFF800000> : vector<16x4xf32>
    %37 = vector.multi_reduction <maximumf>, %36, %cst_24 [1] : vector<16x8x4xf32> to vector<16x4xf32>
    %38 = vector.shape_cast %37 : vector<16x4xf32> to vector<16x1x4xf32>
    %39 = vector.broadcast %38 : vector<16x1x4xf32> to vector<16x8x4xf32>
    %40 = arith.subf %36, %39 : vector<16x8x4xf32>
    %41 = math.exp %40 : vector<16x8x4xf32>
    %cst_25 = arith.constant 0.000000e+00 : f32
    %42 = vector.shape_cast %32 : vector<16x8x1xi1> to vector<16x8x1xi1>
    %43 = vector.broadcast %42 : vector<16x8x1xi1> to vector<16x8x4xi1>
    %44 = vector.broadcast %cst_25 : f32 to vector<16x8x4xf32>
    %45 = arith.select %43, %44, %41 : vector<16x8x4xi1>, vector<16x8x4xf32>
    %cst_26 = arith.constant dense<0.000000e+00> : vector<16x4xf32>
    %46 = vector.multi_reduction <add>, %45, %cst_26 [1] : vector<16x8x4xf32> to vector<16x4xf32>
    %47 = vector.shape_cast %46 : vector<16x4xf32> to vector<16x1x4xf32>
    %48 = tpu.reciprocal %47 {approx = true} : vector<16x1x4xf32> -> vector<16x1x4xf32>
    %49 = vector.broadcast %48 : vector<16x1x4xf32> to vector<16x8x4xf32>
    %50 = arith.mulf %45, %49 : vector<16x8x4xf32>
    %51 = vector.shape_cast %50 : vector<16x8x4xf32> to vector<128x4xf32>
    %c0_27 = arith.constant 0 : index
    %c0_28 = arith.constant 0 : index
    %52 = vector.load %arg15[%c0_27, %c0_28] : memref<4x32xf32, #tpu.memory_space<vmem>>, vector<4x32xf32>
    %cst_29 = arith.constant dense<0.000000e+00> : vector<128x32xf32>
    %53 = tpu.matmul %51, %52, %cst_29 {dimension_numbers = #tpu.dot_dimension_numbers<[1], [0], [0], [1], [0, 0, 1, 1], [], []>} : vector<128x4xf32>, vector<4x32xf32>, vector<128x32xf32> -> vector<128x32xf32>
    %54 = arith.mulf %53, %19 : vector<128x32xf32>
    %55 = arith.truncf %54 : vector<128x32xf32> to vector<128x32xbf16>
    %c0_30 = arith.constant 0 : index
    %c0_31 = arith.constant 0 : index
    %56 = vector.load %arg10[%c0_30, %c0_31] : memref<32x32xbf16, #tpu.memory_space<vmem>>, vector<32x32xbf16>
    %cst_32 = arith.constant dense<0.000000e+00> : vector<128x32xf32>
    %57 = tpu.matmul %55, %56, %cst_32 {dimension_numbers = #tpu.dot_dimension_numbers<[1], [0], [0], [1], [0, 0, 1, 1], [], []>} : vector<128x32xbf16>, vector<32x32xbf16>, vector<128x32xf32> -> vector<128x32xf32>
    %c0_33 = arith.constant 0 : index
    %c0_34 = arith.constant 0 : index
    %58 = vector.load %arg11[%c0_33, %c0_34] : memref<1x32xf32, #tpu.memory_space<vmem>>, vector<1x32xf32>
    %59 = vector.broadcast %58 : vector<1x32xf32> to vector<128x32xf32>
    %60 = arith.addf %57, %59 : vector<128x32xf32>
    %61 = arith.addf %1, %60 : vector<128x32xf32>
    %cst_35 = arith.constant dense<0.000000e+00> : vector<128xf32>
    %62 = vector.multi_reduction <add>, %61, %cst_35 [1] : vector<128x32xf32> to vector<128xf32>
    %63 = vector.shape_cast %62 : vector<128xf32> to vector<128x1xf32>
    %cst_36 = arith.constant 3.125000e-02 : f32
    %64 = vector.broadcast %cst_36 : f32 to vector<128x1xf32>
    %65 = arith.mulf %63, %64 : vector<128x1xf32>
    %66 = vector.broadcast %65 : vector<128x1xf32> to vector<128x32xf32>
    %67 = arith.subf %61, %66 : vector<128x32xf32>
    %68 = arith.mulf %67, %67 : vector<128x32xf32>
    %cst_37 = arith.constant dense<0.000000e+00> : vector<128xf32>
    %69 = vector.multi_reduction <add>, %68, %cst_37 [1] : vector<128x32xf32> to vector<128xf32>
    %70 = vector.shape_cast %69 : vector<128xf32> to vector<128x1xf32>
    %cst_38 = arith.constant 0.0322580636 : f32
    %71 = vector.broadcast %cst_38 : f32 to vector<128x1xf32>
    %72 = arith.mulf %70, %71 : vector<128x1xf32>
    %73 = math.sqrt %72 : vector<128x1xf32>
    %cst_39 = arith.constant 9.99999997E-7 : f32
    %74 = vector.broadcast %cst_39 : f32 to vector<128x1xf32>
    %75 = arith.addf %73, %74 : vector<128x1xf32>
    %76 = tpu.reciprocal %75 : vector<128x1xf32> -> vector<128x1xf32>
    %c0_40 = arith.constant 0 : index
    %c0_41 = arith.constant 0 : index
    %77 = vector.load %arg12[%c0_40, %c0_41] : memref<1x32xf32, #tpu.memory_space<vmem>>, vector<1x32xf32>
    %78 = vector.broadcast %76 : vector<128x1xf32> to vector<128x32xf32>
    %79 = arith.mulf %67, %78 : vector<128x32xf32>
    %80 = vector.broadcast %77 : vector<1x32xf32> to vector<128x32xf32>
    %81 = arith.mulf %80, %79 : vector<128x32xf32>
    %c0_42 = arith.constant 0 : index
    %c0_43 = arith.constant 0 : index
    %82 = vector.load %arg13[%c0_42, %c0_43] : memref<1x32xf32, #tpu.memory_space<vmem>>, vector<1x32xf32>
    %83 = vector.broadcast %82 : vector<1x32xf32> to vector<128x32xf32>
    %84 = arith.addf %81, %83 : vector<128x32xf32>
    %85 = vector.shape_cast %84 : vector<128x32xf32> to vector<16x8x32xf32>
    %cst_44 = arith.constant 0.000000e+00 : f32
    %86 = vector.shape_cast %32 : vector<16x8x1xi1> to vector<16x8x1xi1>
    %87 = vector.broadcast %86 : vector<16x8x1xi1> to vector<16x8x32xi1>
    %88 = vector.broadcast %cst_44 : f32 to vector<16x8x32xf32>
    %89 = arith.select %87, %88, %85 : vector<16x8x32xi1>, vector<16x8x32xf32>
    %c0_45 = arith.constant 0 : index
    %c0_46 = arith.constant 0 : index
    %c0_47 = arith.constant 0 : index
    %90 = vector.load %arg16[%c0_45, %c0_46, %c0_47] : memref<16x8x32xf32, #tpu.memory_space<vmem>>, vector<16x8x32xf32>
    tpu.vector_store %arg16[%c0_45, %c0_46, %c0_47], %89 {strides = array<i32>} : memref<16x8x32xf32, #tpu.memory_space<vmem>>, vector<16x8x32xf32>,
    return
  }
  func.func @transform_0(%arg0: i32) -> (i32, i32) {
    %c0_i32 = arith.constant 0 : i32
    %c0_i32_0 = arith.constant 0 : i32
    return %arg0, %c0_i32 : i32, i32
  }
  func.func @transform_1(%arg0: i32) -> (i32, i32) {
    %c0_i32 = arith.constant 0 : i32
    %c0_i32_0 = arith.constant 0 : i32
    return %arg0, %c0_i32 : i32, i32
  }
  func.func @transform_2(%arg0: i32) -> (i32, i32, i32) {
    %c0_i32 = arith.constant 0 : i32
    %c0_i32_0 = arith.constant 0 : i32
    %c0_i32_1 = arith.constant 0 : i32
    return %arg0, %c0_i32, %c0_i32_0 : i32, i32, i32
  }
  func.func @transform_3(%arg0: i32) -> (i32, i32) {
    %c0_i32 = arith.constant 0 : i32
    %c0_i32_0 = arith.constant 0 : i32
    %c0_i32_1 = arith.constant 0 : i32
    return %c0_i32, %c0_i32_0 : i32, i32
  }
  func.func @transform_4(%arg0: i32) -> (i32, i32) {
    %c0_i32 = arith.constant 0 : i32
    %c0_i32_0 = arith.constant 0 : i32
    %c0_i32_1 = arith.constant 0 : i32
    return %c0_i32, %c0_i32_0 : i32, i32
  }
  func.func @transform_5(%arg0: i32) -> (i32, i32) {
    %c0_i32 = arith.constant 0 : i32
    %c0_i32_0 = arith.constant 0 : i32
    %c0_i32_1 = arith.constant 0 : i32
    return %c0_i32, %c0_i32_0 : i32, i32
  }
  func.func @transform_6(%arg0: i32) -> (i32, i32) {
    %c0_i32 = arith.constant 0 : i32
    %c0_i32_0 = arith.constant 0 : i32
    %c0_i32_1 = arith.constant 0 : i32
    return %c0_i32, %c0_i32_0 : i32, i32
  }
  func.func @transform_7(%arg0: i32) -> (i32, i32) {
    %c0_i32 = arith.constant 0 : i32
    %c0_i32_0 = arith.constant 0 : i32
    %c0_i32_1 = arith.constant 0 : i32
    return %c0_i32, %c0_i32_0 : i32, i32
  }
  func.func @transform_8(%arg0: i32) -> (i32, i32) {
    %c0_i32 = arith.constant 0 : i32
    %c0_i32_0 = arith.constant 0 : i32
    %c0_i32_1 = arith.constant 0 : i32
    return %c0_i32, %c0_i32_0 : i32, i32
  }
  func.func @transform_9(%arg0: i32) -> (i32, i32) {
    %c0_i32 = arith.constant 0 : i32
    %c0_i32_0 = arith.constant 0 : i32
    %c0_i32_1 = arith.constant 0 : i32
    return %c0_i32, %c0_i32_0 : i32, i32
  }
  func.func @transform_10(%arg0: i32) -> (i32, i32) {
    %c0_i32 = arith.constant 0 : i32
    %c0_i32_0 = arith.constant 0 : i32
    %c0_i32_1 = arith.constant 0 : i32
    return %c0_i32, %c0_i32_0 : i32, i32
  }
  func.func @transform_11(%arg0: i32) -> (i32, i32) {
    %c0_i32 = arith.constant 0 : i32
    %c0_i32_0 = arith.constant 0 : i32
    %c0_i32_1 = arith.constant 0 : i32
    return %c0_i32, %c0_i32_0 : i32, i32
  }
  func.func @transform_12(%arg0: i32) -> (i32, i32) {
    %c0_i32 = arith.constant 0 : i32
    %c0_i32_0 = arith.constant 0 : i32
    %c0_i32_1 = arith.constant 0 : i32
    return %c0_i32, %c0_i32_0 : i32, i32
  }
  func.func @transform_13(%arg0: i32) -> (i32, i32) {
    %c0_i32 = arith.constant 0 : i32
    %c0_i32_0 = arith.constant 0 : i32
    %c0_i32_1 = arith.constant 0 : i32
    return %c0_i32, %c0_i32_0 : i32, i32
  }
  func.func @transform_14(%arg0: i32) -> (i32, i32) {
    %c0_i32 = arith.constant 0 : i32
    %c0_i32_0 = arith.constant 0 : i32
    %c0_i32_1 = arith.constant 0 : i32
    return %c0_i32, %c0_i32_0 : i32, i32
  }
  func.func @transform_15(%arg0: i32) -> (i32, i32, i32) {
    %c0_i32 = arith.constant 0 : i32
    %c0_i32_0 = arith.constant 0 : i32
    %c0_i32_1 = arith.constant 0 : i32
    return %arg0, %c0_i32, %c0_i32_0 : i32, i32, i32
  }
}

</mosaic_0001>

<llo_original>
// kernel: tpu_custom_call.1
$region0: #{tpu_custom_call.1}
  #allocation0 [shape = 'u32[]', space=smem, size = 0x4, offset = 0x4, fixed_abs, tag = 'smem constant byte address 0x4 - core index']
  #allocation1 [shape = 'u32[72,128]{1,0:T(1,128)}', space=vmem, size = 0x9000, scoped, tag = 'internal scratch']
  %s0 = inlined_call_operand.vmem [shape: s32[32,1], index: 0, kind: input, shape index: {}]
  %s1 = inlined_call_operand.vmem [shape: f32[32,32], index: 1, kind: input, shape index: {}]
  %s2 = inlined_call_operand.hbm [shape: f32[32,8,32], index: 2, kind: input, shape index: {}]
  %s3 = inlined_call_operand.vmem [shape: bf16[32,32], index: 3, kind: input, shape index: {}]
  %s4 = inlined_call_operand.hbm [shape: f32[1,32], index: 4, kind: input, shape index: {}]
  %s5 = inlined_call_operand.vmem [shape: bf16[32,32], index: 5, kind: input, shape index: {}]
  %s6 = inlined_call_operand.vmem [shape: f32[1,32], index: 6, kind: input, shape index: {}]
  %s7 = inlined_call_operand.hbm [shape: bf16[32,32], index: 7, kind: input, shape index: {}]
  %s8 = inlined_call_operand.vmem [shape: f32[1,32], index: 8, kind: input, shape index: {}]
  %s9 = inlined_call_operand.hbm [shape: bf16[32,32], index: 9, kind: input, shape index: {}]
  %s10 = inlined_call_operand.vmem [shape: f32[1,32], index: 10, kind: input, shape index: {}]
  %s11 = inlined_call_operand.vmem [shape: f32[1,32], index: 11, kind: input, shape index: {}]
  %s12 = inlined_call_operand.vmem [shape: f32[1,32], index: 12, kind: input, shape index: {}]
  %s13 = inlined_call_operand.vmem [shape: f32[32,4], index: 13, kind: input, shape index: {}]
  %s14 = inlined_call_operand.vmem [shape: f32[4,32], index: 14, kind: input, shape index: {}]
  %s15 = inlined_call_operand.hbm [shape: f32[32,8,32], index: 15, kind: output, shape index: {}]
  %s16 = sld [smem:[#allocation0]]
  $region109: #{tpu_custom_call.1} parent=0
    _
  %s18 = ssub.s32 1, %s16
  %s19 = scalar_select 0, %s18, %s16
  $region1: #{tpu_custom_call.1} parent=0
    #allocation2 [shape = 'u8[131072]{0}', space=vmem, size = 0x20000, scoped, tag = 'input window, operand 2']
    #allocation3 [shape = 's32[2]{0}', space=sflag, size = 0x8, scoped, tag = 'scoped memory for tpu_custom_call.1']
    #allocation4 [shape = 's32[2]{0}', space=sflag, size = 0x8, scoped, tag = 'scoped memory for tpu_custom_call.1']
    #allocation5 [shape = 'u8[512]{0}', space=vmem, size = 0x400, scoped, tag = 'input window, operand 4, single buffered']
    #allocation6 [shape = 's32[1]{0}', space=sflag, size = 0x4, scoped, tag = 'scoped memory for tpu_custom_call.1']
    #allocation7 [shape = 'u8[8192]{0}', space=vmem, size = 0x2000, scoped, tag = 'input window, operand 7, single buffered']
    #allocation8 [shape = 'u8[8192]{0}', space=vmem, size = 0x2000, scoped, tag = 'input window, operand 9, single buffered']
    #allocation9 [shape = 's32[1]{0}', space=sflag, size = 0x4, scoped, tag = 'scoped memory for tpu_custom_call.1']
    #allocation10 [shape = 'u8[131072]{0}', space=vmem, size = 0x20000, scoped, tag = 'output window, operand 0']
    %20 = vsyncpa [#allocation3], 0
    %s21 = scalar_lea.sflag [#allocation3], 1
    %22 = vsyncpa %s21, 0
    %23 = vsyncpa [#allocation6], 0
    %24 = vsyncpa [#allocation9], 0
    %25 = vsyncpa [#allocation4], 0
    %s26 = scalar_lea.sflag [#allocation4], 1
    %27 = vsyncpa %s26, 0
    loop: start=0, step=1, limit=4
    $region2: #{tpu_custom_call.1} parent=1 // loop_pre_header
      _
    $region3: #{tpu_custom_call.1} parent=1 // loop_header
      %s29 = sphi 0, %s33
      %p30 = scmp.ge.s32.totalorder %s29, 4
      %s39 = sphi 0, %s41
      %s42 = sphi 0, %s39
      %s43 = sphi 0, %s42
      %s59 = sphi 0, %s43
      %s65 = sphi 0, %s67
      %s68 = sphi 0, %s65
      %s69 = sphi 0, %s68
      %s85 = sphi 0, %s69
      %s91 = sphi 0, %s93
      %s94 = sphi 0, %s91
      %s95 = sphi 0, %s94
      %s111 = sphi 0, %s95
      %s115 = sphi 0, %s115
      %s117 = sphi 0, %s115
      %s118 = sphi 0, %s117
      %s132 = sphi 0, %s118
      %s136 = sphi 0, %s136
      %s138 = sphi 0, %s136
      %s139 = sphi 0, %s138
      %s153 = sphi 0, %s139
      %s157 = sphi 0, %s157
      %s159 = sphi 0, %s157
      %s160 = sphi 0, %s159
      %s174 = sphi 0, %s160
      %s178 = sphi 0, %s178
      %s180 = sphi 0, %s178
      %s181 = sphi 0, %s180
      %s195 = sphi 0, %s181
      %s199 = sphi 0, %s199
      %s201 = sphi 0, %s199
      %s202 = sphi 0, %s201
      %s216 = sphi 0, %s202
      %s220 = sphi 0, %s220
      %s222 = sphi 0, %s220
      %s223 = sphi 0, %s222
      %s237 = sphi 0, %s223
      %s241 = sphi 0, %s241
      %s243 = sphi 0, %s241
      %s244 = sphi 0, %s243
      %s258 = sphi 0, %s244
      %s262 = sphi 0, %s262
      %s264 = sphi 0, %s262
      %s265 = sphi 0, %s264
      %s279 = sphi 0, %s265
      %s283 = sphi 0, %s283
      %s285 = sphi 0, %s283
      %s286 = sphi 0, %s285
      %s300 = sphi 0, %s286
      %s304 = sphi 0, %s304
      %s306 = sphi 0, %s304
      %s307 = sphi 0, %s306
      %s321 = sphi 0, %s307
      %s325 = sphi 0, %s325
      %s327 = sphi 0, %s325
      %s328 = sphi 0, %s327
      %s342 = sphi 0, %s328
      %s346 = sphi 0, %s346
      %s348 = sphi 0, %s346
      %s349 = sphi 0, %s348
      %s363 = sphi 0, %s349
      %s369 = sphi 0, %s371
      %s372 = sphi 0, %s369
      %s373 = sphi 0, %s372
      %s389 = sphi 0, %s373
    $region4: #{tpu_custom_call.1} parent=1 // loop_header_branch
      %32 = sbr.rel (%p30) target = $region8
    $region5: #{tpu_custom_call.1} parent=1 // loop_body
      %s34 = ssub.s32 %s29, 1
      %s35 = ssub.s32 %s29, 2
      %s36 = sadd.s32 %s29, 1
      %s37 = ssub.s32 %s29, %s36
      %p38 = scmp.eq.s32.totalorder %s37, 0
      %s40 = sadd.s32 %s39, 1
      %s41 = scalar_select %p38, %s39, %s40
      %p44 = pneg %p38
      %p45 = scmp.eq.s32.totalorder %s29, 1
      %p46 = por %p44, %p45
      %p47 = scmp.ne.s32.totalorder %s39, %s42
      %p48 = scmp.eq.s32.totalorder %s29, 0
      %p49 = por %p47, %p48
      %p50 = scmp.ne.s32.totalorder %s39, %s42
      %p51 = scmp.eq.s32.totalorder %s34, 1
      %p52 = por %p50, %p51
      %p53 = scmp.ne.s32.totalorder %s42, %s43
      %p54 = scmp.eq.s32.totalorder %s34, 0
      %p55 = por %p53, %p54
      %p56 = scmp.ne.s32.totalorder %s42, %s43
      %p57 = scmp.eq.s32.totalorder %s35, 1
      %p58 = por %p56, %p57
      %p60 = scmp.ne.s32.totalorder %s43, %s59
      %p61 = scmp.eq.s32.totalorder %s35, 0
      %p62 = por %p60, %p61
      %s63 = ssub.s32 %s29, %s36
      %p64 = scmp.eq.s32.totalorder %s63, 0
      %s66 = sadd.s32 %s65, 1
      %s67 = scalar_select %p64, %s65, %s66
      %p70 = pneg %p64
      %p71 = scmp.eq.s32.totalorder %s29, 1
      %p72 = por %p70, %p71
      %p73 = scmp.ne.s32.totalorder %s65, %s68
      %p74 = scmp.eq.s32.totalorder %s29, 0
      %p75 = por %p73, %p74
      %p76 = scmp.ne.s32.totalorder %s65, %s68
      %p77 = scmp.eq.s32.totalorder %s34, 1
      %p78 = por %p76, %p77
      %p79 = scmp.ne.s32.totalorder %s68, %s69
      %p80 = scmp.eq.s32.totalorder %s34, 0
      %p81 = por %p79, %p80
      %p82 = scmp.ne.s32.totalorder %s68, %s69
      %p83 = scmp.eq.s32.totalorder %s35, 1
      %p84 = por %p82, %p83
      %p86 = scmp.ne.s32.totalorder %s69, %s85
      %p87 = scmp.eq.s32.totalorder %s35, 0
      %p88 = por %p86, %p87
      %s89 = ssub.s32 %s29, %s36
      %p90 = scmp.eq.s32.totalorder %s89, 0
      %s92 = sadd.s32 %s91, 1
      %s93 = scalar_select %p90, %s91, %s92
      %p96 = pneg %p90
      %p97 = scmp.eq.s32.totalorder %s29, 1
      %p98 = por %p96, %p97
      %p99 = scmp.ne.s32.totalorder %s91, %s94
      %p100 = scmp.eq.s32.totalorder %s29, 0
      %p101 = por %p99, %p100
      %p102 = scmp.ne.s32.totalorder %s91, %s94
      %p103 = scmp.eq.s32.totalorder %s34, 1
      %p104 = por %p102, %p103
      %p105 = scmp.ne.s32.totalorder %s94, %s95
      %p106 = scmp.eq.s32.totalorder %s34, 0
      %p107 = por %p105, %p106
      %p108 = scmp.ne.s32.totalorder %s94, %s95
      %p109 = scmp.eq.s32.totalorder %s35, 1
      %p110 = por %p108, %p109
      %p112 = scmp.ne.s32.totalorder %s95, %s111
      %p113 = scmp.eq.s32.totalorder %s35, 0
      %p114 = por %p112, %p113
      %s116 = sadd.s32 %s115, 1
      %p119 = scmp.eq.s32.totalorder %s29, 1
      %p120 = scmp.ne.s32.totalorder %s115, %s117
      %p121 = scmp.eq.s32.totalorder %s29, 0
      %p122 = por %p120, %p121
      %p123 = scmp.ne.s32.totalorder %s115, %s117
      %p124 = scmp.eq.s32.totalorder %s34, 1
      %p125 = por %p123, %p124
      %p126 = scmp.ne.s32.totalorder %s117, %s118
      %p127 = scmp.eq.s32.totalorder %s34, 0
      %p128 = por %p126, %p127
      %p129 = scmp.ne.s32.totalorder %s117, %s118
      %p130 = scmp.eq.s32.totalorder %s35, 1
      %p131 = por %p129, %p130
      %p133 = scmp.ne.s32.totalorder %s118, %s132
      %p134 = scmp.eq.s32.totalorder %s35, 0
      %p135 = por %p133, %p134
      %s137 = sadd.s32 %s136, 1
      %p140 = scmp.eq.s32.totalorder %s29, 1
      %p141 = scmp.ne.s32.totalorder %s136, %s138
      %p142 = scmp.eq.s32.totalorder %s29, 0
      %p143 = por %p141, %p142
      %p144 = scmp.ne.s32.totalorder %s136, %s138
      %p145 = scmp.eq.s32.totalorder %s34, 1
      %p146 = por %p144, %p145
      %p147 = scmp.ne.s32.totalorder %s138, %s139
      %p148 = scmp.eq.s32.totalorder %s34, 0
      %p149 = por %p147, %p148
      %p150 = scmp.ne.s32.totalorder %s138, %s139
      %p151 = scmp.eq.s32.totalorder %s35, 1
      %p152 = por %p150, %p151
      %p154 = scmp.ne.s32.totalorder %s139, %s153
      %p155 = scmp.eq.s32.totalorder %s35, 0
      %p156 = por %p154, %p155
      %s158 = sadd.s32 %s157, 1
      %p161 = scmp.eq.s32.totalorder %s29, 1
      %p162 = scmp.ne.s32.totalorder %s157, %s159
      %p163 = scmp.eq.s32.totalorder %s29, 0
      %p164 = por %p162, %p163
      %p165 = scmp.ne.s32.totalorder %s157, %s159
      %p166 = scmp.eq.s32.totalorder %s34, 1
      %p167 = por %p165, %p166
      %p168 = scmp.ne.s32.totalorder %s159, %s160
      %p169 = scmp.eq.s32.totalorder %s34, 0
      %p170 = por %p168, %p169
      %p171 = scmp.ne.s32.totalorder %s159, %s160
      %p172 = scmp.eq.s32.totalorder %s35, 1
      %p173 = por %p171, %p172
      %p175 = scmp.ne.s32.totalorder %s160, %s174
      %p176 = scmp.eq.s32.totalorder %s35, 0
      %p177 = por %p175, %p176
      %s179 = sadd.s32 %s178, 1
      %p182 = scmp.eq.s32.totalorder %s29, 1
      %p183 = scmp.ne.s32.totalorder %s178, %s180
      %p184 = scmp.eq.s32.totalorder %s29, 0
      %p185 = por %p183, %p184
      %p186 = scmp.ne.s32.totalorder %s178, %s180
      %p187 = scmp.eq.s32.totalorder %s34, 1
      %p188 = por %p186, %p187
      %p189 = scmp.ne.s32.totalorder %s180, %s181
      %p190 = scmp.eq.s32.totalorder %s34, 0
      %p191 = por %p189, %p190
      %p192 = scmp.ne.s32.totalorder %s180, %s181
      %p193 = scmp.eq.s32.totalorder %s35, 1
      %p194 = por %p192, %p193
      %p196 = scmp.ne.s32.totalorder %s181, %s195
      %p197 = scmp.eq.s32.totalorder %s35, 0
      %p198 = por %p196, %p197
      %s200 = sadd.s32 %s199, 1
      %p203 = scmp.eq.s32.totalorder %s29, 1
      %p204 = scmp.ne.s32.totalorder %s199, %s201
      %p205 = scmp.eq.s32.totalorder %s29, 0
      %p206 = por %p204, %p205
      %p207 = scmp.ne.s32.totalorder %s199, %s201
      %p208 = scmp.eq.s32.totalorder %s34, 1
      %p209 = por %p207, %p208
      %p210 = scmp.ne.s32.totalorder %s201, %s202
      %p211 = scmp.eq.s32.totalorder %s34, 0
      %p212 = por %p210, %p211
      %p213 = scmp.ne.s32.totalorder %s201, %s202
      %p214 = scmp.eq.s32.totalorder %s35, 1
      %p215 = por %p213, %p214
      %p217 = scmp.ne.s32.totalorder %s202, %s216
      %p218 = scmp.eq.s32.totalorder %s35, 0
      %p219 = por %p217, %p218
      %s221 = sadd.s32 %s220, 1
      %p224 = scmp.eq.s32.totalorder %s29, 1
      %p225 = scmp.ne.s32.totalorder %s220, %s222
      %p226 = scmp.eq.s32.totalorder %s29, 0
      %p227 = por %p225, %p226
      %p228 = scmp.ne.s32.totalorder %s220, %s222
      %p229 = scmp.eq.s32.totalorder %s34, 1
      %p230 = por %p228, %p229
      %p231 = scmp.ne.s32.totalorder %s222, %s223
      %p232 = scmp.eq.s32.totalorder %s34, 0
      %p233 = por %p231, %p232
      %p234 = scmp.ne.s32.totalorder %s222, %s223
      %p235 = scmp.eq.s32.totalorder %s35, 1
      %p236 = por %p234, %p235
      %p238 = scmp.ne.s32.totalorder %s223, %s237
      %p239 = scmp.eq.s32.totalorder %s35, 0
      %p240 = por %p238, %p239
      %s242 = sadd.s32 %s241, 1
      %p245 = scmp.eq.s32.totalorder %s29, 1
      %p246 = scmp.ne.s32.totalorder %s241, %s243
      %p247 = scmp.eq.s32.totalorder %s29, 0
      %p248 = por %p246, %p247
      %p249 = scmp.ne.s32.totalorder %s241, %s243
      %p250 = scmp.eq.s32.totalorder %s34, 1
      %p251 = por %p249, %p250
      %p252 = scmp.ne.s32.totalorder %s243, %s244
      %p253 = scmp.eq.s32.totalorder %s34, 0
      %p254 = por %p252, %p253
      %p255 = scmp.ne.s32.totalorder %s243, %s244
      %p256 = scmp.eq.s32.totalorder %s35, 1
      %p257 = por %p255, %p256
      %p259 = scmp.ne.s32.totalorder %s244, %s258
      %p260 = scmp.eq.s32.totalorder %s35, 0
      %p261 = por %p259, %p260
      %s263 = sadd.s32 %s262, 1
      %p266 = scmp.eq.s32.totalorder %s29, 1
      %p267 = scmp.ne.s32.totalorder %s262, %s264
      %p268 = scmp.eq.s32.totalorder %s29, 0
      %p269 = por %p267, %p268
      %p270 = scmp.ne.s32.totalorder %s262, %s264
      %p271 = scmp.eq.s32.totalorder %s34, 1
      %p272 = por %p270, %p271
      %p273 = scmp.ne.s32.totalorder %s264, %s265
      %p274 = scmp.eq.s32.totalorder %s34, 0
      %p275 = por %p273, %p274
      %p276 = scmp.ne.s32.totalorder %s264, %s265
      %p277 = scmp.eq.s32.totalorder %s35, 1
      %p278 = por %p276, %p277
      %p280 = scmp.ne.s32.totalorder %s265, %s279
      %p281 = scmp.eq.s32.totalorder %s35, 0
      %p282 = por %p280, %p281
      %s284 = sadd.s32 %s283, 1
      %p287 = scmp.eq.s32.totalorder %s29, 1
      %p288 = scmp.ne.s32.totalorder %s283, %s285
      %p289 = scmp.eq.s32.totalorder %s29, 0
      %p290 = por %p288, %p289
      %p291 = scmp.ne.s32.totalorder %s283, %s285
      %p292 = scmp.eq.s32.totalorder %s34, 1
      %p293 = por %p291, %p292
      %p294 = scmp.ne.s32.totalorder %s285, %s286
      %p295 = scmp.eq.s32.totalorder %s34, 0
      %p296 = por %p294, %p295
      %p297 = scmp.ne.s32.totalorder %s285, %s286
      %p298 = scmp.eq.s32.totalorder %s35, 1
      %p299 = por %p297, %p298
      %p301 = scmp.ne.s32.totalorder %s286, %s300
      %p302 = scmp.eq.s32.totalorder %s35, 0
      %p303 = por %p301, %p302
      %s305 = sadd.s32 %s304, 1
      %p308 = scmp.eq.s32.totalorder %s29, 1
      %p309 = scmp.ne.s32.totalorder %s304, %s306
      %p310 = scmp.eq.s32.totalorder %s29, 0
      %p311 = por %p309, %p310
      %p312 = scmp.ne.s32.totalorder %s304, %s306
      %p313 = scmp.eq.s32.totalorder %s34, 1
      %p314 = por %p312, %p313
      %p315 = scmp.ne.s32.totalorder %s306, %s307
      %p316 = scmp.eq.s32.totalorder %s34, 0
      %p317 = por %p315, %p316
      %p318 = scmp.ne.s32.totalorder %s306, %s307
      %p319 = scmp.eq.s32.totalorder %s35, 1
      %p320 = por %p318, %p319
      %p322 = scmp.ne.s32.totalorder %s307, %s321
      %p323 = scmp.eq.s32.totalorder %s35, 0
      %p324 = por %p322, %p323
      %s326 = sadd.s32 %s325, 1
      %p329 = scmp.eq.s32.totalorder %s29, 1
      %p330 = scmp.ne.s32.totalorder %s325, %s327
      %p331 = scmp.eq.s32.totalorder %s29, 0
      %p332 = por %p330, %p331
      %p333 = scmp.ne.s32.totalorder %s325, %s327
      %p334 = scmp.eq.s32.totalorder %s34, 1
      %p335 = por %p333, %p334
      %p336 = scmp.ne.s32.totalorder %s327, %s328
      %p337 = scmp.eq.s32.totalorder %s34, 0
      %p338 = por %p336, %p337
      %p339 = scmp.ne.s32.totalorder %s327, %s328
      %p340 = scmp.eq.s32.totalorder %s35, 1
      %p341 = por %p339, %p340
      %p343 = scmp.ne.s32.totalorder %s328, %s342
      %p344 = scmp.eq.s32.totalorder %s35, 0
      %p345 = por %p343, %p344
      %s347 = sadd.s32 %s346, 1
      %p350 = scmp.eq.s32.totalorder %s29, 1
      %p351 = scmp.ne.s32.totalorder %s346, %s348
      %p352 = scmp.eq.s32.totalorder %s29, 0
      %p353 = por %p351, %p352
      %p354 = scmp.ne.s32.totalorder %s346, %s348
      %p355 = scmp.eq.s32.totalorder %s34, 1
      %p356 = por %p354, %p355
      %p357 = scmp.ne.s32.totalorder %s348, %s349
      %p358 = scmp.eq.s32.totalorder %s34, 0
      %p359 = por %p357, %p358
      %p360 = scmp.ne.s32.totalorder %s348, %s349
      %p361 = scmp.eq.s32.totalorder %s35, 1
      %p362 = por %p360, %p361
      %p364 = scmp.ne.s32.totalorder %s349, %s363
      %p365 = scmp.eq.s32.totalorder %s35, 0
      %p366 = por %p364, %p365
      %s367 = ssub.s32 %s29, %s36
      %p368 = scmp.eq.s32.totalorder %s367, 0
      %s370 = sadd.s32 %s369, 1
      %s371 = scalar_select %p368, %s369, %s370
      %p374 = pneg %p368
      %p375 = scmp.eq.s32.totalorder %s29, 1
      %p376 = por %p374, %p375
      %p377 = scmp.ne.s32.totalorder %s369, %s372
      %p378 = scmp.eq.s32.totalorder %s29, 0
      %p379 = por %p377, %p378
      %p380 = scmp.ne.s32.totalorder %s369, %s372
      %p381 = scmp.eq.s32.totalorder %s34, 1
      %p382 = por %p380, %p381
      %p383 = scmp.ne.s32.totalorder %s372, %s373
      %p384 = scmp.eq.s32.totalorder %s34, 0
      %p385 = por %p383, %p384
      %p386 = scmp.ne.s32.totalorder %s372, %s373
      %p387 = scmp.eq.s32.totalorder %s35, 1
      %p388 = por %p386, %p387
      %p390 = scmp.ne.s32.totalorder %s373, %s389
      %p391 = scmp.eq.s32.totalorder %s35, 0
      %p392 = por %p390, %p391
      %p393 = scmp.le.s32.totalorder 1, %s29
      %p394 = scmp.lt.s32.totalorder %s29, 3
      %p395 = pnand %p393, %p394
      %p396 = pneg %p395
      // Predicated region
      $region9: #{tpu_custom_call.1} parent=5 // pred_check
        _
      $region10: #{tpu_custom_call.1} parent=5 // pred_check_branch
        %398 = sbr.rel (%p395) target = $region12
      $region11: #{tpu_custom_call.1} parent=5 // pred_region
        %s399 = ssub.s32 %s29, 1
        // Predicated region
        $region13: #{tpu_custom_call.1} parent=11 // pred_check
          %p400 = pneg %p128
        $region14: #{tpu_custom_call.1} parent=11 // pred_check_branch
          %402 = sbr.rel (%p400) target = $region16
        $region15: #{tpu_custom_call.1} parent=11 // pred_region
          _
        $region16: #{tpu_custom_call.1} parent=11 // pred_fallthru
          _
        // Predicated region
        $region17: #{tpu_custom_call.1} parent=11 // pred_check
          %p403 = pneg %p149
        $region18: #{tpu_custom_call.1} parent=11 // pred_check_branch
          %405 = sbr.rel (%p403) target = $region20
        $region19: #{tpu_custom_call.1} parent=11 // pred_region
          %407 = vsyncadd [#allocation6], 0
          %s409 = sshll.u32 %s4, 4
          %s410 = int_to_ptr.hbm [resolvable:$true] %s409
          %s411 = sshll.u32 [#allocation5], 4
          %s412 = int_to_ptr.vmem [resolvable:$true] %s411
          %414 = dma.hbm_to_vmem [thread:$0]  %s410, 16, %s412, [#allocation6]
        $region20: #{tpu_custom_call.1} parent=11 // pred_fallthru
          _
        // Predicated region
        $region21: #{tpu_custom_call.1} parent=11 // pred_check
          %p415 = pneg %p170
        $region22: #{tpu_custom_call.1} parent=11 // pred_check_branch
          %417 = sbr.rel (%p415) target = $region24
        $region23: #{tpu_custom_call.1} parent=11 // pred_region
          _
        $region24: #{tpu_custom_call.1} parent=11 // pred_fallthru
          _
        // Predicated region
        $region25: #{tpu_custom_call.1} parent=11 // pred_check
          %p418 = pneg %p191
        $region26: #{tpu_custom_call.1} parent=11 // pred_check_branch
          %420 = sbr.rel (%p418) target = $region28
        $region27: #{tpu_custom_call.1} parent=11 // pred_region
          _
        $region28: #{tpu_custom_call.1} parent=11 // pred_fallthru
          _
        // Predicated region
        $region29: #{tpu_custom_call.1} parent=11 // pred_check
          %p421 = pneg %p212
        $region30: #{tpu_custom_call.1} parent=11 // pred_check_branch
          %423 = sbr.rel (%p421) target = $region32
        $region31: #{tpu_custom_call.1} parent=11 // pred_region
          %425 = vsyncadd [#allocation6], 0
          %s426 = sshll.u32 %s7, 4
          %s427 = int_to_ptr.hbm [resolvable:$true] %s426
          %s428 = sshll.u32 [#allocation7], 4
          %s429 = int_to_ptr.vmem [resolvable:$true] %s428
          %434 = dma.hbm_to_vmem [thread:$0]  %s427, 256, %s429, [#allocation6], 64, 64, 4
        $region32: #{tpu_custom_call.1} parent=11 // pred_fallthru
          _
        // Predicated region
        $region33: #{tpu_custom_call.1} parent=11 // pred_check
          %p435 = pneg %p233
        $region34: #{tpu_custom_call.1} parent=11 // pred_check_branch
          %437 = sbr.rel (%p435) target = $region36
        $region35: #{tpu_custom_call.1} parent=11 // pred_region
          _
        $region36: #{tpu_custom_call.1} parent=11 // pred_fallthru
          _
        // Predicated region
        $region37: #{tpu_custom_call.1} parent=11 // pred_check
          %p438 = pneg %p254
        $region38: #{tpu_custom_call.1} parent=11 // pred_check_branch
          %440 = sbr.rel (%p438) target = $region40
        $region39: #{tpu_custom_call.1} parent=11 // pred_region
          %442 = vsyncadd [#allocation9], 0
          %s443 = sshll.u32 %s9, 4
          %s444 = int_to_ptr.hbm [resolvable:$true] %s443
          %s445 = sshll.u32 [#allocation8], 4
          %s446 = int_to_ptr.vmem [resolvable:$true] %s445
          %451 = dma.hbm_to_vmem [thread:$0]  %s444, 256, %s446, [#allocation9], 64, 64, 4
        $region40: #{tpu_custom_call.1} parent=11 // pred_fallthru
          _
        // Predicated region
        $region41: #{tpu_custom_call.1} parent=11 // pred_check
          %p452 = pneg %p275
        $region42: #{tpu_custom_call.1} parent=11 // pred_check_branch
          %454 = sbr.rel (%p452) target = $region44
        $region43: #{tpu_custom_call.1} parent=11 // pred_region
          _
        $region44: #{tpu_custom_call.1} parent=11 // pred_fallthru
          _
        // Predicated region
        $region45: #{tpu_custom_call.1} parent=11 // pred_check
          %p455 = pneg %p296
        $region46: #{tpu_custom_call.1} parent=11 // pred_check_branch
          %457 = sbr.rel (%p455) target = $region48
        $region47: #{tpu_custom_call.1} parent=11 // pred_region
          _
        $region48: #{tpu_custom_call.1} parent=11 // pred_fallthru
          _
        // Predicated region
        $region49: #{tpu_custom_call.1} parent=11 // pred_check
          %p458 = pneg %p317
        $region50: #{tpu_custom_call.1} parent=11 // pred_check_branch
          %460 = sbr.rel (%p458) target = $region52
        $region51: #{tpu_custom_call.1} parent=11 // pred_region
          _
        $region52: #{tpu_custom_call.1} parent=11 // pred_fallthru
          _
        // Predicated region
        $region53: #{tpu_custom_call.1} parent=11 // pred_check
          %p461 = pneg %p338
        $region54: #{tpu_custom_call.1} parent=11 // pred_check_branch
          %463 = sbr.rel (%p461) target = $region56
        $region55: #{tpu_custom_call.1} parent=11 // pred_region
          _
        $region56: #{tpu_custom_call.1} parent=11 // pred_fallthru
          _
        // Predicated region
        $region57: #{tpu_custom_call.1} parent=11 // pred_check
          %p464 = pneg %p359
        $region58: #{tpu_custom_call.1} parent=11 // pred_check_branch
          %466 = sbr.rel (%p464) target = $region60
        $region59: #{tpu_custom_call.1} parent=11 // pred_region
          _
        $region60: #{tpu_custom_call.1} parent=11 // pred_fallthru
          _
      $region12: #{tpu_custom_call.1} parent=5 // pred_fallthru
        _
      %p467 = scmp.lt.s32.totalorder %s29, 2
      // Predicated region
      $region61: #{tpu_custom_call.1} parent=5 // pred_check
        %p468 = pneg %p467
      $region62: #{tpu_custom_call.1} parent=5 // pred_check_branch
        %470 = sbr.rel (%p468) target = $region64
      $region63: #{tpu_custom_call.1} parent=5 // pred_region
        // Predicated region
        $region65: #{tpu_custom_call.1} parent=63 // pred_check
          %p471 = pneg %p49
        $region66: #{tpu_custom_call.1} parent=63 // pred_check_branch
          %473 = sbr.rel (%p471) target = $region68
        $region67: #{tpu_custom_call.1} parent=63 // pred_region
          %s474 = smul.u32 2, %s29
          %p475 = scmp.lt.s32.totalorder %s474, 3
          %s476 = scalar_select %p475, %s474, 3
          %s477 = smul.addr %s476, 8
          %s478 = scalar_lea.vmem %s0, %s477
          %s479 = smul.u32 2, %s29
        $region68: #{tpu_custom_call.1} parent=63 // pred_fallthru
          _
        // Predicated region
        $region69: #{tpu_custom_call.1} parent=63 // pred_check
          %p480 = pneg %p75
        $region70: #{tpu_custom_call.1} parent=63 // pred_check_branch
          %482 = sbr.rel (%p480) target = $region72
        $region71: #{tpu_custom_call.1} parent=63 // pred_region
          %s483 = smul.u32 2, %s29
          %p484 = scmp.lt.s32.totalorder %s483, 3
          %s485 = scalar_select %p484, %s483, 3
          %s486 = smul.addr %s485, 8
          %s487 = scalar_lea.vmem %s1, %s486
          %s488 = smul.u32 2, %s29
        $region72: #{tpu_custom_call.1} parent=63 // pred_fallthru
          _
        // Predicated region
        $region73: #{tpu_custom_call.1} parent=63 // pred_check
          %p489 = pneg %p101
        $region74: #{tpu_custom_call.1} parent=63 // pred_check_branch
          %491 = sbr.rel (%p489) target = $region76
        $region75: #{tpu_custom_call.1} parent=63 // pred_region
          %s492 = sand.u32 %s91, 1
          %s493 = scalar_lea.sflag [#allocation3], %s492
          %s494 = sand.u32 %s91, 1
          %s495 = smul.addr %s494, 128
          %s496 = scalar_lea.vmem [#allocation2], %s495
          %s497 = smul.u32 16, %s29
          %499 = vsyncadd %s493, 0
          %s500 = smul.addr %s497, 8
          %s501 = scalar_lea.hbm %s2, %s500
          %s502 = sshll.u32 %s501, 4
          %s503 = int_to_ptr.hbm [resolvable:$true] %s502
          %s504 = sshll.u32 %s496, 4
          %s505 = int_to_ptr.vmem [resolvable:$true] %s504
          %510 = dma.hbm_to_vmem [thread:$0]  %s503, 2048, %s505, %s493, 128, 128, 8
        $region76: #{tpu_custom_call.1} parent=63 // pred_fallthru
          _
      $region64: #{tpu_custom_call.1} parent=5 // pred_fallthru
        _
      %p511 = scmp.le.s32.totalorder 1, %s29
      %p512 = scmp.lt.s32.totalorder %s29, 3
      %p513 = pnand %p511, %p512
      %p514 = pneg %p513
      // Predicated region
      $region77: #{tpu_custom_call.1} parent=5 // pred_check
        _
      $region78: #{tpu_custom_call.1} parent=5 // pred_check_branch
        %516 = sbr.rel (%p513) target = $region80
      $region79: #{tpu_custom_call.1} parent=5 // pred_region
        %s517 = ssub.s32 %s29, 1
        %s518 = sand.u32 %s94, 1
        %s519 = scalar_lea.sflag [#allocation3], %s518
        %s520 = sand.u32 %s94, 1
        %s521 = smul.addr %s520, 128
        %s522 = scalar_lea.vmem [#allocation2], %s521
        // Predicated region
        $region81: #{tpu_custom_call.1} parent=79 // pred_check
          %p523 = pneg %p107
        $region82: #{tpu_custom_call.1} parent=79 // pred_check_branch
          %525 = sbr.rel (%p523) target = $region84
        $region83: #{tpu_custom_call.1} parent=79 // pred_region
          %527 = dma.done %s519, 2048
        $region84: #{tpu_custom_call.1} parent=79 // pred_fallthru
          _
        // Predicated region
        $region85: #{tpu_custom_call.1} parent=79 // pred_check
          %p528 = pneg %p149
        $region86: #{tpu_custom_call.1} parent=79 // pred_check_branch
          %530 = sbr.rel (%p528) target = $region88
        $region87: #{tpu_custom_call.1} parent=79 // pred_region
          %532 = dma.done [#allocation6], 16
        $region88: #{tpu_custom_call.1} parent=79 // pred_fallthru
          _
        // Predicated region
        $region89: #{tpu_custom_call.1} parent=79 // pred_check
          %p533 = pneg %p212
        $region90: #{tpu_custom_call.1} parent=79 // pred_check_branch
          %535 = sbr.rel (%p533) target = $region92
        $region91: #{tpu_custom_call.1} parent=79 // pred_region
          %537 = dma.done [#allocation6], 256
        $region92: #{tpu_custom_call.1} parent=79 // pred_fallthru
          _
        // Predicated region
        $region93: #{tpu_custom_call.1} parent=79 // pred_check
          %p538 = pneg %p254
        $region94: #{tpu_custom_call.1} parent=79 // pred_check_branch
          %540 = sbr.rel (%p538) target = $region96
        $region95: #{tpu_custom_call.1} parent=79 // pred_region
          %542 = dma.done [#allocation9], 256
        $region96: #{tpu_custom_call.1} parent=79 // pred_fallthru
          _
        %s543 = smul.u32 2, %s34
        %p544 = scmp.lt.s32.totalorder %s543, 3
        %s545 = scalar_select %p544, %s543, 3
        %s546 = smul.addr %s545, 8
        %s547 = scalar_lea.vmem %s0, %s546
        %p548 = pneg %p55
        %p549 = pneg %p52
        %s550 = smul.u32 2, %s34
        %p551 = scmp.lt.s32.totalorder %s550, 3
        %s552 = scalar_select %p551, %s550, 3
        %s553 = smul.addr %s552, 8
        %s554 = scalar_lea.vmem %s1, %s553
        %p555 = pneg %p81
        %p556 = pneg %p78
        %s557 = sand.u32 %s94, 1
        %s558 = scalar_lea.sflag [#allocation3], %s557
        %s559 = sand.u32 %s94, 1
        %s560 = smul.addr %s559, 128
        %s561 = scalar_lea.vmem [#allocation2], %s560
        %p562 = pneg %p107
        %p563 = pneg %p104
        %p564 = pneg %p128
        %p565 = pneg %p125
        %p566 = pneg %p149
        %p567 = pneg %p146
        %p568 = pneg %p170
        %p569 = pneg %p167
        %p570 = pneg %p191
        %p571 = pneg %p188
        %p572 = pneg %p212
        %p573 = pneg %p209
        %p574 = pneg %p233
        %p575 = pneg %p230
        %p576 = pneg %p254
        %p577 = pneg %p251
        %p578 = pneg %p275
        %p579 = pneg %p272
        %p580 = pneg %p296
        %p581 = pneg %p293
        %p582 = pneg %p317
        %p583 = pneg %p314
        %p584 = pneg %p338
        %p585 = pneg %p335
        %p586 = pneg %p359
        %p587 = pneg %p356
        %p588 = pneg %p385
        %p589 = pneg %p382
        %s590 = sand.u32 %s372, 1
        %s591 = scalar_lea.sflag [#allocation4], %s590
        %s592 = sand.u32 %s372, 1
        %s593 = smul.addr %s592, 128
        %s594 = scalar_lea.vmem [#allocation10], %s593
        %s595 = smul.u32 2, %s34
        %p596 = scmp.lt.s32.totalorder %s595, 3
        %s597 = scalar_select %p596, %s595, 3
        %s598 = smul.addr %s597, 8
        %s599 = scalar_lea.vmem %s0, %s598
        %s600 = smul.u32 2, %s34
        %s601 = smul.u32 2, %s34
        %p602 = scmp.lt.s32.totalorder %s601, 3
        %s603 = scalar_select %p602, %s601, 3
        %s604 = smul.addr %s603, 8
        %s605 = scalar_lea.vmem %s1, %s604
        %s606 = smul.u32 2, %s34
        %s607 = smul.u32 16, %s34
        %s608 = smul.u32 16, %s34
        %v610 = vld [vmem:[%s522] sm:$0xff]
        %v611 = vld [vmem:[%s522 + $0x8] sm:$0xff]
        %v612 = vld [vmem:[%s522 + $0x10] sm:$0xff]
        %v613 = vld [vmem:[%s522 + $0x18] sm:$0xff]
        %v614 = vld [vmem:[%s522 + $0x20] sm:$0xff]
        %v615 = vld [vmem:[%s522 + $0x28] sm:$0xff]
        %v616 = vld [vmem:[%s522 + $0x30] sm:$0xff]
        %v617 = vld [vmem:[%s522 + $0x38] sm:$0xff]
        %v618 = vld [vmem:[%s522 + $0x40] sm:$0xff]
        %v619 = vld [vmem:[%s522 + $0x48] sm:$0xff]
        %v620 = vld [vmem:[%s522 + $0x50] sm:$0xff]
        %v621 = vld [vmem:[%s522 + $0x58] sm:$0xff]
        %v622 = vld [vmem:[%s522 + $0x60] sm:$0xff]
        %v623 = vld [vmem:[%s522 + $0x68] sm:$0xff]
        %v624 = vld [vmem:[%s522 + $0x70] sm:$0xff]
        %v625 = vld [vmem:[%s522 + $0x78] sm:$0xff]
        %v626 = vpack.c.bf16 %v611, %v610
        %v627 = vpack.c.bf16 %v613, %v612
        %v628 = vpack.c.bf16 %v615, %v614
        %v629 = vpack.c.bf16 %v617, %v616
        %v630 = vpack.c.bf16 %v619, %v618
        %v631 = vpack.c.bf16 %v621, %v620
        %v632 = vpack.c.bf16 %v623, %v622
        %v633 = vpack.c.bf16 %v625, %v624
        %v634 = vld [vmem:[%s605] sm:$0xff]
        %v635 = vld [vmem:[%s605 + $0x8] sm:$0xff]
        %v636 = vpack.c.bf16 %v635, %v634
        %v637 = vld [vmem:[%s3] sm:$0xf]
        %v638 = vld [vmem:[%s3 + $0x4] sm:$0xf]
        %v639 = vld [vmem:[%s3 + $0x8] sm:$0xf]
        %v640 = vld [vmem:[%s3 + $0xc] sm:$0xf]
        %v641 = vld [vmem:[#allocation5] sm:$0x1]
        %v643 = vperm.slane %v641, 0
        %v649 = vunpack.c.l.b16 %v637
        %v650 = vunpack.c.l.b16 %v638
        %v651 = vunpack.c.l.b16 %v639
        %v652 = vunpack.c.l.b16 %v640
        %v653 = vpack.c.b16 %v650, %v649
        %v654 = vpack.c.b16 %v652, %v651
        %vm657 = vcmask 261120
        %v659 = vsel %vm657, %v636, 0
        %661 = vmatpush.bf16.msra.mxu0 0
        %662 = vmatpush.bf16.msra.mxu0 0
        %663 = vmatpush.bf16.msra.mxu0 0
        %664 = vmatpush.bf16.msra.mxu0 0
        %665 = vmatpush.bf16.msra.mxu0 0
        %666 = vmatpush.bf16.msra.mxu0 0
        %667 = vmatpush.bf16.msra.mxu0 %v654
        %668 = vmatpush.bf16.msra.mxu0 %v653
        %669 = vmatmul.bf16.gmra.mxu0 %v659
        %v670 = vpop.f32.mrf.mxu0
        %v671 = vadd.f32 %v643, %v670
        %v672 = vpop.f32.mrf.mxu0
        %v673 = vadd.f32 %v643, %v672
        %674 = vdwg.mxu0
        %v675 = vld [vmem:[%s5] sm:$0xf]
        %v676 = vld [vmem:[%s5 + $0x4] sm:$0xf]
        %v677 = vld [vmem:[%s5 + $0x8] sm:$0xf]
        %v678 = vld [vmem:[%s5 + $0xc] sm:$0xf]
        %v679 = vld [vmem:[%s6] sm:$0x1]
        %v681 = vperm.slane %v679, 0
        %v687 = vunpack.c.l.b16 %v675
        %v688 = vunpack.c.l.b16 %v676
        %v689 = vunpack.c.l.b16 %v677
        %v690 = vunpack.c.l.b16 %v678
        %v691 = vpack.c.b16 %v688, %v687
        %v692 = vpack.c.b16 %v690, %v689
        %v696 = vsel %vm657, %v626, 0
        %v699 = vsel %vm657, %v627, 0
        %v702 = vsel %vm657, %v628, 0
        %v705 = vsel %vm657, %v629, 0
        %v708 = vsel %vm657, %v630, 0
        %v711 = vsel %vm657, %v631, 0
        %v714 = vsel %vm657, %v632, 0
        %v717 = vsel %vm657, %v633, 0
        %719 = vmatpush.bf16.msra.mxu0 0
        %720 = vmatpush.bf16.msra.mxu0 0
        %721 = vmatpush.bf16.msra.mxu0 0
        %722 = vmatpush.bf16.msra.mxu0 0
        %723 = vmatpush.bf16.msra.mxu0 0
        %724 = vmatpush.bf16.msra.mxu0 0
        %725 = vmatpush.bf16.msra.mxu0 %v692
        %726 = vmatpush.bf16.msra.mxu0 %v691
        %727 = vmatmul.bf16.gmra.mxu0 %v696
        %v728 = vpop.f32.mrf.mxu0
        %v729 = vadd.f32 %v681, %v728
        %v730 = vpop.f32.mrf.mxu0
        %v731 = vadd.f32 %v681, %v730
        %732 = vmatmul.bf16.gmra.mxu0 %v699
        %v733 = vpop.f32.mrf.mxu0
        %v734 = vadd.f32 %v681, %v733
        %v735 = vpop.f32.mrf.mxu0
        %v736 = vadd.f32 %v681, %v735
        %737 = vmatmul.bf16.gmra.mxu0 %v702
        %v738 = vpop.f32.mrf.mxu0
        %v739 = vadd.f32 %v681, %v738
        %v740 = vpop.f32.mrf.mxu0
        %v741 = vadd.f32 %v681, %v740
        %742 = vmatmul.bf16.gmra.mxu0 %v705
        %v743 = vpop.f32.mrf.mxu0
        %v744 = vadd.f32 %v681, %v743
        %v745 = vpop.f32.mrf.mxu0
        %v746 = vadd.f32 %v681, %v745
        %747 = vmatmul.bf16.gmra.mxu0 %v708
        %v748 = vpop.f32.mrf.mxu0
        %v749 = vadd.f32 %v681, %v748
        %v750 = vpop.f32.mrf.mxu0
        %v751 = vadd.f32 %v681, %v750
        %752 = vmatmul.bf16.gmra.mxu0 %v711
        %v753 = vpop.f32.mrf.mxu0
        %v754 = vadd.f32 %v681, %v753
        %v755 = vpop.f32.mrf.mxu0
        %v756 = vadd.f32 %v681, %v755
        %757 = vmatmul.bf16.gmra.mxu0 %v714
        %v758 = vpop.f32.mrf.mxu0
        %v759 = vadd.f32 %v681, %v758
        %v760 = vpop.f32.mrf.mxu0
        %v761 = vadd.f32 %v681, %v760
        %762 = vmatmul.bf16.gmra.mxu0 %v717
        %v763 = vpop.f32.mrf.mxu0
        %v764 = vadd.f32 %v681, %v763
        %v765 = vpop.f32.mrf.mxu0
        %v766 = vadd.f32 %v681, %v765
        %767 = vdwg.mxu0
        %v768 = vld [vmem:[#allocation7] sm:$0xf]
        %v769 = vld [vmem:[#allocation7 + $0x4] sm:$0xf]
        %v770 = vld [vmem:[#allocation7 + $0x8] sm:$0xf]
        %v771 = vld [vmem:[#allocation7 + $0xc] sm:$0xf]
        %v772 = vld [vmem:[%s8] sm:$0x1]
        %v774 = vperm.slane %v772, 0
        %v780 = vunpack.c.l.b16 %v768
        %v781 = vunpack.c.l.b16 %v769
        %v782 = vunpack.c.l.b16 %v770
        %v783 = vunpack.c.l.b16 %v771
        %v784 = vpack.c.b16 %v781, %v780
        %v785 = vpack.c.b16 %v783, %v782
        %788 = vmatpush.bf16.msra.mxu0 0
        %789 = vmatpush.bf16.msra.mxu0 0
        %790 = vmatpush.bf16.msra.mxu0 0
        %791 = vmatpush.bf16.msra.mxu0 0
        %792 = vmatpush.bf16.msra.mxu0 0
        %793 = vmatpush.bf16.msra.mxu0 0
        %794 = vmatpush.bf16.msra.mxu0 %v785
        %795 = vmatpush.bf16.msra.mxu0 %v784
        %796 = vmatmul.bf16.gmra.mxu0 %v696
        %v797 = vpop.f32.mrf.mxu0
        %v798 = vadd.f32 %v774, %v797
        %v799 = vpop.f32.mrf.mxu0
        %v800 = vadd.f32 %v774, %v799
        %801 = vmatmul.bf16.gmra.mxu0 %v699
        %v802 = vpop.f32.mrf.mxu0
        %v803 = vadd.f32 %v774, %v802
        %v804 = vpop.f32.mrf.mxu0
        %v805 = vadd.f32 %v774, %v804
        %806 = vmatmul.bf16.gmra.mxu0 %v702
        %v807 = vpop.f32.mrf.mxu0
        %v808 = vadd.f32 %v774, %v807
        %v809 = vpop.f32.mrf.mxu0
        %v810 = vadd.f32 %v774, %v809
        %811 = vmatmul.bf16.gmra.mxu0 %v705
        %v812 = vpop.f32.mrf.mxu0
        %v813 = vadd.f32 %v774, %v812
        %v814 = vpop.f32.mrf.mxu0
        %v815 = vadd.f32 %v774, %v814
        %816 = vmatmul.bf16.gmra.mxu0 %v708
        %v817 = vpop.f32.mrf.mxu0
        %v818 = vadd.f32 %v774, %v817
        %v819 = vpop.f32.mrf.mxu0
        %v820 = vadd.f32 %v774, %v819
        %821 = vmatmul.bf16.gmra.mxu0 %v711
        %v822 = vpop.f32.mrf.mxu0
        %v823 = vadd.f32 %v774, %v822
        %v824 = vpop.f32.mrf.mxu0
        %v825 = vadd.f32 %v774, %v824
        %826 = vmatmul.bf16.gmra.mxu0 %v714
        %v827 = vpop.f32.mrf.mxu0
        %v828 = vadd.f32 %v774, %v827
        %v829 = vpop.f32.mrf.mxu0
        %v830 = vadd.f32 %v774, %v829
        %831 = vmatmul.bf16.gmra.mxu0 %v717
        %v832 = vpop.f32.mrf.mxu0
        %v833 = vadd.f32 %v774, %v832
        %v834 = vpop.f32.mrf.mxu0
        %v835 = vadd.f32 %v774, %v834
        %836 = vdwg.mxu0
        %v839 = vrot.slane %v671, 1
        %v840 = vrot.slane %v671, 2
        %v841 = vrot.slane %v671, 3
        %v842 = vrot.slane %v671, 4
        %v843 = vrot.slane %v671, 5
        %v844 = vrot.slane %v671, 6
        %v845 = vrot.slane %v671, 7
        %v846 = vrot.slane %v673, 1
        %v847 = vrot.slane %v673, 2
        %v848 = vrot.slane %v673, 3
        %v849 = vrot.slane %v673, 4
        %v850 = vrot.slane %v673, 5
        %v851 = vrot.slane %v673, 6
        %v852 = vrot.slane %v673, 7
        %v853 = vperm.slane %v671, 0
        %v854 = vperm.slane %v839, 0
        %v855 = vperm.slane %v840, 0
        %v856 = vperm.slane %v841, 0
        %v857 = vperm.slane %v842, 0
        %v858 = vperm.slane %v843, 0
        %v859 = vperm.slane %v844, 0
        %v860 = vperm.slane %v845, 0
        %v861 = vperm.slane %v673, 0
        %v862 = vperm.slane %v846, 0
        %v863 = vperm.slane %v847, 0
        %v864 = vperm.slane %v848, 0
        %v865 = vperm.slane %v849, 0
        %v866 = vperm.slane %v850, 0
        %v867 = vperm.slane %v851, 0
        %v868 = vperm.slane %v852, 0
        %v885 = vmul.f32 %v729, %v853
        %v886 = vmul.f32 %v731, %v854
        %v887 = vmul.f32 %v734, %v855
        %v888 = vmul.f32 %v736, %v856
        %v889 = vmul.f32 %v739, %v857
        %v890 = vmul.f32 %v741, %v858
        %v891 = vmul.f32 %v744, %v859
        %v892 = vmul.f32 %v746, %v860
        %v893 = vmul.f32 %v749, %v861
        %v894 = vmul.f32 %v751, %v862
        %v895 = vmul.f32 %v754, %v863
        %v896 = vmul.f32 %v756, %v864
        %v897 = vmul.f32 %v759, %v865
        %v898 = vmul.f32 %v761, %v866
        %v899 = vmul.f32 %v764, %v867
        %v900 = vmul.f32 %v766, %v868
        %v901 = vld [vmem:[%s13] sm:$0xff]
        %v902 = vld [vmem:[%s13 + $0x8] sm:$0xff]
        %v903 = vld [vmem:[%s13 + $0x10] sm:$0xff]
        %v904 = vld [vmem:[%s13 + $0x18] sm:$0xff]
        %v906 = vsel %vm657, %v885, 0
        %v909 = vsel %vm657, %v886, 0
        %v912 = vsel %vm657, %v887, 0
        %v915 = vsel %vm657, %v888, 0
        %v918 = vsel %vm657, %v889, 0
        %v921 = vsel %vm657, %v890, 0
        %v924 = vsel %vm657, %v891, 0
        %v927 = vsel %vm657, %v892, 0
        %v930 = vsel %vm657, %v893, 0
        %v933 = vsel %vm657, %v894, 0
        %v936 = vsel %vm657, %v895, 0
        %v939 = vsel %vm657, %v896, 0
        %v942 = vsel %vm657, %v897, 0
        %v945 = vsel %vm657, %v898, 0
        %v948 = vsel %vm657, %v899, 0
        %v951 = vsel %vm657, %v900, 0
        %953 = vmatpush.msra.mxu0 0.0
        %954 = vmatpush.msra.mxu0 0.0
        %955 = vmatpush.msra.mxu0 0.0
        %956 = vmatpush.msra.mxu0 0.0
        %957 = vmatpush.msra.mxu0 0.0
        %958 = vmatpush.msra.mxu0 0.0
        %959 = vmatpush.msra.mxu0 0.0
        %960 = vmatpush.msra.mxu0 0.0
        %961 = vmatpush.msra.mxu0 0.0
        %962 = vmatpush.msra.mxu0 0.0
        %963 = vmatpush.msra.mxu0 0.0
        %964 = vmatpush.msra.mxu0 0.0
        %965 = vmatpush.msra.mxu0 %v904
        %966 = vmatpush.msra.mxu0 %v903
        %967 = vmatpush.msra.mxu0 %v902
        %968 = vmatpush.msra.mxu0 %v901
        %969 = vmatmul.f32.gmra.mxu0 %v906
        %v970 = vpop.f32.mrf.mxu0
        %v971 = vadd.f32 0.0, %v970
        %972 = vmatmul.f32.gmra.mxu0 %v909
        %v973 = vpop.f32.mrf.mxu0
        %v974 = vadd.f32 0.0, %v973
        %975 = vmatmul.f32.gmra.mxu0 %v912
        %v976 = vpop.f32.mrf.mxu0
        %v977 = vadd.f32 0.0, %v976
        %978 = vmatmul.f32.gmra.mxu0 %v915
        %v979 = vpop.f32.mrf.mxu0
        %v980 = vadd.f32 0.0, %v979
        %981 = vmatmul.f32.gmra.mxu0 %v918
        %v982 = vpop.f32.mrf.mxu0
        %v983 = vadd.f32 0.0, %v982
        %984 = vmatmul.f32.gmra.mxu0 %v921
        %v985 = vpop.f32.mrf.mxu0
        %v986 = vadd.f32 0.0, %v985
        %987 = vmatmul.f32.gmra.mxu0 %v924
        %v988 = vpop.f32.mrf.mxu0
        %v989 = vadd.f32 0.0, %v988
        %990 = vmatmul.f32.gmra.mxu0 %v927
        %v991 = vpop.f32.mrf.mxu0
        %v992 = vadd.f32 0.0, %v991
        %993 = vmatmul.f32.gmra.mxu0 %v930
        %v994 = vpop.f32.mrf.mxu0
        %v995 = vadd.f32 0.0, %v994
        %996 = vmatmul.f32.gmra.mxu0 %v933
        %v997 = vpop.f32.mrf.mxu0
        %v998 = vadd.f32 0.0, %v997
        %999 = vmatmul.f32.gmra.mxu0 %v936
        %v1000 = vpop.f32.mrf.mxu0
        %v1001 = vadd.f32 0.0, %v1000
        %1002 = vmatmul.f32.gmra.mxu0 %v939
        %v1003 = vpop.f32.mrf.mxu0
        %v1004 = vadd.f32 0.0, %v1003
        %1005 = vmatmul.f32.gmra.mxu0 %v942
        %v1006 = vpop.f32.mrf.mxu0
        %v1007 = vadd.f32 0.0, %v1006
        %1008 = vmatmul.f32.gmra.mxu0 %v945
        %v1009 = vpop.f32.mrf.mxu0
        %v1010 = vadd.f32 0.0, %v1009
        %1011 = vmatmul.f32.gmra.mxu0 %v948
        %v1012 = vpop.f32.mrf.mxu0
        %v1013 = vadd.f32 0.0, %v1012
        %1014 = vmatmul.f32.gmra.mxu0 %v951
        %v1015 = vpop.f32.mrf.mxu0
        %v1016 = vadd.f32 0.0, %v1015
        %1017 = vdwg.mxu0
        %v1018 = vld [vmem:[%s599] sm:$0xff]
        %v1019 = vld [vmem:[%s599 + $0x8] sm:$0xff]
        %v1020 = vlaneseq
        %v1021 = vshrl.u32 %v1020, 7
        %v1022 = vrot.slane %v1018, 1
        %v1023 = vrot.slane %v1018, 2
        %v1024 = vrot.slane %v1018, 3
        %v1025 = vrot.slane %v1018, 4
        %v1026 = vrot.slane %v1018, 5
        %v1027 = vrot.slane %v1018, 6
        %v1028 = vrot.slane %v1018, 7
        %v1029 = vrot.slane %v1019, 1
        %v1030 = vrot.slane %v1019, 2
        %v1031 = vrot.slane %v1019, 3
        %v1032 = vrot.slane %v1019, 4
        %v1033 = vrot.slane %v1019, 5
        %v1034 = vrot.slane %v1019, 6
        %v1035 = vrot.slane %v1019, 7
        %v1036 = vperm.slane %v1018, 0
        %v1037 = vperm.slane %v1022, 0
        %v1038 = vperm.slane %v1023, 0
        %v1039 = vperm.slane %v1024, 0
        %v1040 = vperm.slane %v1025, 0
        %v1041 = vperm.slane %v1026, 0
        %v1042 = vperm.slane %v1027, 0
        %v1043 = vperm.slane %v1028, 0
        %v1044 = vperm.slane %v1019, 0
        %v1045 = vperm.slane %v1029, 0
        %v1046 = vperm.slane %v1030, 0
        %v1047 = vperm.slane %v1031, 0
        %v1048 = vperm.slane %v1032, 0
        %v1049 = vperm.slane %v1033, 0
        %v1050 = vperm.slane %v1034, 0
        %v1051 = vperm.slane %v1035, 0
        %vm1052 = vcmp.ge.s32.totalorder %v1021, %v1036
        %vm1053 = vcmp.ge.s32.totalorder %v1021, %v1037
        %vm1054 = vcmp.ge.s32.totalorder %v1021, %v1038
        %vm1055 = vcmp.ge.s32.totalorder %v1021, %v1039
        %vm1056 = vcmp.ge.s32.totalorder %v1021, %v1040
        %vm1057 = vcmp.ge.s32.totalorder %v1021, %v1041
        %vm1058 = vcmp.ge.s32.totalorder %v1021, %v1042
        %vm1059 = vcmp.ge.s32.totalorder %v1021, %v1043
        %vm1060 = vcmp.ge.s32.totalorder %v1021, %v1044
        %vm1061 = vcmp.ge.s32.totalorder %v1021, %v1045
        %vm1062 = vcmp.ge.s32.totalorder %v1021, %v1046
        %vm1063 = vcmp.ge.s32.totalorder %v1021, %v1047
        %vm1064 = vcmp.ge.s32.totalorder %v1021, %v1048
        %vm1065 = vcmp.ge.s32.totalorder %v1021, %v1049
        %vm1066 = vcmp.ge.s32.totalorder %v1021, %v1050
        %vm1067 = vcmp.ge.s32.totalorder %v1021, %v1051
        %v1068 = vsel %vm1052, 1, 0
        %v1069 = vsel %vm1053, 1, 0
        %v1070 = vsel %vm1054, 1, 0
        %v1071 = vsel %vm1055, 1, 0
        %v1072 = vsel %vm1056, 1, 0
        %v1073 = vsel %vm1057, 1, 0
        %v1074 = vsel %vm1058, 1, 0
        %v1075 = vsel %vm1059, 1, 0
        %v1076 = vsel %vm1060, 1, 0
        %v1077 = vsel %vm1061, 1, 0
        %v1078 = vsel %vm1062, 1, 0
        %v1079 = vsel %vm1063, 1, 0
        %v1080 = vsel %vm1064, 1, 0
        %v1081 = vsel %vm1065, 1, 0
        %v1082 = vsel %vm1066, 1, 0
        %v1083 = vsel %vm1067, 1, 0
        %1084 = vset.pattern.permute.xlu0 0
        %1085 = vperm.xlu0 %1084, %v1068
        %v1086 = vpop.permute.xlu0 %1085
        %1087 = vset.pattern.permute.xlu0 0
        %1088 = vperm.xlu0 %1087, %v1069
        %v1089 = vpop.permute.xlu0 %1088
        %1090 = vset.pattern.permute.xlu0 0
        %1091 = vperm.xlu0 %1090, %v1070
        %v1092 = vpop.permute.xlu0 %1091
        %1093 = vset.pattern.permute.xlu0 0
        %1094 = vperm.xlu0 %1093, %v1071
        %v1095 = vpop.permute.xlu0 %1094
        %1096 = vset.pattern.permute.xlu0 0
        %1097 = vperm.xlu0 %1096, %v1072
        %v1098 = vpop.permute.xlu0 %1097
        %1099 = vset.pattern.permute.xlu0 0
        %1100 = vperm.xlu0 %1099, %v1073
        %v1101 = vpop.permute.xlu0 %1100
        %1102 = vset.pattern.permute.xlu0 0
        %1103 = vperm.xlu0 %1102, %v1074
        %v1104 = vpop.permute.xlu0 %1103
        %1105 = vset.pattern.permute.xlu0 0
        %1106 = vperm.xlu0 %1105, %v1075
        %v1107 = vpop.permute.xlu0 %1106
        %1108 = vset.pattern.permute.xlu0 0
        %1109 = vperm.xlu0 %1108, %v1076
        %v1110 = vpop.permute.xlu0 %1109
        %1111 = vset.pattern.permute.xlu0 0
        %1112 = vperm.xlu0 %1111, %v1077
        %v1113 = vpop.permute.xlu0 %1112
        %1114 = vset.pattern.permute.xlu0 0
        %1115 = vperm.xlu0 %1114, %v1078
        %v1116 = vpop.permute.xlu0 %1115
        %1117 = vset.pattern.permute.xlu0 0
        %1118 = vperm.xlu0 %1117, %v1079
        %v1119 = vpop.permute.xlu0 %1118
        %1120 = vset.pattern.permute.xlu0 0
        %1121 = vperm.xlu0 %1120, %v1080
        %v1122 = vpop.permute.xlu0 %1121
        %1123 = vset.pattern.permute.xlu0 0
        %1124 = vperm.xlu0 %1123, %v1081
        %v1125 = vpop.permute.xlu0 %1124
        %1126 = vset.pattern.permute.xlu0 0
        %1127 = vperm.xlu0 %1126, %v1082
        %v1128 = vpop.permute.xlu0 %1127
        %1129 = vset.pattern.permute.xlu0 0
        %1130 = vperm.xlu0 %1129, %v1083
        %v1131 = vpop.permute.xlu0 %1130
        %vm1132 = vcmp.eq.s32.totalorder %v1086, 1
        %vm1133 = vcmp.eq.s32.totalorder %v1089, 1
        %vm1134 = vcmp.eq.s32.totalorder %v1092, 1
        %vm1135 = vcmp.eq.s32.totalorder %v1095, 1
        %vm1136 = vcmp.eq.s32.totalorder %v1098, 1
        %vm1137 = vcmp.eq.s32.totalorder %v1101, 1
        %vm1138 = vcmp.eq.s32.totalorder %v1104, 1
        %vm1139 = vcmp.eq.s32.totalorder %v1107, 1
        %vm1140 = vcmp.eq.s32.totalorder %v1110, 1
        %vm1141 = vcmp.eq.s32.totalorder %v1113, 1
        %vm1142 = vcmp.eq.s32.totalorder %v1116, 1
        %vm1143 = vcmp.eq.s32.totalorder %v1119, 1
        %vm1144 = vcmp.eq.s32.totalorder %v1122, 1
        %vm1145 = vcmp.eq.s32.totalorder %v1125, 1
        %vm1146 = vcmp.eq.s32.totalorder %v1128, 1
        %vm1147 = vcmp.eq.s32.totalorder %v1131, 1
        %v1148 = vsel %vm1132, -1e+30, %v971
        %v1149 = vsel %vm1133, -1e+30, %v974
        %v1150 = vsel %vm1134, -1e+30, %v977
        %v1151 = vsel %vm1135, -1e+30, %v980
        %v1152 = vsel %vm1136, -1e+30, %v983
        %v1153 = vsel %vm1137, -1e+30, %v986
        %v1154 = vsel %vm1138, -1e+30, %v989
        %v1155 = vsel %vm1139, -1e+30, %v992
        %v1156 = vsel %vm1140, -1e+30, %v995
        %v1157 = vsel %vm1141, -1e+30, %v998
        %v1158 = vsel %vm1142, -1e+30, %v1001
        %v1159 = vsel %vm1143, -1e+30, %v1004
        %v1160 = vsel %vm1144, -1e+30, %v1007
        %v1161 = vsel %vm1145, -1e+30, %v1010
        %v1162 = vsel %vm1146, -1e+30, %v1013
        %v1163 = vsel %vm1147, -1e+30, %v1016
        %vm1164 = vcmask 31744
        %v1165 = vsel %vm1164, %v1148, -inf
        %v1166 = vrot.slane %v1165, 4
        %v1167 = vmax.f32 %v1165, %v1166
        %v1168 = vrot.slane %v1167, 2
        %v1169 = vmax.f32 %v1167, %v1168
        %v1170 = vrot.slane %v1169, 1
        %v1171 = vmax.f32 %v1169, %v1170
        %v1172 = vsel %vm1164, %v1149, -inf
        %v1173 = vrot.slane %v1172, 4
        %v1174 = vmax.f32 %v1172, %v1173
        %v1175 = vrot.slane %v1174, 2
        %v1176 = vmax.f32 %v1174, %v1175
        %v1177 = vrot.slane %v1176, 1
        %v1178 = vmax.f32 %v1176, %v1177
        %v1179 = vsel %vm1164, %v1150, -inf
        %v1180 = vrot.slane %v1179, 4
        %v1181 = vmax.f32 %v1179, %v1180
        %v1182 = vrot.slane %v1181, 2
        %v1183 = vmax.f32 %v1181, %v1182
        %v1184 = vrot.slane %v1183, 1
        %v1185 = vmax.f32 %v1183, %v1184
        %v1186 = vsel %vm1164, %v1151, -inf
        %v1187 = vrot.slane %v1186, 4
        %v1188 = vmax.f32 %v1186, %v1187
        %v1189 = vrot.slane %v1188, 2
        %v1190 = vmax.f32 %v1188, %v1189
        %v1191 = vrot.slane %v1190, 1
        %v1192 = vmax.f32 %v1190, %v1191
        %v1193 = vsel %vm1164, %v1152, -inf
        %v1194 = vrot.slane %v1193, 4
        %v1195 = vmax.f32 %v1193, %v1194
        %v1196 = vrot.slane %v1195, 2
        %v1197 = vmax.f32 %v1195, %v1196
        %v1198 = vrot.slane %v1197, 1
        %v1199 = vmax.f32 %v1197, %v1198
        %v1200 = vsel %vm1164, %v1153, -inf
        %v1201 = vrot.slane %v1200, 4
        %v1202 = vmax.f32 %v1200, %v1201
        %v1203 = vrot.slane %v1202, 2
        %v1204 = vmax.f32 %v1202, %v1203
        %v1205 = vrot.slane %v1204, 1
        %v1206 = vmax.f32 %v1204, %v1205
        %v1207 = vsel %vm1164, %v1154, -inf
        %v1208 = vrot.slane %v1207, 4
        %v1209 = vmax.f32 %v1207, %v1208
        %v1210 = vrot.slane %v1209, 2
        %v1211 = vmax.f32 %v1209, %v1210
        %v1212 = vrot.slane %v1211, 1
        %v1213 = vmax.f32 %v1211, %v1212
        %v1214 = vsel %vm1164, %v1155, -inf
        %v1215 = vrot.slane %v1214, 4
        %v1216 = vmax.f32 %v1214, %v1215
        %v1217 = vrot.slane %v1216, 2
        %v1218 = vmax.f32 %v1216, %v1217
        %v1219 = vrot.slane %v1218, 1
        %v1220 = vmax.f32 %v1218, %v1219
        %v1221 = vsel %vm1164, %v1156, -inf
        %v1222 = vrot.slane %v1221, 4
        %v1223 = vmax.f32 %v1221, %v1222
        %v1224 = vrot.slane %v1223, 2
        %v1225 = vmax.f32 %v1223, %v1224
        %v1226 = vrot.slane %v1225, 1
        %v1227 = vmax.f32 %v1225, %v1226
        %v1228 = vsel %vm1164, %v1157, -inf
        %v1229 = vrot.slane %v1228, 4
        %v1230 = vmax.f32 %v1228, %v1229
        %v1231 = vrot.slane %v1230, 2
        %v1232 = vmax.f32 %v1230, %v1231
        %v1233 = vrot.slane %v1232, 1
        %v1234 = vmax.f32 %v1232, %v1233
        %v1235 = vsel %vm1164, %v1158, -inf
        %v1236 = vrot.slane %v1235, 4
        %v1237 = vmax.f32 %v1235, %v1236
        %v1238 = vrot.slane %v1237, 2
        %v1239 = vmax.f32 %v1237, %v1238
        %v1240 = vrot.slane %v1239, 1
        %v1241 = vmax.f32 %v1239, %v1240
        %v1242 = vsel %vm1164, %v1159, -inf
        %v1243 = vrot.slane %v1242, 4
        %v1244 = vmax.f32 %v1242, %v1243
        %v1245 = vrot.slane %v1244, 2
        %v1246 = vmax.f32 %v1244, %v1245
        %v1247 = vrot.slane %v1246, 1
        %v1248 = vmax.f32 %v1246, %v1247
        %v1249 = vsel %vm1164, %v1160, -inf
        %v1250 = vrot.slane %v1249, 4
        %v1251 = vmax.f32 %v1249, %v1250
        %v1252 = vrot.slane %v1251, 2
        %v1253 = vmax.f32 %v1251, %v1252
        %v1254 = vrot.slane %v1253, 1
        %v1255 = vmax.f32 %v1253, %v1254
        %v1256 = vsel %vm1164, %v1161, -inf
        %v1257 = vrot.slane %v1256, 4
        %v1258 = vmax.f32 %v1256, %v1257
        %v1259 = vrot.slane %v1258, 2
        %v1260 = vmax.f32 %v1258, %v1259
        %v1261 = vrot.slane %v1260, 1
        %v1262 = vmax.f32 %v1260, %v1261
        %v1263 = vsel %vm1164, %v1162, -inf
        %v1264 = vrot.slane %v1263, 4
        %v1265 = vmax.f32 %v1263, %v1264
        %v1266 = vrot.slane %v1265, 2
        %v1267 = vmax.f32 %v1265, %v1266
        %v1268 = vrot.slane %v1267, 1
        %v1269 = vmax.f32 %v1267, %v1268
        %v1270 = vsel %vm1164, %v1163, -inf
        %v1271 = vrot.slane %v1270, 4
        %v1272 = vmax.f32 %v1270, %v1271
        %v1273 = vrot.slane %v1272, 2
        %v1274 = vmax.f32 %v1272, %v1273
        %v1275 = vrot.slane %v1274, 1
        %v1276 = vmax.f32 %v1274, %v1275
        %v1277 = vsub.f32 %v1148, %v1171
        %v1278 = vsub.f32 %v1149, %v1178
        %v1279 = vsub.f32 %v1150, %v1185
        %v1280 = vsub.f32 %v1151, %v1192
        %v1281 = vsub.f32 %v1152, %v1199
        %v1282 = vsub.f32 %v1153, %v1206
        %v1283 = vsub.f32 %v1154, %v1213
        %v1284 = vsub.f32 %v1155, %v1220
        %v1285 = vsub.f32 %v1156, %v1227
        %v1286 = vsub.f32 %v1157, %v1234
        %v1287 = vsub.f32 %v1158, %v1241
        %v1288 = vsub.f32 %v1159, %v1248
        %v1289 = vsub.f32 %v1160, %v1255
        %v1290 = vsub.f32 %v1161, %v1262
        %v1291 = vsub.f32 %v1162, %v1269
        %v1292 = vsub.f32 %v1163, %v1276
        %v1293 = vmul.f32 %v1277, 1.442695
        %v1294 = vpow.pop %v1293
        %v1295 = vmul.f32 %v1278, 1.442695
        %v1296 = vpow.pop %v1295
        %v1297 = vmul.f32 %v1279, 1.442695
        %v1298 = vpow.pop %v1297
        %v1299 = vmul.f32 %v1280, 1.442695
        %v1300 = vpow.pop %v1299
        %v1301 = vmul.f32 %v1281, 1.442695
        %v1302 = vpow.pop %v1301
        %v1303 = vmul.f32 %v1282, 1.442695
        %v1304 = vpow.pop %v1303
        %v1305 = vmul.f32 %v1283, 1.442695
        %v1306 = vpow.pop %v1305
        %v1307 = vmul.f32 %v1284, 1.442695
        %v1308 = vpow.pop %v1307
        %v1309 = vmul.f32 %v1285, 1.442695
        %v1310 = vpow.pop %v1309
        %v1311 = vmul.f32 %v1286, 1.442695
        %v1312 = vpow.pop %v1311
        %v1313 = vmul.f32 %v1287, 1.442695
        %v1314 = vpow.pop %v1313
        %v1315 = vmul.f32 %v1288, 1.442695
        %v1316 = vpow.pop %v1315
        %v1317 = vmul.f32 %v1289, 1.442695
        %v1318 = vpow.pop %v1317
        %v1319 = vmul.f32 %v1290, 1.442695
        %v1320 = vpow.pop %v1319
        %v1321 = vmul.f32 %v1291, 1.442695
        %v1322 = vpow.pop %v1321
        %v1323 = vmul.f32 %v1292, 1.442695
        %v1324 = vpow.pop %v1323
        %v1325 = vsel %vm1132, 0.0, %v1294
        %v1326 = vsel %vm1133, 0.0, %v1296
        %v1327 = vsel %vm1134, 0.0, %v1298
        %v1328 = vsel %vm1135, 0.0, %v1300
        %v1329 = vsel %vm1136, 0.0, %v1302
        %v1330 = vsel %vm1137, 0.0, %v1304
        %v1331 = vsel %vm1138, 0.0, %v1306
        %v1332 = vsel %vm1139, 0.0, %v1308
        %v1333 = vsel %vm1140, 0.0, %v1310
        %v1334 = vsel %vm1141, 0.0, %v1312
        %v1335 = vsel %vm1142, 0.0, %v1314
        %v1336 = vsel %vm1143, 0.0, %v1316
        %v1337 = vsel %vm1144, 0.0, %v1318
        %v1338 = vsel %vm1145, 0.0, %v1320
        %v1339 = vsel %vm1146, 0.0, %v1322
        %v1340 = vsel %vm1147, 0.0, %v1324
        %v1341 = vsel %vm1164, %v1325, 0.0
        %v1342 = vrot.slane %v1341, 4
        %v1343 = vadd.f32 %v1341, %v1342
        %v1344 = vrot.slane %v1343, 2
        %v1345 = vadd.f32 %v1343, %v1344
        %v1346 = vrot.slane %v1345, 1
        %v1347 = vadd.f32 %v1345, %v1346
        %v1348 = vsel %vm1164, %v1326, 0.0
        %v1349 = vrot.slane %v1348, 4
        %v1350 = vadd.f32 %v1348, %v1349
        %v1351 = vrot.slane %v1350, 2
        %v1352 = vadd.f32 %v1350, %v1351
        %v1353 = vrot.slane %v1352, 1
        %v1354 = vadd.f32 %v1352, %v1353
        %v1355 = vsel %vm1164, %v1327, 0.0
        %v1356 = vrot.slane %v1355, 4
        %v1357 = vadd.f32 %v1355, %v1356
        %v1358 = vrot.slane %v1357, 2
        %v1359 = vadd.f32 %v1357, %v1358
        %v1360 = vrot.slane %v1359, 1
        %v1361 = vadd.f32 %v1359, %v1360
        %v1362 = vsel %vm1164, %v1328, 0.0
        %v1363 = vrot.slane %v1362, 4
        %v1364 = vadd.f32 %v1362, %v1363
        %v1365 = vrot.slane %v1364, 2
        %v1366 = vadd.f32 %v1364, %v1365
        %v1367 = vrot.slane %v1366, 1
        %v1368 = vadd.f32 %v1366, %v1367
        %v1369 = vsel %vm1164, %v1329, 0.0
        %v1370 = vrot.slane %v1369, 4
        %v1371 = vadd.f32 %v1369, %v1370
        %v1372 = vrot.slane %v1371, 2
        %v1373 = vadd.f32 %v1371, %v1372
        %v1374 = vrot.slane %v1373, 1
        %v1375 = vadd.f32 %v1373, %v1374
        %v1376 = vsel %vm1164, %v1330, 0.0
        %v1377 = vrot.slane %v1376, 4
        %v1378 = vadd.f32 %v1376, %v1377
        %v1379 = vrot.slane %v1378, 2
        %v1380 = vadd.f32 %v1378, %v1379
        %v1381 = vrot.slane %v1380, 1
        %v1382 = vadd.f32 %v1380, %v1381
        %v1383 = vsel %vm1164, %v1331, 0.0
        %v1384 = vrot.slane %v1383, 4
        %v1385 = vadd.f32 %v1383, %v1384
        %v1386 = vrot.slane %v1385, 2
        %v1387 = vadd.f32 %v1385, %v1386
        %v1388 = vrot.slane %v1387, 1
        %v1389 = vadd.f32 %v1387, %v1388
        %v1390 = vsel %vm1164, %v1332, 0.0
        %v1391 = vrot.slane %v1390, 4
        %v1392 = vadd.f32 %v1390, %v1391
        %v1393 = vrot.slane %v1392, 2
        %v1394 = vadd.f32 %v1392, %v1393
        %v1395 = vrot.slane %v1394, 1
        %v1396 = vadd.f32 %v1394, %v1395
        %v1397 = vsel %vm1164, %v1333, 0.0
        %v1398 = vrot.slane %v1397, 4
        %v1399 = vadd.f32 %v1397, %v1398
        %v1400 = vrot.slane %v1399, 2
        %v1401 = vadd.f32 %v1399, %v1400
        %v1402 = vrot.slane %v1401, 1
        %v1403 = vadd.f32 %v1401, %v1402
        %v1404 = vsel %vm1164, %v1334, 0.0
        %v1405 = vrot.slane %v1404, 4
        %v1406 = vadd.f32 %v1404, %v1405
        %v1407 = vrot.slane %v1406, 2
        %v1408 = vadd.f32 %v1406, %v1407
        %v1409 = vrot.slane %v1408, 1
        %v1410 = vadd.f32 %v1408, %v1409
        %v1411 = vsel %vm1164, %v1335, 0.0
        %v1412 = vrot.slane %v1411, 4
        %v1413 = vadd.f32 %v1411, %v1412
        %v1414 = vrot.slane %v1413, 2
        %v1415 = vadd.f32 %v1413, %v1414
        %v1416 = vrot.slane %v1415, 1
        %v1417 = vadd.f32 %v1415, %v1416
        %v1418 = vsel %vm1164, %v1336, 0.0
        %v1419 = vrot.slane %v1418, 4
        %v1420 = vadd.f32 %v1418, %v1419
        %v1421 = vrot.slane %v1420, 2
        %v1422 = vadd.f32 %v1420, %v1421
        %v1423 = vrot.slane %v1422, 1
        %v1424 = vadd.f32 %v1422, %v1423
        %v1425 = vsel %vm1164, %v1337, 0.0
        %v1426 = vrot.slane %v1425, 4
        %v1427 = vadd.f32 %v1425, %v1426
        %v1428 = vrot.slane %v1427, 2
        %v1429 = vadd.f32 %v1427, %v1428
        %v1430 = vrot.slane %v1429, 1
        %v1431 = vadd.f32 %v1429, %v1430
        %v1432 = vsel %vm1164, %v1338, 0.0
        %v1433 = vrot.slane %v1432, 4
        %v1434 = vadd.f32 %v1432, %v1433
        %v1435 = vrot.slane %v1434, 2
        %v1436 = vadd.f32 %v1434, %v1435
        %v1437 = vrot.slane %v1436, 1
        %v1438 = vadd.f32 %v1436, %v1437
        %v1439 = vsel %vm1164, %v1339, 0.0
        %v1440 = vrot.slane %v1439, 4
        %v1441 = vadd.f32 %v1439, %v1440
        %v1442 = vrot.slane %v1441, 2
        %v1443 = vadd.f32 %v1441, %v1442
        %v1444 = vrot.slane %v1443, 1
        %v1445 = vadd.f32 %v1443, %v1444
        %v1446 = vsel %vm1164, %v1340, 0.0
        %v1447 = vrot.slane %v1446, 4
        %v1448 = vadd.f32 %v1446, %v1447
        %v1449 = vrot.slane %v1448, 2
        %v1450 = vadd.f32 %v1448, %v1449
        %v1451 = vrot.slane %v1450, 1
        %v1452 = vadd.f32 %v1450, %v1451
        %v1453 = vrcp.pop %v1347
        %v1454 = vrcp.pop %v1354
        %v1455 = vrcp.pop %v1361
        %v1456 = vrcp.pop %v1368
        %v1457 = vrcp.pop %v1375
        %v1458 = vrcp.pop %v1382
        %v1459 = vrcp.pop %v1389
        %v1460 = vrcp.pop %v1396
        %v1461 = vrcp.pop %v1403
        %v1462 = vrcp.pop %v1410
        %v1463 = vrcp.pop %v1417
        %v1464 = vrcp.pop %v1424
        %v1465 = vrcp.pop %v1431
        %v1466 = vrcp.pop %v1438
        %v1467 = vrcp.pop %v1445
        %v1468 = vrcp.pop %v1452
        %v1469 = vmul.f32 %v1325, %v1453
        %v1470 = vmul.f32 %v1326, %v1454
        %v1471 = vmul.f32 %v1327, %v1455
        %v1472 = vmul.f32 %v1328, %v1456
        %v1473 = vmul.f32 %v1329, %v1457
        %v1474 = vmul.f32 %v1330, %v1458
        %v1475 = vmul.f32 %v1331, %v1459
        %v1476 = vmul.f32 %v1332, %v1460
        %v1477 = vmul.f32 %v1333, %v1461
        %v1478 = vmul.f32 %v1334, %v1462
        %v1479 = vmul.f32 %v1335, %v1463
        %v1480 = vmul.f32 %v1336, %v1464
        %v1481 = vmul.f32 %v1337, %v1465
        %v1482 = vmul.f32 %v1338, %v1466
        %v1483 = vmul.f32 %v1339, %v1467
        %v1484 = vmul.f32 %v1340, %v1468
        %v1485 = vld [vmem:[%s14] sm:$0xf]
        %v1487 = vsel %vm1164, %v1469, 0
        %v1490 = vsel %vm1164, %v1470, 0
        %v1493 = vsel %vm1164, %v1471, 0
        %v1496 = vsel %vm1164, %v1472, 0
        %v1499 = vsel %vm1164, %v1473, 0
        %v1502 = vsel %vm1164, %v1474, 0
        %v1505 = vsel %vm1164, %v1475, 0
        %v1508 = vsel %vm1164, %v1476, 0
        %v1511 = vsel %vm1164, %v1477, 0
        %v1514 = vsel %vm1164, %v1478, 0
        %v1517 = vsel %vm1164, %v1479, 0
        %v1520 = vsel %vm1164, %v1480, 0
        %v1523 = vsel %vm1164, %v1481, 0
        %v1526 = vsel %vm1164, %v1482, 0
        %v1529 = vsel %vm1164, %v1483, 0
        %v1532 = vsel %vm1164, %v1484, 0
        %vm1534 = vcmask 1043456
        %v1536 = vsel %vm1534, %v1485, 0
        %1538 = vmatpush.msra.mxu0 0.0
        %1539 = vmatpush.msra.mxu0 0.0
        %1540 = vmatpush.msra.mxu0 0.0
        %1541 = vmatpush.msra.mxu0 0.0
        %1542 = vmatpush.msra.mxu0 0.0
        %1543 = vmatpush.msra.mxu0 0.0
        %1544 = vmatpush.msra.mxu0 0.0
        %1545 = vmatpush.msra.mxu0 0.0
        %1546 = vmatpush.msra.mxu0 0.0
        %1547 = vmatpush.msra.mxu0 0.0
        %1548 = vmatpush.msra.mxu0 0.0
        %1549 = vmatpush.msra.mxu0 0.0
        %1550 = vmatpush.msra.mxu0 0.0
        %1551 = vmatpush.msra.mxu0 0.0
        %1552 = vmatpush.msra.mxu0 0.0
        %1553 = vmatpush.msra.mxu0 %v1536
        %1554 = vmatmul.f32.gmra.mxu0 %v1487
        %v1555 = vpop.f32.mrf.mxu0
        %v1556 = vadd.f32 0.0, %v1555
        %1557 = vmatmul.f32.gmra.mxu0 %v1490
        %v1558 = vpop.f32.mrf.mxu0
        %v1559 = vadd.f32 0.0, %v1558
        %1560 = vmatmul.f32.gmra.mxu0 %v1493
        %v1561 = vpop.f32.mrf.mxu0
        %v1562 = vadd.f32 0.0, %v1561
        %1563 = vmatmul.f32.gmra.mxu0 %v1496
        %v1564 = vpop.f32.mrf.mxu0
        %v1565 = vadd.f32 0.0, %v1564
        %1566 = vmatmul.f32.gmra.mxu0 %v1499
        %v1567 = vpop.f32.mrf.mxu0
        %v1568 = vadd.f32 0.0, %v1567
        %1569 = vmatmul.f32.gmra.mxu0 %v1502
        %v1570 = vpop.f32.mrf.mxu0
        %v1571 = vadd.f32 0.0, %v1570
        %1572 = vmatmul.f32.gmra.mxu0 %v1505
        %v1573 = vpop.f32.mrf.mxu0
        %v1574 = vadd.f32 0.0, %v1573
        %1575 = vmatmul.f32.gmra.mxu0 %v1508
        %v1576 = vpop.f32.mrf.mxu0
        %v1577 = vadd.f32 0.0, %v1576
        %1578 = vmatmul.f32.gmra.mxu0 %v1511
        %v1579 = vpop.f32.mrf.mxu0
        %v1580 = vadd.f32 0.0, %v1579
        %1581 = vmatmul.f32.gmra.mxu0 %v1514
        %v1582 = vpop.f32.mrf.mxu0
        %v1583 = vadd.f32 0.0, %v1582
        %1584 = vmatmul.f32.gmra.mxu0 %v1517
        %v1585 = vpop.f32.mrf.mxu0
        %v1586 = vadd.f32 0.0, %v1585
        %1587 = vmatmul.f32.gmra.mxu0 %v1520
        %v1588 = vpop.f32.mrf.mxu0
        %v1589 = vadd.f32 0.0, %v1588
        %1590 = vmatmul.f32.gmra.mxu0 %v1523
        %v1591 = vpop.f32.mrf.mxu0
        %v1592 = vadd.f32 0.0, %v1591
        %1593 = vmatmul.f32.gmra.mxu0 %v1526
        %v1594 = vpop.f32.mrf.mxu0
        %v1595 = vadd.f32 0.0, %v1594
        %1596 = vmatmul.f32.gmra.mxu0 %v1529
        %v1597 = vpop.f32.mrf.mxu0
        %v1598 = vadd.f32 0.0, %v1597
        %1599 = vmatmul.f32.gmra.mxu0 %v1532
        %v1600 = vpop.f32.mrf.mxu0
        %v1601 = vadd.f32 0.0, %v1600
        %1602 = vdwg.mxu0
        %v1603 = vmul.f32 %v1556, %v798
        %v1604 = vmul.f32 %v1559, %v800
        %v1605 = vmul.f32 %v1562, %v803
        %v1606 = vmul.f32 %v1565, %v805
        %v1607 = vmul.f32 %v1568, %v808
        %v1608 = vmul.f32 %v1571, %v810
        %v1609 = vmul.f32 %v1574, %v813
        %v1610 = vmul.f32 %v1577, %v815
        %v1611 = vmul.f32 %v1580, %v818
        %v1612 = vmul.f32 %v1583, %v820
        %v1613 = vmul.f32 %v1586, %v823
        %v1614 = vmul.f32 %v1589, %v825
        %v1615 = vmul.f32 %v1592, %v828
        %v1616 = vmul.f32 %v1595, %v830
        %v1617 = vmul.f32 %v1598, %v833
        %v1618 = vmul.f32 %v1601, %v835
        %v1619 = vpack.c.bf16 %v1604, %v1603
        %v1620 = vpack.c.bf16 %v1606, %v1605
        %v1621 = vpack.c.bf16 %v1608, %v1607
        %v1622 = vpack.c.bf16 %v1610, %v1609
        %v1623 = vpack.c.bf16 %v1612, %v1611
        %v1624 = vpack.c.bf16 %v1614, %v1613
        %v1625 = vpack.c.bf16 %v1616, %v1615
        %v1626 = vpack.c.bf16 %v1618, %v1617
        %v1627 = vld [vmem:[#allocation8] sm:$0xf]
        %v1628 = vld [vmem:[#allocation8 + $0x4] sm:$0xf]
        %v1629 = vld [vmem:[#allocation8 + $0x8] sm:$0xf]
        %v1630 = vld [vmem:[#allocation8 + $0xc] sm:$0xf]
        %v1631 = vld [vmem:[%s10] sm:$0x1]
        %v1633 = vperm.slane %v1631, 0
        %v1639 = vunpack.c.l.b16 %v1627
        %v1640 = vunpack.c.l.b16 %v1628
        %v1641 = vunpack.c.l.b16 %v1629
        %v1642 = vunpack.c.l.b16 %v1630
        %v1643 = vpack.c.b16 %v1640, %v1639
        %v1644 = vpack.c.b16 %v1642, %v1641
        %v1648 = vsel %vm657, %v1619, 0
        %v1651 = vsel %vm657, %v1620, 0
        %v1654 = vsel %vm657, %v1621, 0
        %v1657 = vsel %vm657, %v1622, 0
        %v1660 = vsel %vm657, %v1623, 0
        %v1663 = vsel %vm657, %v1624, 0
        %v1666 = vsel %vm657, %v1625, 0
        %v1669 = vsel %vm657, %v1626, 0
        %1671 = vmatpush.bf16.msra.mxu0 0
        %1672 = vmatpush.bf16.msra.mxu0 0
        %1673 = vmatpush.bf16.msra.mxu0 0
        %1674 = vmatpush.bf16.msra.mxu0 0
        %1675 = vmatpush.bf16.msra.mxu0 0
        %1676 = vmatpush.bf16.msra.mxu0 0
        %1677 = vmatpush.bf16.msra.mxu0 %v1644
        %1678 = vmatpush.bf16.msra.mxu0 %v1643
        %1679 = vmatmul.bf16.gmra.mxu0 %v1648
        %v1680 = vpop.f32.mrf.mxu0
        %v1681 = vadd.f32 %v1633, %v1680
        %v1682 = vpop.f32.mrf.mxu0
        %v1683 = vadd.f32 %v1633, %v1682
        %1684 = vmatmul.bf16.gmra.mxu0 %v1651
        %v1685 = vpop.f32.mrf.mxu0
        %v1686 = vadd.f32 %v1633, %v1685
        %v1687 = vpop.f32.mrf.mxu0
        %v1688 = vadd.f32 %v1633, %v1687
        %1689 = vmatmul.bf16.gmra.mxu0 %v1654
        %v1690 = vpop.f32.mrf.mxu0
        %v1691 = vadd.f32 %v1633, %v1690
        %v1692 = vpop.f32.mrf.mxu0
        %v1693 = vadd.f32 %v1633, %v1692
        %1694 = vmatmul.bf16.gmra.mxu0 %v1657
        %v1695 = vpop.f32.mrf.mxu0
        %v1696 = vadd.f32 %v1633, %v1695
        %v1697 = vpop.f32.mrf.mxu0
        %v1698 = vadd.f32 %v1633, %v1697
        %1699 = vmatmul.bf16.gmra.mxu0 %v1660
        %v1700 = vpop.f32.mrf.mxu0
        %v1701 = vadd.f32 %v1633, %v1700
        %v1702 = vpop.f32.mrf.mxu0
        %v1703 = vadd.f32 %v1633, %v1702
        %1704 = vmatmul.bf16.gmra.mxu0 %v1663
        %v1705 = vpop.f32.mrf.mxu0
        %v1706 = vadd.f32 %v1633, %v1705
        %v1707 = vpop.f32.mrf.mxu0
        %v1708 = vadd.f32 %v1633, %v1707
        %1709 = vmatmul.bf16.gmra.mxu0 %v1666
        %v1710 = vpop.f32.mrf.mxu0
        %v1711 = vadd.f32 %v1633, %v1710
        %v1712 = vpop.f32.mrf.mxu0
        %v1713 = vadd.f32 %v1633, %v1712
        %1714 = vmatmul.bf16.gmra.mxu0 %v1669
        %v1715 = vpop.f32.mrf.mxu0
        %v1716 = vadd.f32 %v1633, %v1715
        %v1717 = vpop.f32.mrf.mxu0
        %v1718 = vadd.f32 %v1633, %v1717
        %1719 = vdwg.mxu0
        %v1720 = vadd.f32 %v610, %v1681
        %v1721 = vadd.f32 %v611, %v1683
        %v1722 = vadd.f32 %v612, %v1686
        %v1723 = vadd.f32 %v613, %v1688
        %v1724 = vadd.f32 %v614, %v1691
        %v1725 = vadd.f32 %v615, %v1693
        %v1726 = vadd.f32 %v616, %v1696
        %v1727 = vadd.f32 %v617, %v1698
        %v1728 = vadd.f32 %v618, %v1701
        %v1729 = vadd.f32 %v619, %v1703
        %v1730 = vadd.f32 %v620, %v1706
        %v1731 = vadd.f32 %v621, %v1708
        %v1732 = vadd.f32 %v622, %v1711
        %v1733 = vadd.f32 %v623, %v1713
        %v1734 = vadd.f32 %v624, %v1716
        %v1735 = vadd.f32 %v625, %v1718
        %v1736 = vsel %vm657, %v1720, 0.0
        %1737 = vadd.xlane.f32.xlu0 %v1736
        %v1738 = vpop.xlane.xlu0 %1737
        %v1739 = vsel %vm657, %v1721, 0.0
        %1740 = vadd.xlane.f32.xlu0 %v1739
        %v1741 = vpop.xlane.xlu0 %1740
        %v1742 = vsel %vm657, %v1722, 0.0
        %1743 = vadd.xlane.f32.xlu0 %v1742
        %v1744 = vpop.xlane.xlu0 %1743
        %v1745 = vsel %vm657, %v1723, 0.0
        %1746 = vadd.xlane.f32.xlu0 %v1745
        %v1747 = vpop.xlane.xlu0 %1746
        %v1748 = vsel %vm657, %v1724, 0.0
        %1749 = vadd.xlane.f32.xlu0 %v1748
        %v1750 = vpop.xlane.xlu0 %1749
        %v1751 = vsel %vm657, %v1725, 0.0
        %1752 = vadd.xlane.f32.xlu0 %v1751
        %v1753 = vpop.xlane.xlu0 %1752
        %v1754 = vsel %vm657, %v1726, 0.0
        %1755 = vadd.xlane.f32.xlu0 %v1754
        %v1756 = vpop.xlane.xlu0 %1755
        %v1757 = vsel %vm657, %v1727, 0.0
        %1758 = vadd.xlane.f32.xlu0 %v1757
        %v1759 = vpop.xlane.xlu0 %1758
        %v1760 = vsel %vm657, %v1728, 0.0
        %1761 = vadd.xlane.f32.xlu0 %v1760
        %v1762 = vpop.xlane.xlu0 %1761
        %v1763 = vsel %vm657, %v1729, 0.0
        %1764 = vadd.xlane.f32.xlu0 %v1763
        %v1765 = vpop.xlane.xlu0 %1764
        %v1766 = vsel %vm657, %v1730, 0.0
        %1767 = vadd.xlane.f32.xlu0 %v1766
        %v1768 = vpop.xlane.xlu0 %1767
        %v1769 = vsel %vm657, %v1731, 0.0
        %1770 = vadd.xlane.f32.xlu0 %v1769
        %v1771 = vpop.xlane.xlu0 %1770
        %v1772 = vsel %vm657, %v1732, 0.0
        %1773 = vadd.xlane.f32.xlu0 %v1772
        %v1774 = vpop.xlane.xlu0 %1773
        %v1775 = vsel %vm657, %v1733, 0.0
        %1776 = vadd.xlane.f32.xlu0 %v1775
        %v1777 = vpop.xlane.xlu0 %1776
        %v1778 = vsel %vm657, %v1734, 0.0
        %1779 = vadd.xlane.f32.xlu0 %v1778
        %v1780 = vpop.xlane.xlu0 %1779
        %v1781 = vsel %vm657, %v1735, 0.0
        %1782 = vadd.xlane.f32.xlu0 %v1781
        %v1783 = vpop.xlane.xlu0 %1782
        %v1784 = vmul.f32 %v1738, 0.03125
        %v1785 = vmul.f32 %v1741, 0.03125
        %v1786 = vmul.f32 %v1744, 0.03125
        %v1787 = vmul.f32 %v1747, 0.03125
        %v1788 = vmul.f32 %v1750, 0.03125
        %v1789 = vmul.f32 %v1753, 0.03125
        %v1790 = vmul.f32 %v1756, 0.03125
        %v1791 = vmul.f32 %v1759, 0.03125
        %v1792 = vmul.f32 %v1762, 0.03125
        %v1793 = vmul.f32 %v1765, 0.03125
        %v1794 = vmul.f32 %v1768, 0.03125
        %v1795 = vmul.f32 %v1771, 0.03125
        %v1796 = vmul.f32 %v1774, 0.03125
        %v1797 = vmul.f32 %v1777, 0.03125
        %v1798 = vmul.f32 %v1780, 0.03125
        %v1799 = vmul.f32 %v1783, 0.03125
        %v1800 = vsub.f32 %v1720, %v1784
        %v1801 = vsub.f32 %v1721, %v1785
        %v1802 = vsub.f32 %v1722, %v1786
        %v1803 = vsub.f32 %v1723, %v1787
        %v1804 = vsub.f32 %v1724, %v1788
        %v1805 = vsub.f32 %v1725, %v1789
        %v1806 = vsub.f32 %v1726, %v1790
        %v1807 = vsub.f32 %v1727, %v1791
        %v1808 = vsub.f32 %v1728, %v1792
        %v1809 = vsub.f32 %v1729, %v1793
        %v1810 = vsub.f32 %v1730, %v1794
        %v1811 = vsub.f32 %v1731, %v1795
        %v1812 = vsub.f32 %v1732, %v1796
        %v1813 = vsub.f32 %v1733, %v1797
        %v1814 = vsub.f32 %v1734, %v1798
        %v1815 = vsub.f32 %v1735, %v1799
        %v1816 = vmul.f32 %v1800, %v1800
        %v1817 = vmul.f32 %v1801, %v1801
        %v1818 = vmul.f32 %v1802, %v1802
        %v1819 = vmul.f32 %v1803, %v1803
        %v1820 = vmul.f32 %v1804, %v1804
        %v1821 = vmul.f32 %v1805, %v1805
        %v1822 = vmul.f32 %v1806, %v1806
        %v1823 = vmul.f32 %v1807, %v1807
        %v1824 = vmul.f32 %v1808, %v1808
        %v1825 = vmul.f32 %v1809, %v1809
        %v1826 = vmul.f32 %v1810, %v1810
        %v1827 = vmul.f32 %v1811, %v1811
        %v1828 = vmul.f32 %v1812, %v1812
        %v1829 = vmul.f32 %v1813, %v1813
        %v1830 = vmul.f32 %v1814, %v1814
        %v1831 = vmul.f32 %v1815, %v1815
        %v1832 = vsel %vm657, %v1816, 0.0
        %1833 = vadd.xlane.f32.xlu0 %v1832
        %v1834 = vpop.xlane.xlu0 %1833
        %v1835 = vsel %vm657, %v1817, 0.0
        %1836 = vadd.xlane.f32.xlu0 %v1835
        %v1837 = vpop.xlane.xlu0 %1836
        %v1838 = vsel %vm657, %v1818, 0.0
        %1839 = vadd.xlane.f32.xlu0 %v1838
        %v1840 = vpop.xlane.xlu0 %1839
        %v1841 = vsel %vm657, %v1819, 0.0
        %1842 = vadd.xlane.f32.xlu0 %v1841
        %v1843 = vpop.xlane.xlu0 %1842
        %v1844 = vsel %vm657, %v1820, 0.0
        %1845 = vadd.xlane.f32.xlu0 %v1844
        %v1846 = vpop.xlane.xlu0 %1845
        %v1847 = vsel %vm657, %v1821, 0.0
        %1848 = vadd.xlane.f32.xlu0 %v1847
        %v1849 = vpop.xlane.xlu0 %1848
        %v1850 = vsel %vm657, %v1822, 0.0
        %1851 = vadd.xlane.f32.xlu0 %v1850
        %v1852 = vpop.xlane.xlu0 %1851
        %v1853 = vsel %vm657, %v1823, 0.0
        %1854 = vadd.xlane.f32.xlu0 %v1853
        %v1855 = vpop.xlane.xlu0 %1854
        %v1856 = vsel %vm657, %v1824, 0.0
        %1857 = vadd.xlane.f32.xlu0 %v1856
        %v1858 = vpop.xlane.xlu0 %1857
        %v1859 = vsel %vm657, %v1825, 0.0
        %1860 = vadd.xlane.f32.xlu0 %v1859
        %v1861 = vpop.xlane.xlu0 %1860
        %v1862 = vsel %vm657, %v1826, 0.0
        %1863 = vadd.xlane.f32.xlu0 %v1862
        %v1864 = vpop.xlane.xlu0 %1863
        %v1865 = vsel %vm657, %v1827, 0.0
        %1866 = vadd.xlane.f32.xlu0 %v1865
        %v1867 = vpop.xlane.xlu0 %1866
        %v1868 = vsel %vm657, %v1828, 0.0
        %1869 = vadd.xlane.f32.xlu0 %v1868
        %v1870 = vpop.xlane.xlu0 %1869
        %v1871 = vsel %vm657, %v1829, 0.0
        %1872 = vadd.xlane.f32.xlu0 %v1871
        %v1873 = vpop.xlane.xlu0 %1872
        %v1874 = vsel %vm657, %v1830, 0.0
        %1875 = vadd.xlane.f32.xlu0 %v1874
        %v1876 = vpop.xlane.xlu0 %1875
        %v1877 = vsel %vm657, %v1831, 0.0
        %1878 = vadd.xlane.f32.xlu0 %v1877
        %v1879 = vpop.xlane.xlu0 %1878
        %v1880 = vmul.f32 %v1834, 0.032258064
        %v1881 = vmul.f32 %v1837, 0.032258064
        %v1882 = vmul.f32 %v1840, 0.032258064
        %v1883 = vmul.f32 %v1843, 0.032258064
        %v1884 = vmul.f32 %v1846, 0.032258064
        %v1885 = vmul.f32 %v1849, 0.032258064
        %v1886 = vmul.f32 %v1852, 0.032258064
        %v1887 = vmul.f32 %v1855, 0.032258064
        %v1888 = vmul.f32 %v1858, 0.032258064
        %v1889 = vmul.f32 %v1861, 0.032258064
        %v1890 = vmul.f32 %v1864, 0.032258064
        %v1891 = vmul.f32 %v1867, 0.032258064
        %v1892 = vmul.f32 %v1870, 0.032258064
        %v1893 = vmul.f32 %v1873, 0.032258064
        %v1894 = vmul.f32 %v1876, 0.032258064
        %v1895 = vmul.f32 %v1879, 0.032258064
        %v1896 = vrsqrt.pop %v1880
        %v1897 = vmul.f32 %v1896, %v1880
        %v1898 = vmul.f32 %v1897, %v1896
        %v1899 = vmul.f32 0.5, %v1898
        %v1900 = vsub.f32 1.5, %v1899
        %v1901 = vmul.f32 %v1896, %v1900
        %v1902 = vmul.f32 %v1880, %v1901
        %vm1903 = vcmp.eq.f32.partialorder %v1880, inf
        %v1904 = vsel %vm1903, %v1880, %v1902
        %vm1905 = vcmp.eq.f32.partialorder %v1880, 0.0
        %v1906 = vand.u32 %v1880, 2147483648
        %v1907 = vsel %vm1905, %v1906, %v1904
        %v1908 = vrsqrt.pop %v1881
        %v1909 = vmul.f32 %v1908, %v1881
        %v1910 = vmul.f32 %v1909, %v1908
        %v1911 = vmul.f32 0.5, %v1910
        %v1912 = vsub.f32 1.5, %v1911
        %v1913 = vmul.f32 %v1908, %v1912
        %v1914 = vmul.f32 %v1881, %v1913
        %vm1915 = vcmp.eq.f32.partialorder %v1881, inf
        %v1916 = vsel %vm1915, %v1881, %v1914
        %vm1917 = vcmp.eq.f32.partialorder %v1881, 0.0
        %v1918 = vand.u32 %v1881, 2147483648
        %v1919 = vsel %vm1917, %v1918, %v1916
        %v1920 = vrsqrt.pop %v1882
        %v1921 = vmul.f32 %v1920, %v1882
        %v1922 = vmul.f32 %v1921, %v1920
        %v1923 = vmul.f32 0.5, %v1922
        %v1924 = vsub.f32 1.5, %v1923
        %v1925 = vmul.f32 %v1920, %v1924
        %v1926 = vmul.f32 %v1882, %v1925
        %vm1927 = vcmp.eq.f32.partialorder %v1882, inf
        %v1928 = vsel %vm1927, %v1882, %v1926
        %vm1929 = vcmp.eq.f32.partialorder %v1882, 0.0
        %v1930 = vand.u32 %v1882, 2147483648
        %v1931 = vsel %vm1929, %v1930, %v1928
        %v1932 = vrsqrt.pop %v1883
        %v1933 = vmul.f32 %v1932, %v1883
        %v1934 = vmul.f32 %v1933, %v1932
        %v1935 = vmul.f32 0.5, %v1934
        %v1936 = vsub.f32 1.5, %v1935
        %v1937 = vmul.f32 %v1932, %v1936
        %v1938 = vmul.f32 %v1883, %v1937
        %vm1939 = vcmp.eq.f32.partialorder %v1883, inf
        %v1940 = vsel %vm1939, %v1883, %v1938
        %vm1941 = vcmp.eq.f32.partialorder %v1883, 0.0
        %v1942 = vand.u32 %v1883, 2147483648
        %v1943 = vsel %vm1941, %v1942, %v1940
        %v1944 = vrsqrt.pop %v1884
        %v1945 = vmul.f32 %v1944, %v1884
        %v1946 = vmul.f32 %v1945, %v1944
        %v1947 = vmul.f32 0.5, %v1946
        %v1948 = vsub.f32 1.5, %v1947
        %v1949 = vmul.f32 %v1944, %v1948
        %v1950 = vmul.f32 %v1884, %v1949
        %vm1951 = vcmp.eq.f32.partialorder %v1884, inf
        %v1952 = vsel %vm1951, %v1884, %v1950
        %vm1953 = vcmp.eq.f32.partialorder %v1884, 0.0
        %v1954 = vand.u32 %v1884, 2147483648
        %v1955 = vsel %vm1953, %v1954, %v1952
        %v1956 = vrsqrt.pop %v1885
        %v1957 = vmul.f32 %v1956, %v1885
        %v1958 = vmul.f32 %v1957, %v1956
        %v1959 = vmul.f32 0.5, %v1958
        %v1960 = vsub.f32 1.5, %v1959
        %v1961 = vmul.f32 %v1956, %v1960
        %v1962 = vmul.f32 %v1885, %v1961
        %vm1963 = vcmp.eq.f32.partialorder %v1885, inf
        %v1964 = vsel %vm1963, %v1885, %v1962
        %vm1965 = vcmp.eq.f32.partialorder %v1885, 0.0
        %v1966 = vand.u32 %v1885, 2147483648
        %v1967 = vsel %vm1965, %v1966, %v1964
        %v1968 = vrsqrt.pop %v1886
        %v1969 = vmul.f32 %v1968, %v1886
        %v1970 = vmul.f32 %v1969, %v1968
        %v1971 = vmul.f32 0.5, %v1970
        %v1972 = vsub.f32 1.5, %v1971
        %v1973 = vmul.f32 %v1968, %v1972
        %v1974 = vmul.f32 %v1886, %v1973
        %vm1975 = vcmp.eq.f32.partialorder %v1886, inf
        %v1976 = vsel %vm1975, %v1886, %v1974
        %vm1977 = vcmp.eq.f32.partialorder %v1886, 0.0
        %v1978 = vand.u32 %v1886, 2147483648
        %v1979 = vsel %vm1977, %v1978, %v1976
        %v1980 = vrsqrt.pop %v1887
        %v1981 = vmul.f32 %v1980, %v1887
        %v1982 = vmul.f32 %v1981, %v1980
        %v1983 = vmul.f32 0.5, %v1982
        %v1984 = vsub.f32 1.5, %v1983
        %v1985 = vmul.f32 %v1980, %v1984
        %v1986 = vmul.f32 %v1887, %v1985
        %vm1987 = vcmp.eq.f32.partialorder %v1887, inf
        %v1988 = vsel %vm1987, %v1887, %v1986
        %vm1989 = vcmp.eq.f32.partialorder %v1887, 0.0
        %v1990 = vand.u32 %v1887, 2147483648
        %v1991 = vsel %vm1989, %v1990, %v1988
        %v1992 = vrsqrt.pop %v1888
        %v1993 = vmul.f32 %v1992, %v1888
        %v1994 = vmul.f32 %v1993, %v1992
        %v1995 = vmul.f32 0.5, %v1994
        %v1996 = vsub.f32 1.5, %v1995
        %v1997 = vmul.f32 %v1992, %v1996
        %v1998 = vmul.f32 %v1888, %v1997
        %vm1999 = vcmp.eq.f32.partialorder %v1888, inf
        %v2000 = vsel %vm1999, %v1888, %v1998
        %vm2001 = vcmp.eq.f32.partialorder %v1888, 0.0
        %v2002 = vand.u32 %v1888, 2147483648
        %v2003 = vsel %vm2001, %v2002, %v2000
        %v2004 = vrsqrt.pop %v1889
        %v2005 = vmul.f32 %v2004, %v1889
        %v2006 = vmul.f32 %v2005, %v2004
        %v2007 = vmul.f32 0.5, %v2006
        %v2008 = vsub.f32 1.5, %v2007
        %v2009 = vmul.f32 %v2004, %v2008
        %v2010 = vmul.f32 %v1889, %v2009
        %vm2011 = vcmp.eq.f32.partialorder %v1889, inf
        %v2012 = vsel %vm2011, %v1889, %v2010
        %vm2013 = vcmp.eq.f32.partialorder %v1889, 0.0
        %v2014 = vand.u32 %v1889, 2147483648
        %v2015 = vsel %vm2013, %v2014, %v2012
        %v2016 = vrsqrt.pop %v1890
        %v2017 = vmul.f32 %v2016, %v1890
        %v2018 = vmul.f32 %v2017, %v2016
        %v2019 = vmul.f32 0.5, %v2018
        %v2020 = vsub.f32 1.5, %v2019
        %v2021 = vmul.f32 %v2016, %v2020
        %v2022 = vmul.f32 %v1890, %v2021
        %vm2023 = vcmp.eq.f32.partialorder %v1890, inf
        %v2024 = vsel %vm2023, %v1890, %v2022
        %vm2025 = vcmp.eq.f32.partialorder %v1890, 0.0
        %v2026 = vand.u32 %v1890, 2147483648
        %v2027 = vsel %vm2025, %v2026, %v2024
        %v2028 = vrsqrt.pop %v1891
        %v2029 = vmul.f32 %v2028, %v1891
        %v2030 = vmul.f32 %v2029, %v2028
        %v2031 = vmul.f32 0.5, %v2030
        %v2032 = vsub.f32 1.5, %v2031
        %v2033 = vmul.f32 %v2028, %v2032
        %v2034 = vmul.f32 %v1891, %v2033
        %vm2035 = vcmp.eq.f32.partialorder %v1891, inf
        %v2036 = vsel %vm2035, %v1891, %v2034
        %vm2037 = vcmp.eq.f32.partialorder %v1891, 0.0
        %v2038 = vand.u32 %v1891, 2147483648
        %v2039 = vsel %vm2037, %v2038, %v2036
        %v2040 = vrsqrt.pop %v1892
        %v2041 = vmul.f32 %v2040, %v1892
        %v2042 = vmul.f32 %v2041, %v2040
        %v2043 = vmul.f32 0.5, %v2042
        %v2044 = vsub.f32 1.5, %v2043
        %v2045 = vmul.f32 %v2040, %v2044
        %v2046 = vmul.f32 %v1892, %v2045
        %vm2047 = vcmp.eq.f32.partialorder %v1892, inf
        %v2048 = vsel %vm2047, %v1892, %v2046
        %vm2049 = vcmp.eq.f32.partialorder %v1892, 0.0
        %v2050 = vand.u32 %v1892, 2147483648
        %v2051 = vsel %vm2049, %v2050, %v2048
        %v2052 = vrsqrt.pop %v1893
        %v2053 = vmul.f32 %v2052, %v1893
        %v2054 = vmul.f32 %v2053, %v2052
        %v2055 = vmul.f32 0.5, %v2054
        %v2056 = vsub.f32 1.5, %v2055
        %v2057 = vmul.f32 %v2052, %v2056
        %v2058 = vmul.f32 %v1893, %v2057
        %vm2059 = vcmp.eq.f32.partialorder %v1893, inf
        %v2060 = vsel %vm2059, %v1893, %v2058
        %vm2061 = vcmp.eq.f32.partialorder %v1893, 0.0
        %v2062 = vand.u32 %v1893, 2147483648
        %v2063 = vsel %vm2061, %v2062, %v2060
        %v2064 = vrsqrt.pop %v1894
        %v2065 = vmul.f32 %v2064, %v1894
        %v2066 = vmul.f32 %v2065, %v2064
        %v2067 = vmul.f32 0.5, %v2066
        %v2068 = vsub.f32 1.5, %v2067
        %v2069 = vmul.f32 %v2064, %v2068
        %v2070 = vmul.f32 %v1894, %v2069
        %vm2071 = vcmp.eq.f32.partialorder %v1894, inf
        %v2072 = vsel %vm2071, %v1894, %v2070
        %vm2073 = vcmp.eq.f32.partialorder %v1894, 0.0
        %v2074 = vand.u32 %v1894, 2147483648
        %v2075 = vsel %vm2073, %v2074, %v2072
        %v2076 = vrsqrt.pop %v1895
        %v2077 = vmul.f32 %v2076, %v1895
        %v2078 = vmul.f32 %v2077, %v2076
        %v2079 = vmul.f32 0.5, %v2078
        %v2080 = vsub.f32 1.5, %v2079
        %v2081 = vmul.f32 %v2076, %v2080
        %v2082 = vmul.f32 %v1895, %v2081
        %vm2083 = vcmp.eq.f32.partialorder %v1895, inf
        %v2084 = vsel %vm2083, %v1895, %v2082
        %vm2085 = vcmp.eq.f32.partialorder %v1895, 0.0
        %v2086 = vand.u32 %v1895, 2147483648
        %v2087 = vsel %vm2085, %v2086, %v2084
        %v2088 = vadd.f32 %v1907, 1e-06
        %v2089 = vadd.f32 %v1919, 1e-06
        %v2090 = vadd.f32 %v1931, 1e-06
        %v2091 = vadd.f32 %v1943, 1e-06
        %v2092 = vadd.f32 %v1955, 1e-06
        %v2093 = vadd.f32 %v1967, 1e-06
        %v2094 = vadd.f32 %v1979, 1e-06
        %v2095 = vadd.f32 %v1991, 1e-06
        %v2096 = vadd.f32 %v2003, 1e-06
        %v2097 = vadd.f32 %v2015, 1e-06
        %v2098 = vadd.f32 %v2027, 1e-06
        %v2099 = vadd.f32 %v2039, 1e-06
        %v2100 = vadd.f32 %v2051, 1e-06
        %v2101 = vadd.f32 %v2063, 1e-06
        %v2102 = vadd.f32 %v2075, 1e-06
        %v2103 = vadd.f32 %v2087, 1e-06
        %v2104 = vrcp.pop %v2088
        %v2105 = vmul.f32 %v2088, %v2104
        %v2106 = vsub.f32 1.0, %v2105
        %v2107 = vmul.f32 %v2104, %v2106
        %v2108 = vadd.f32 %v2104, %v2107
        %vm2109 = vweird.f32 %v2088
        %vm2110 = vweird.f32 %v2104
        %vm2111 = vmor %vm2109, %vm2110
        %v2112 = vsel %vm2111, %v2104, %v2108
        %v2113 = vand.u32 2147483647, %v2088
        %vm2114 = vcmp.eq.f32.partialorder %v2113, 8.507059e+37
        %v2115 = vand.u32 %v2088, 2147483648
        %v2116 = vor.u32 1.1754944e-38, %v2115
        %v2117 = vsel %vm2114, %v2116, %v2112
        %v2118 = vrcp.pop %v2089
        %v2119 = vmul.f32 %v2089, %v2118
        %v2120 = vsub.f32 1.0, %v2119
        %v2121 = vmul.f32 %v2118, %v2120
        %v2122 = vadd.f32 %v2118, %v2121
        %vm2123 = vweird.f32 %v2089
        %vm2124 = vweird.f32 %v2118
        %vm2125 = vmor %vm2123, %vm2124
        %v2126 = vsel %vm2125, %v2118, %v2122
        %v2127 = vand.u32 2147483647, %v2089
        %vm2128 = vcmp.eq.f32.partialorder %v2127, 8.507059e+37
        %v2129 = vand.u32 %v2089, 2147483648
        %v2130 = vor.u32 1.1754944e-38, %v2129
        %v2131 = vsel %vm2128, %v2130, %v2126
        %v2132 = vrcp.pop %v2090
        %v2133 = vmul.f32 %v2090, %v2132
        %v2134 = vsub.f32 1.0, %v2133
        %v2135 = vmul.f32 %v2132, %v2134
        %v2136 = vadd.f32 %v2132, %v2135
        %vm2137 = vweird.f32 %v2090
        %vm2138 = vweird.f32 %v2132
        %vm2139 = vmor %vm2137, %vm2138
        %v2140 = vsel %vm2139, %v2132, %v2136
        %v2141 = vand.u32 2147483647, %v2090
        %vm2142 = vcmp.eq.f32.partialorder %v2141, 8.507059e+37
        %v2143 = vand.u32 %v2090, 2147483648
        %v2144 = vor.u32 1.1754944e-38, %v2143
        %v2145 = vsel %vm2142, %v2144, %v2140
        %v2146 = vrcp.pop %v2091
        %v2147 = vmul.f32 %v2091, %v2146
        %v2148 = vsub.f32 1.0, %v2147
        %v2149 = vmul.f32 %v2146, %v2148
        %v2150 = vadd.f32 %v2146, %v2149
        %vm2151 = vweird.f32 %v2091
        %vm2152 = vweird.f32 %v2146
        %vm2153 = vmor %vm2151, %vm2152
        %v2154 = vsel %vm2153, %v2146, %v2150
        %v2155 = vand.u32 2147483647, %v2091
        %vm2156 = vcmp.eq.f32.partialorder %v2155, 8.507059e+37
        %v2157 = vand.u32 %v2091, 2147483648
        %v2158 = vor.u32 1.1754944e-38, %v2157
        %v2159 = vsel %vm2156, %v2158, %v2154
        %v2160 = vrcp.pop %v2092
        %v2161 = vmul.f32 %v2092, %v2160
        %v2162 = vsub.f32 1.0, %v2161
        %v2163 = vmul.f32 %v2160, %v2162
        %v2164 = vadd.f32 %v2160, %v2163
        %vm2165 = vweird.f32 %v2092
        %vm2166 = vweird.f32 %v2160
        %vm2167 = vmor %vm2165, %vm2166
        %v2168 = vsel %vm2167, %v2160, %v2164
        %v2169 = vand.u32 2147483647, %v2092
        %vm2170 = vcmp.eq.f32.partialorder %v2169, 8.507059e+37
        %v2171 = vand.u32 %v2092, 2147483648
        %v2172 = vor.u32 1.1754944e-38, %v2171
        %v2173 = vsel %vm2170, %v2172, %v2168
        %v2174 = vrcp.pop %v2093
        %v2175 = vmul.f32 %v2093, %v2174
        %v2176 = vsub.f32 1.0, %v2175
        %v2177 = vmul.f32 %v2174, %v2176
        %v2178 = vadd.f32 %v2174, %v2177
        %vm2179 = vweird.f32 %v2093
        %vm2180 = vweird.f32 %v2174
        %vm2181 = vmor %vm2179, %vm2180
        %v2182 = vsel %vm2181, %v2174, %v2178
        %v2183 = vand.u32 2147483647, %v2093
        %vm2184 = vcmp.eq.f32.partialorder %v2183, 8.507059e+37
        %v2185 = vand.u32 %v2093, 2147483648
        %v2186 = vor.u32 1.1754944e-38, %v2185
        %v2187 = vsel %vm2184, %v2186, %v2182
        %v2188 = vrcp.pop %v2094
        %v2189 = vmul.f32 %v2094, %v2188
        %v2190 = vsub.f32 1.0, %v2189
        %v2191 = vmul.f32 %v2188, %v2190
        %v2192 = vadd.f32 %v2188, %v2191
        %vm2193 = vweird.f32 %v2094
        %vm2194 = vweird.f32 %v2188
        %vm2195 = vmor %vm2193, %vm2194
        %v2196 = vsel %vm2195, %v2188, %v2192
        %v2197 = vand.u32 2147483647, %v2094
        %vm2198 = vcmp.eq.f32.partialorder %v2197, 8.507059e+37
        %v2199 = vand.u32 %v2094, 2147483648
        %v2200 = vor.u32 1.1754944e-38, %v2199
        %v2201 = vsel %vm2198, %v2200, %v2196
        %v2202 = vrcp.pop %v2095
        %v2203 = vmul.f32 %v2095, %v2202
        %v2204 = vsub.f32 1.0, %v2203
        %v2205 = vmul.f32 %v2202, %v2204
        %v2206 = vadd.f32 %v2202, %v2205
        %vm2207 = vweird.f32 %v2095
        %vm2208 = vweird.f32 %v2202
        %vm2209 = vmor %vm2207, %vm2208
        %v2210 = vsel %vm2209, %v2202, %v2206
        %v2211 = vand.u32 2147483647, %v2095
        %vm2212 = vcmp.eq.f32.partialorder %v2211, 8.507059e+37
        %v2213 = vand.u32 %v2095, 2147483648
        %v2214 = vor.u32 1.1754944e-38, %v2213
        %v2215 = vsel %vm2212, %v2214, %v2210
        %v2216 = vrcp.pop %v2096
        %v2217 = vmul.f32 %v2096, %v2216
        %v2218 = vsub.f32 1.0, %v2217
        %v2219 = vmul.f32 %v2216, %v2218
        %v2220 = vadd.f32 %v2216, %v2219
        %vm2221 = vweird.f32 %v2096
        %vm2222 = vweird.f32 %v2216
        %vm2223 = vmor %vm2221, %vm2222
        %v2224 = vsel %vm2223, %v2216, %v2220
        %v2225 = vand.u32 2147483647, %v2096
        %vm2226 = vcmp.eq.f32.partialorder %v2225, 8.507059e+37
        %v2227 = vand.u32 %v2096, 2147483648
        %v2228 = vor.u32 1.1754944e-38, %v2227
        %v2229 = vsel %vm2226, %v2228, %v2224
        %v2230 = vrcp.pop %v2097
        %v2231 = vmul.f32 %v2097, %v2230
        %v2232 = vsub.f32 1.0, %v2231
        %v2233 = vmul.f32 %v2230, %v2232
        %v2234 = vadd.f32 %v2230, %v2233
        %vm2235 = vweird.f32 %v2097
        %vm2236 = vweird.f32 %v2230
        %vm2237 = vmor %vm2235, %vm2236
        %v2238 = vsel %vm2237, %v2230, %v2234
        %v2239 = vand.u32 2147483647, %v2097
        %vm2240 = vcmp.eq.f32.partialorder %v2239, 8.507059e+37
        %v2241 = vand.u32 %v2097, 2147483648
        %v2242 = vor.u32 1.1754944e-38, %v2241
        %v2243 = vsel %vm2240, %v2242, %v2238
        %v2244 = vrcp.pop %v2098
        %v2245 = vmul.f32 %v2098, %v2244
        %v2246 = vsub.f32 1.0, %v2245
        %v2247 = vmul.f32 %v2244, %v2246
        %v2248 = vadd.f32 %v2244, %v2247
        %vm2249 = vweird.f32 %v2098
        %vm2250 = vweird.f32 %v2244
        %vm2251 = vmor %vm2249, %vm2250
        %v2252 = vsel %vm2251, %v2244, %v2248
        %v2253 = vand.u32 2147483647, %v2098
        %vm2254 = vcmp.eq.f32.partialorder %v2253, 8.507059e+37
        %v2255 = vand.u32 %v2098, 2147483648
        %v2256 = vor.u32 1.1754944e-38, %v2255
        %v2257 = vsel %vm2254, %v2256, %v2252
        %v2258 = vrcp.pop %v2099
        %v2259 = vmul.f32 %v2099, %v2258
        %v2260 = vsub.f32 1.0, %v2259
        %v2261 = vmul.f32 %v2258, %v2260
        %v2262 = vadd.f32 %v2258, %v2261
        %vm2263 = vweird.f32 %v2099
        %vm2264 = vweird.f32 %v2258
        %vm2265 = vmor %vm2263, %vm2264
        %v2266 = vsel %vm2265, %v2258, %v2262
        %v2267 = vand.u32 2147483647, %v2099
        %vm2268 = vcmp.eq.f32.partialorder %v2267, 8.507059e+37
        %v2269 = vand.u32 %v2099, 2147483648
        %v2270 = vor.u32 1.1754944e-38, %v2269
        %v2271 = vsel %vm2268, %v2270, %v2266
        %v2272 = vrcp.pop %v2100
        %v2273 = vmul.f32 %v2100, %v2272
        %v2274 = vsub.f32 1.0, %v2273
        %v2275 = vmul.f32 %v2272, %v2274
        %v2276 = vadd.f32 %v2272, %v2275
        %vm2277 = vweird.f32 %v2100
        %vm2278 = vweird.f32 %v2272
        %vm2279 = vmor %vm2277, %vm2278
        %v2280 = vsel %vm2279, %v2272, %v2276
        %v2281 = vand.u32 2147483647, %v2100
        %vm2282 = vcmp.eq.f32.partialorder %v2281, 8.507059e+37
        %v2283 = vand.u32 %v2100, 2147483648
        %v2284 = vor.u32 1.1754944e-38, %v2283
        %v2285 = vsel %vm2282, %v2284, %v2280
        %v2286 = vrcp.pop %v2101
        %v2287 = vmul.f32 %v2101, %v2286
        %v2288 = vsub.f32 1.0, %v2287
        %v2289 = vmul.f32 %v2286, %v2288
        %v2290 = vadd.f32 %v2286, %v2289
        %vm2291 = vweird.f32 %v2101
        %vm2292 = vweird.f32 %v2286
        %vm2293 = vmor %vm2291, %vm2292
        %v2294 = vsel %vm2293, %v2286, %v2290
        %v2295 = vand.u32 2147483647, %v2101
        %vm2296 = vcmp.eq.f32.partialorder %v2295, 8.507059e+37
        %v2297 = vand.u32 %v2101, 2147483648
        %v2298 = vor.u32 1.1754944e-38, %v2297
        %v2299 = vsel %vm2296, %v2298, %v2294
        %v2300 = vrcp.pop %v2102
        %v2301 = vmul.f32 %v2102, %v2300
        %v2302 = vsub.f32 1.0, %v2301
        %v2303 = vmul.f32 %v2300, %v2302
        %v2304 = vadd.f32 %v2300, %v2303
        %vm2305 = vweird.f32 %v2102
        %vm2306 = vweird.f32 %v2300
        %vm2307 = vmor %vm2305, %vm2306
        %v2308 = vsel %vm2307, %v2300, %v2304
        %v2309 = vand.u32 2147483647, %v2102
        %vm2310 = vcmp.eq.f32.partialorder %v2309, 8.507059e+37
        %v2311 = vand.u32 %v2102, 2147483648
        %v2312 = vor.u32 1.1754944e-38, %v2311
        %v2313 = vsel %vm2310, %v2312, %v2308
        %v2314 = vrcp.pop %v2103
        %v2315 = vmul.f32 %v2103, %v2314
        %v2316 = vsub.f32 1.0, %v2315
        %v2317 = vmul.f32 %v2314, %v2316
        %v2318 = vadd.f32 %v2314, %v2317
        %vm2319 = vweird.f32 %v2103
        %vm2320 = vweird.f32 %v2314
        %vm2321 = vmor %vm2319, %vm2320
        %v2322 = vsel %vm2321, %v2314, %v2318
        %v2323 = vand.u32 2147483647, %v2103
        %vm2324 = vcmp.eq.f32.partialorder %v2323, 8.507059e+37
        %v2325 = vand.u32 %v2103, 2147483648
        %v2326 = vor.u32 1.1754944e-38, %v2325
        %v2327 = vsel %vm2324, %v2326, %v2322
        %v2328 = vld [vmem:[%s11] sm:$0x1]
        %v2329 = vmul.f32 %v1800, %v2117
        %v2330 = vmul.f32 %v1801, %v2131
        %v2331 = vmul.f32 %v1802, %v2145
        %v2332 = vmul.f32 %v1803, %v2159
        %v2333 = vmul.f32 %v1804, %v2173
        %v2334 = vmul.f32 %v1805, %v2187
        %v2335 = vmul.f32 %v1806, %v2201
        %v2336 = vmul.f32 %v1807, %v2215
        %v2337 = vmul.f32 %v1808, %v2229
        %v2338 = vmul.f32 %v1809, %v2243
        %v2339 = vmul.f32 %v1810, %v2257
        %v2340 = vmul.f32 %v1811, %v2271
        %v2341 = vmul.f32 %v1812, %v2285
        %v2342 = vmul.f32 %v1813, %v2299
        %v2343 = vmul.f32 %v1814, %v2313
        %v2344 = vmul.f32 %v1815, %v2327
        %v2346 = vperm.slane %v2328, 0
        %v2348 = vmul.f32 %v2346, %v2329
        %v2349 = vmul.f32 %v2346, %v2330
        %v2350 = vmul.f32 %v2346, %v2331
        %v2351 = vmul.f32 %v2346, %v2332
        %v2352 = vmul.f32 %v2346, %v2333
        %v2353 = vmul.f32 %v2346, %v2334
        %v2354 = vmul.f32 %v2346, %v2335
        %v2355 = vmul.f32 %v2346, %v2336
        %v2356 = vmul.f32 %v2346, %v2337
        %v2357 = vmul.f32 %v2346, %v2338
        %v2358 = vmul.f32 %v2346, %v2339
        %v2359 = vmul.f32 %v2346, %v2340
        %v2360 = vmul.f32 %v2346, %v2341
        %v2361 = vmul.f32 %v2346, %v2342
        %v2362 = vmul.f32 %v2346, %v2343
        %v2363 = vmul.f32 %v2346, %v2344
        %v2364 = vld [vmem:[%s12] sm:$0x1]
        %v2366 = vperm.slane %v2364, 0
        %v2368 = vadd.f32 %v2348, %v2366
        %v2369 = vadd.f32 %v2349, %v2366
        %v2370 = vadd.f32 %v2350, %v2366
        %v2371 = vadd.f32 %v2351, %v2366
        %v2372 = vadd.f32 %v2352, %v2366
        %v2373 = vadd.f32 %v2353, %v2366
        %v2374 = vadd.f32 %v2354, %v2366
        %v2375 = vadd.f32 %v2355, %v2366
        %v2376 = vadd.f32 %v2356, %v2366
        %v2377 = vadd.f32 %v2357, %v2366
        %v2378 = vadd.f32 %v2358, %v2366
        %v2379 = vadd.f32 %v2359, %v2366
        %v2380 = vadd.f32 %v2360, %v2366
        %v2381 = vadd.f32 %v2361, %v2366
        %v2382 = vadd.f32 %v2362, %v2366
        %v2383 = vadd.f32 %v2363, %v2366
        %v2384 = vsel %vm1132, 0.0, %v2368
        %v2385 = vsel %vm1133, 0.0, %v2369
        %v2386 = vsel %vm1134, 0.0, %v2370
        %v2387 = vsel %vm1135, 0.0, %v2371
        %v2388 = vsel %vm1136, 0.0, %v2372
        %v2389 = vsel %vm1137, 0.0, %v2373
        %v2390 = vsel %vm1138, 0.0, %v2374
        %v2391 = vsel %vm1139, 0.0, %v2375
        %v2392 = vsel %vm1140, 0.0, %v2376
        %v2393 = vsel %vm1141, 0.0, %v2377
        %v2394 = vsel %vm1142, 0.0, %v2378
        %v2395 = vsel %vm1143, 0.0, %v2379
        %v2396 = vsel %vm1144, 0.0, %v2380
        %v2397 = vsel %vm1145, 0.0, %v2381
        %v2398 = vsel %vm1146, 0.0, %v2382
        %v2399 = vsel %vm1147, 0.0, %v2383
        %2400 = vst.msk [vmem:[%s594] sm:$0xff] %vm657, %v2384
        %2401 = vst.msk [vmem:[%s594 + $0x8] sm:$0xff] %vm657, %v2385
        %2402 = vst.msk [vmem:[%s594 + $0x10] sm:$0xff] %vm657, %v2386
        %2403 = vst.msk [vmem:[%s594 + $0x18] sm:$0xff] %vm657, %v2387
        %2404 = vst.msk [vmem:[%s594 + $0x20] sm:$0xff] %vm657, %v2388
        %2405 = vst.msk [vmem:[%s594 + $0x28] sm:$0xff] %vm657, %v2389
        %2406 = vst.msk [vmem:[%s594 + $0x30] sm:$0xff] %vm657, %v2390
        %2407 = vst.msk [vmem:[%s594 + $0x38] sm:$0xff] %vm657, %v2391
        %2408 = vst.msk [vmem:[%s594 + $0x40] sm:$0xff] %vm657, %v2392
        %2409 = vst.msk [vmem:[%s594 + $0x48] sm:$0xff] %vm657, %v2393
        %2410 = vst.msk [vmem:[%s594 + $0x50] sm:$0xff] %vm657, %v2394
        %2411 = vst.msk [vmem:[%s594 + $0x58] sm:$0xff] %vm657, %v2395
        %2412 = vst.msk [vmem:[%s594 + $0x60] sm:$0xff] %vm657, %v2396
        %2413 = vst.msk [vmem:[%s594 + $0x68] sm:$0xff] %vm657, %v2397
        %2414 = vst.msk [vmem:[%s594 + $0x70] sm:$0xff] %vm657, %v2398
        %2415 = vst.msk [vmem:[%s594 + $0x78] sm:$0xff] %vm657, %v2399
        %s2416 = sand.u32 %s372, 1
        %s2417 = scalar_lea.sflag [#allocation4], %s2416
        %s2418 = sand.u32 %s372, 1
        %s2419 = smul.addr %s2418, 128
        %s2420 = scalar_lea.vmem [#allocation10], %s2419
        // Predicated region
        $region97: #{tpu_custom_call.1} parent=79 // pred_check
          %p2421 = pneg %p382
        $region98: #{tpu_custom_call.1} parent=79 // pred_check_branch
          %2423 = sbr.rel (%p2421) target = $region100
        $region99: #{tpu_custom_call.1} parent=79 // pred_region
          %s2424 = smul.u32 16, %s34
          %2426 = vsyncadd %s2417, 0
          %s2427 = smul.addr %s2424, 8
          %s2428 = scalar_lea.hbm %s15, %s2427
          %s2429 = sshll.u32 %s2420, 4
          %s2430 = int_to_ptr.vmem [resolvable:$true] %s2429
          %s2431 = sshll.u32 %s2428, 4
          %s2432 = int_to_ptr.hbm [resolvable:$true] %s2431
          %2437 = dma.vmem_to_hbm [thread:$0]  %s2430, 2048, %s2432, %s2417, 128, 128, 8
        $region100: #{tpu_custom_call.1} parent=79 // pred_fallthru
          _
      $region80: #{tpu_custom_call.1} parent=5 // pred_fallthru
        _
      %p2438 = scmp.le.s32.totalorder 2, %s29
      // Predicated region
      $region101: #{tpu_custom_call.1} parent=5 // pred_check
        %p2439 = pneg %p2438
      $region102: #{tpu_custom_call.1} parent=5 // pred_check_branch
        %2441 = sbr.rel (%p2439) target = $region104
      $region103: #{tpu_custom_call.1} parent=5 // pred_region
        %s2442 = ssub.s32 %s29, 2
        // Predicated region
        $region105: #{tpu_custom_call.1} parent=103 // pred_check
          %p2443 = pneg %p388
        $region106: #{tpu_custom_call.1} parent=103 // pred_check_branch
          %2445 = sbr.rel (%p2443) target = $region108
        $region107: #{tpu_custom_call.1} parent=103 // pred_region
          %s2446 = sand.u32 %s373, 1
          %s2447 = scalar_lea.sflag [#allocation4], %s2446
          %s2448 = sand.u32 %s373, 1
          %s2449 = smul.addr %s2448, 128
          %s2450 = scalar_lea.vmem [#allocation10], %s2449
          %2452 = dma.done %s2447, 2048
        $region108: #{tpu_custom_call.1} parent=103 // pred_fallthru
          _
      $region104: #{tpu_custom_call.1} parent=5 // pred_fallthru
        _
    $region6: #{tpu_custom_call.1} parent=1 // loop_footer
      %s33 = sadd.s32 1, %s29
    $region7: #{tpu_custom_call.1} parent=1 // loop_footer_branch
      %28 = sbr.rel target = $region3
    $region8: #{tpu_custom_call.1} parent=1 // loop_exit
      _
    %2453 = vsyncpa [#allocation3], 1
    %s2454 = scalar_lea.sflag [#allocation3], 1
    %2455 = vsyncpa %s2454, 1
    %2456 = vsyncpa [#allocation6], 1
    %2457 = vsyncpa [#allocation9], 1
    %2458 = vsyncpa [#allocation4], 1
    %s2459 = scalar_lea.sflag [#allocation4], 1
    %2460 = vsyncpa %s2459, 1

// kernel: tpu_custom_call.1
$region0: #{tpu_custom_call.1}
  #allocation0 [shape = 'u32[]', space=smem, size = 0x4, offset = 0x4, fixed_abs, tag = 'smem constant byte address 0x4 - core index']
  #allocation1 [shape = 'u32[72,128]{1,0:T(1,128)}', space=vmem, size = 0x9000, scoped, tag = 'internal scratch']
  %s0 = inlined_call_operand.vmem [shape: s32[32,1], index: 0, kind: input, shape index: {}]
  %s1 = inlined_call_operand.vmem [shape: f32[32,32], index: 1, kind: input, shape index: {}]
  %s2 = inlined_call_operand.hbm [shape: f32[32,8,32], index: 2, kind: input, shape index: {}]
  %s3 = inlined_call_operand.vmem [shape: bf16[32,32], index: 3, kind: input, shape index: {}]
  %s4 = inlined_call_operand.hbm [shape: f32[1,32], index: 4, kind: input, shape index: {}]
  %s5 = inlined_call_operand.vmem [shape: bf16[32,32], index: 5, kind: input, shape index: {}]
  %s6 = inlined_call_operand.vmem [shape: f32[1,32], index: 6, kind: input, shape index: {}]
  %s7 = inlined_call_operand.hbm [shape: bf16[32,32], index: 7, kind: input, shape index: {}]
  %s8 = inlined_call_operand.vmem [shape: f32[1,32], index: 8, kind: input, shape index: {}]
  %s9 = inlined_call_operand.hbm [shape: bf16[32,32], index: 9, kind: input, shape index: {}]
  %s10 = inlined_call_operand.vmem [shape: f32[1,32], index: 10, kind: input, shape index: {}]
  %s11 = inlined_call_operand.vmem [shape: f32[1,32], index: 11, kind: input, shape index: {}]
  %s12 = inlined_call_operand.vmem [shape: f32[1,32], index: 12, kind: input, shape index: {}]
  %s13 = inlined_call_operand.vmem [shape: f32[32,4], index: 13, kind: input, shape index: {}]
  %s14 = inlined_call_operand.vmem [shape: f32[4,32], index: 14, kind: input, shape index: {}]
  %s15 = inlined_call_operand.hbm [shape: f32[32,8,32], index: 15, kind: output, shape index: {}]
  %s16 = sld [smem:[#allocation0]]
  $region109: #{tpu_custom_call.1} parent=0
    _
  %s18 = ssub.s32 1, %s16
  %s19 = scalar_select 0, %s18, %s16
  $region1: #{tpu_custom_call.1} parent=0
    #allocation2 [shape = 'u8[131072]{0}', space=vmem, size = 0x20000, scoped, tag = 'input window, operand 2']
    #allocation3 [shape = 's32[2]{0}', space=sflag, size = 0x8, scoped, tag = 'scoped memory for tpu_custom_call.1']
    #allocation4 [shape = 's32[2]{0}', space=sflag, size = 0x8, scoped, tag = 'scoped memory for tpu_custom_call.1']
    #allocation5 [shape = 'u8[512]{0}', space=vmem, size = 0x400, scoped, tag = 'input window, operand 4, single buffered']
    #allocation6 [shape = 's32[1]{0}', space=sflag, size = 0x4, scoped, tag = 'scoped memory for tpu_custom_call.1']
    #allocation7 [shape = 'u8[8192]{0}', space=vmem, size = 0x2000, scoped, tag = 'input window, operand 7, single buffered']
    #allocation8 [shape = 'u8[8192]{0}', space=vmem, size = 0x2000, scoped, tag = 'input window, operand 9, single buffered']
    #allocation9 [shape = 's32[1]{0}', space=sflag, size = 0x4, scoped, tag = 'scoped memory for tpu_custom_call.1']
    #allocation10 [shape = 'u8[131072]{0}', space=vmem, size = 0x20000, scoped, tag = 'output window, operand 0']
    %20 = vsyncpa [#allocation3], 0
    %s21 = scalar_lea.sflag [#allocation3], 1
    %22 = vsyncpa %s21, 0
    %23 = vsyncpa [#allocation6], 0
    %24 = vsyncpa [#allocation9], 0
    %25 = vsyncpa [#allocation4], 0
    %s26 = scalar_lea.sflag [#allocation4], 1
    %27 = vsyncpa %s26, 0
    loop: start=0, step=1, limit=4
    $region2: #{tpu_custom_call.1} parent=1 // loop_pre_header
      _
    $region3: #{tpu_custom_call.1} parent=1 // loop_header
      %s29 = sphi 0, %s33
      %p30 = scmp.ge.s32.totalorder %s29, 4
      %s39 = sphi 0, %s41
      %s42 = sphi 0, %s39
      %s43 = sphi 0, %s42
      %s59 = sphi 0, %s43
      %s65 = sphi 0, %s67
      %s68 = sphi 0, %s65
      %s69 = sphi 0, %s68
      %s85 = sphi 0, %s69
      %s91 = sphi 0, %s93
      %s94 = sphi 0, %s91
      %s95 = sphi 0, %s94
      %s111 = sphi 0, %s95
      %s115 = sphi 0, %s115
      %s117 = sphi 0, %s115
      %s118 = sphi 0, %s117
      %s132 = sphi 0, %s118
      %s136 = sphi 0, %s136
      %s138 = sphi 0, %s136
      %s139 = sphi 0, %s138
      %s153 = sphi 0, %s139
      %s157 = sphi 0, %s157
      %s159 = sphi 0, %s157
      %s160 = sphi 0, %s159
      %s174 = sphi 0, %s160
      %s178 = sphi 0, %s178
      %s180 = sphi 0, %s178
      %s181 = sphi 0, %s180
      %s195 = sphi 0, %s181
      %s199 = sphi 0, %s199
      %s201 = sphi 0, %s199
      %s202 = sphi 0, %s201
      %s216 = sphi 0, %s202
      %s220 = sphi 0, %s220
      %s222 = sphi 0, %s220
      %s223 = sphi 0, %s222
      %s237 = sphi 0, %s223
      %s241 = sphi 0, %s241
      %s243 = sphi 0, %s241
      %s244 = sphi 0, %s243
      %s258 = sphi 0, %s244
      %s262 = sphi 0, %s262
      %s264 = sphi 0, %s262
      %s265 = sphi 0, %s264
      %s279 = sphi 0, %s265
      %s283 = sphi 0, %s283
      %s285 = sphi 0, %s283
      %s286 = sphi 0, %s285
      %s300 = sphi 0, %s286
      %s304 = sphi 0, %s304
      %s306 = sphi 0, %s304
      %s307 = sphi 0, %s306
      %s321 = sphi 0, %s307
      %s325 = sphi 0, %s325
      %s327 = sphi 0, %s325
      %s328 = sphi 0, %s327
      %s342 = sphi 0, %s328
      %s346 = sphi 0, %s346
      %s348 = sphi 0, %s346
      %s349 = sphi 0, %s348
      %s363 = sphi 0, %s349
      %s369 = sphi 0, %s371
      %s372 = sphi 0, %s369
      %s373 = sphi 0, %s372
      %s389 = sphi 0, %s373
    $region4: #{tpu_custom_call.1} parent=1 // loop_header_branch
      %32 = sbr.rel (%p30) target = $region8
    $region5: #{tpu_custom_call.1} parent=1 // loop_body
      %s34 = ssub.s32 %s29, 1
      %s35 = ssub.s32 %s29, 2
      %s36 = sadd.s32 %s29, 1
      %s37 = ssub.s32 %s29, %s36
      %p38 = scmp.eq.s32.totalorder %s37, 0
      %s40 = sadd.s32 %s39, 1
      %s41 = scalar_select %p38, %s39, %s40
      %p44 = pneg %p38
      %p45 = scmp.eq.s32.totalorder %s29, 1
      %p46 = por %p44, %p45
      %p47 = scmp.ne.s32.totalorder %s39, %s42
      %p48 = scmp.eq.s32.totalorder %s29, 0
      %p49 = por %p47, %p48
      %p50 = scmp.ne.s32.totalorder %s39, %s42
      %p51 = scmp.eq.s32.totalorder %s34, 1
      %p52 = por %p50, %p51
      %p53 = scmp.ne.s32.totalorder %s42, %s43
      %p54 = scmp.eq.s32.totalorder %s34, 0
      %p55 = por %p53, %p54
      %p56 = scmp.ne.s32.totalorder %s42, %s43
      %p57 = scmp.eq.s32.totalorder %s35, 1
      %p58 = por %p56, %p57
      %p60 = scmp.ne.s32.totalorder %s43, %s59
      %p61 = scmp.eq.s32.totalorder %s35, 0
      %p62 = por %p60, %p61
      %s63 = ssub.s32 %s29, %s36
      %p64 = scmp.eq.s32.totalorder %s63, 0
      %s66 = sadd.s32 %s65, 1
      %s67 = scalar_select %p64, %s65, %s66
      %p70 = pneg %p64
      %p71 = scmp.eq.s32.totalorder %s29, 1
      %p72 = por %p70, %p71
      %p73 = scmp.ne.s32.totalorder %s65, %s68
      %p74 = scmp.eq.s32.totalorder %s29, 0
      %p75 = por %p73, %p74
      %p76 = scmp.ne.s32.totalorder %s65, %s68
      %p77 = scmp.eq.s32.totalorder %s34, 1
      %p78 = por %p76, %p77
      %p79 = scmp.ne.s32.totalorder %s68, %s69
      %p80 = scmp.eq.s32.totalorder %s34, 0
      %p81 = por %p79, %p80
      %p82 = scmp.ne.s32.totalorder %s68, %s69
      %p83 = scmp.eq.s32.totalorder %s35, 1
      %p84 = por %p82, %p83
      %p86 = scmp.ne.s32.totalorder %s69, %s85
      %p87 = scmp.eq.s32.totalorder %s35, 0
      %p88 = por %p86, %p87
      %s89 = ssub.s32 %s29, %s36
      %p90 = scmp.eq.s32.totalorder %s89, 0
      %s92 = sadd.s32 %s91, 1
      %s93 = scalar_select %p90, %s91, %s92
      %p96 = pneg %p90
      %p97 = scmp.eq.s32.totalorder %s29, 1
      %p98 = por %p96, %p97
      %p99 = scmp.ne.s32.totalorder %s91, %s94
      %p100 = scmp.eq.s32.totalorder %s29, 0
      %p101 = por %p99, %p100
      %p102 = scmp.ne.s32.totalorder %s91, %s94
      %p103 = scmp.eq.s32.totalorder %s34, 1
      %p104 = por %p102, %p103
      %p105 = scmp.ne.s32.totalorder %s94, %s95
      %p106 = scmp.eq.s32.totalorder %s34, 0
      %p107 = por %p105, %p106
      %p108 = scmp.ne.s32.totalorder %s94, %s95
      %p109 = scmp.eq.s32.totalorder %s35, 1
      %p110 = por %p108, %p109
      %p112 = scmp.ne.s32.totalorder %s95, %s111
      %p113 = scmp.eq.s32.totalorder %s35, 0
      %p114 = por %p112, %p113
      %s116 = sadd.s32 %s115, 1
      %p119 = scmp.eq.s32.totalorder %s29, 1
      %p120 = scmp.ne.s32.totalorder %s115, %s117
      %p121 = scmp.eq.s32.totalorder %s29, 0
      %p122 = por %p120, %p121
      %p123 = scmp.ne.s32.totalorder %s115, %s117
      %p124 = scmp.eq.s32.totalorder %s34, 1
      %p125 = por %p123, %p124
      %p126 = scmp.ne.s32.totalorder %s117, %s118
      %p127 = scmp.eq.s32.totalorder %s34, 0
      %p128 = por %p126, %p127
      %p129 = scmp.ne.s32.totalorder %s117, %s118
      %p130 = scmp.eq.s32.totalorder %s35, 1
      %p131 = por %p129, %p130
      %p133 = scmp.ne.s32.totalorder %s118, %s132
      %p134 = scmp.eq.s32.totalorder %s35, 0
      %p135 = por %p133, %p134
      %s137 = sadd.s32 %s136, 1
      %p140 = scmp.eq.s32.totalorder %s29, 1
      %p141 = scmp.ne.s32.totalorder %s136, %s138
      %p142 = scmp.eq.s32.totalorder %s29, 0
      %p143 = por %p141, %p142
      %p144 = scmp.ne.s32.totalorder %s136, %s138
      %p145 = scmp.eq.s32.totalorder %s34, 1
      %p146 = por %p144, %p145
      %p147 = scmp.ne.s32.totalorder %s138, %s139
      %p148 = scmp.eq.s32.totalorder %s34, 0
      %p149 = por %p147, %p148
      %p150 = scmp.ne.s32.totalorder %s138, %s139
      %p151 = scmp.eq.s32.totalorder %s35, 1
      %p152 = por %p150, %p151
      %p154 = scmp.ne.s32.totalorder %s139, %s153
      %p155 = scmp.eq.s32.totalorder %s35, 0
      %p156 = por %p154, %p155
      %s158 = sadd.s32 %s157, 1
      %p161 = scmp.eq.s32.totalorder %s29, 1
      %p162 = scmp.ne.s32.totalorder %s157, %s159
      %p163 = scmp.eq.s32.totalorder %s29, 0
      %p164 = por %p162, %p163
      %p165 = scmp.ne.s32.totalorder %s157, %s159
      %p166 = scmp.eq.s32.totalorder %s34, 1
      %p167 = por %p165, %p166
      %p168 = scmp.ne.s32.totalorder %s159, %s160
      %p169 = scmp.eq.s32.totalorder %s34, 0
      %p170 = por %p168, %p169
      %p171 = scmp.ne.s32.totalorder %s159, %s160
      %p172 = scmp.eq.s32.totalorder %s35, 1
      %p173 = por %p171, %p172
      %p175 = scmp.ne.s32.totalorder %s160, %s174
      %p176 = scmp.eq.s32.totalorder %s35, 0
      %p177 = por %p175, %p176
      %s179 = sadd.s32 %s178, 1
      %p182 = scmp.eq.s32.totalorder %s29, 1
      %p183 = scmp.ne.s32.totalorder %s178, %s180
      %p184 = scmp.eq.s32.totalorder %s29, 0
      %p185 = por %p183, %p184
      %p186 = scmp.ne.s32.totalorder %s178, %s180
      %p187 = scmp.eq.s32.totalorder %s34, 1
      %p188 = por %p186, %p187
      %p189 = scmp.ne.s32.totalorder %s180, %s181
      %p190 = scmp.eq.s32.totalorder %s34, 0
      %p191 = por %p189, %p190
      %p192 = scmp.ne.s32.totalorder %s180, %s181
      %p193 = scmp.eq.s32.totalorder %s35, 1
      %p194 = por %p192, %p193
      %p196 = scmp.ne.s32.totalorder %s181, %s195
      %p197 = scmp.eq.s32.totalorder %s35, 0
      %p198 = por %p196, %p197
      %s200 = sadd.s32 %s199, 1
      %p203 = scmp.eq.s32.totalorder %s29, 1
      %p204 = scmp.ne.s32.totalorder %s199, %s201
      %p205 = scmp.eq.s32.totalorder %s29, 0
      %p206 = por %p204, %p205
      %p207 = scmp.ne.s32.totalorder %s199, %s201
      %p208 = scmp.eq.s32.totalorder %s34, 1
      %p209 = por %p207, %p208
      %p210 = scmp.ne.s32.totalorder %s201, %s202
      %p211 = scmp.eq.s32.totalorder %s34, 0
      %p212 = por %p210, %p211
      %p213 = scmp.ne.s32.totalorder %s201, %s202
      %p214 = scmp.eq.s32.totalorder %s35, 1
      %p215 = por %p213, %p214
      %p217 = scmp.ne.s32.totalorder %s202, %s216
      %p218 = scmp.eq.s32.totalorder %s35, 0
      %p219 = por %p217, %p218
      %s221 = sadd.s32 %s220, 1
      %p224 = scmp.eq.s32.totalorder %s29, 1
      %p225 = scmp.ne.s32.totalorder %s220, %s222
      %p226 = scmp.eq.s32.totalorder %s29, 0
      %p227 = por %p225, %p226
      %p228 = scmp.ne.s32.totalorder %s220, %s222
      %p229 = scmp.eq.s32.totalorder %s34, 1
      %p230 = por %p228, %p229
      %p231 = scmp.ne.s32.totalorder %s222, %s223
      %p232 = scmp.eq.s32.totalorder %s34, 0
      %p233 = por %p231, %p232
      %p234 = scmp.ne.s32.totalorder %s222, %s223
      %p235 = scmp.eq.s32.totalorder %s35, 1
      %p236 = por %p234, %p235
      %p238 = scmp.ne.s32.totalorder %s223, %s237
      %p239 = scmp.eq.s32.totalorder %s35, 0
      %p240 = por %p238, %p239
      %s242 = sadd.s32 %s241, 1
      %p245 = scmp.eq.s32.totalorder %s29, 1
      %p246 = scmp.ne.s32.totalorder %s241, %s243
      %p247 = scmp.eq.s32.totalorder %s29, 0
      %p248 = por %p246, %p247
      %p249 = scmp.ne.s32.totalorder %s241, %s243
      %p250 = scmp.eq.s32.totalorder %s34, 1
      %p251 = por %p249, %p250
      %p252 = scmp.ne.s32.totalorder %s243, %s244
      %p253 = scmp.eq.s32.totalorder %s34, 0
      %p254 = por %p252, %p253
      %p255 = scmp.ne.s32.totalorder %s243, %s244
      %p256 = scmp.eq.s32.totalorder %s35, 1
      %p257 = por %p255, %p256
      %p259 = scmp.ne.s32.totalorder %s244, %s258
      %p260 = scmp.eq.s32.totalorder %s35, 0
      %p261 = por %p259, %p260
      %s263 = sadd.s32 %s262, 1
      %p266 = scmp.eq.s32.totalorder %s29, 1
      %p267 = scmp.ne.s32.totalorder %s262, %s264
      %p268 = scmp.eq.s32.totalorder %s29, 0
      %p269 = por %p267, %p268
      %p270 = scmp.ne.s32.totalorder %s262, %s264
      %p271 = scmp.eq.s32.totalorder %s34, 1
      %p272 = por %p270, %p271
      %p273 = scmp.ne.s32.totalorder %s264, %s265
      %p274 = scmp.eq.s32.totalorder %s34, 0
      %p275 = por %p273, %p274
      %p276 = scmp.ne.s32.totalorder %s264, %s265
      %p277 = scmp.eq.s32.totalorder %s35, 1
      %p278 = por %p276, %p277
      %p280 = scmp.ne.s32.totalorder %s265, %s279
      %p281 = scmp.eq.s32.totalorder %s35, 0
      %p282 = por %p280, %p281
      %s284 = sadd.s32 %s283, 1
      %p287 = scmp.eq.s32.totalorder %s29, 1
      %p288 = scmp.ne.s32.totalorder %s283, %s285
      %p289 = scmp.eq.s32.totalorder %s29, 0
      %p290 = por %p288, %p289
      %p291 = scmp.ne.s32.totalorder %s283, %s285
      %p292 = scmp.eq.s32.totalorder %s34, 1
      %p293 = por %p291, %p292
      %p294 = scmp.ne.s32.totalorder %s285, %s286
      %p295 = scmp.eq.s32.totalorder %s34, 0
      %p296 = por %p294, %p295
      %p297 = scmp.ne.s32.totalorder %s285, %s286
      %p298 = scmp.eq.s32.totalorder %s35, 1
      %p299 = por %p297, %p298
      %p301 = scmp.ne.s32.totalorder %s286, %s300
      %p302 = scmp.eq.s32.totalorder %s35, 0
      %p303 = por %p301, %p302
      %s305 = sadd.s32 %s304, 1
      %p308 = scmp.eq.s32.totalorder %s29, 1
      %p309 = scmp.ne.s32.totalorder %s304, %s306
      %p310 = scmp.eq.s32.totalorder %s29, 0
      %p311 = por %p309, %p310
      %p312 = scmp.ne.s32.totalorder %s304, %s306
      %p313 = scmp.eq.s32.totalorder %s34, 1
      %p314 = por %p312, %p313
      %p315 = scmp.ne.s32.totalorder %s306, %s307
      %p316 = scmp.eq.s32.totalorder %s34, 0
      %p317 = por %p315, %p316
      %p318 = scmp.ne.s32.totalorder %s306, %s307
      %p319 = scmp.eq.s32.totalorder %s35, 1
      %p320 = por %p318, %p319
      %p322 = scmp.ne.s32.totalorder %s307, %s321
      %p323 = scmp.eq.s32.totalorder %s35, 0
      %p324 = por %p322, %p323
      %s326 = sadd.s32 %s325, 1
      %p329 = scmp.eq.s32.totalorder %s29, 1
      %p330 = scmp.ne.s32.totalorder %s325, %s327
      %p331 = scmp.eq.s32.totalorder %s29, 0
      %p332 = por %p330, %p331
      %p333 = scmp.ne.s32.totalorder %s325, %s327
      %p334 = scmp.eq.s32.totalorder %s34, 1
      %p335 = por %p333, %p334
      %p336 = scmp.ne.s32.totalorder %s327, %s328
      %p337 = scmp.eq.s32.totalorder %s34, 0
      %p338 = por %p336, %p337
      %p339 = scmp.ne.s32.totalorder %s327, %s328
      %p340 = scmp.eq.s32.totalorder %s35, 1
      %p341 = por %p339, %p340
      %p343 = scmp.ne.s32.totalorder %s328, %s342
      %p344 = scmp.eq.s32.totalorder %s35, 0
      %p345 = por %p343, %p344
      %s347 = sadd.s32 %s346, 1
      %p350 = scmp.eq.s32.totalorder %s29, 1
      %p351 = scmp.ne.s32.totalorder %s346, %s348
      %p352 = scmp.eq.s32.totalorder %s29, 0
      %p353 = por %p351, %p352
      %p354 = scmp.ne.s32.totalorder %s346, %s348
      %p355 = scmp.eq.s32.totalorder %s34, 1
      %p356 = por %p354, %p355
      %p357 = scmp.ne.s32.totalorder %s348, %s349
      %p358 = scmp.eq.s32.totalorder %s34, 0
      %p359 = por %p357, %p358
      %p360 = scmp.ne.s32.totalorder %s348, %s349
      %p361 = scmp.eq.s32.totalorder %s35, 1
      %p362 = por %p360, %p361
      %p364 = scmp.ne.s32.totalorder %s349, %s363
      %p365 = scmp.eq.s32.totalorder %s35, 0
      %p366 = por %p364, %p365
      %s367 = ssub.s32 %s29, %s36
      %p368 = scmp.eq.s32.totalorder %s367, 0
      %s370 = sadd.s32 %s369, 1
      %s371 = scalar_select %p368, %s369, %s370
      %p374 = pneg %p368
      %p375 = scmp.eq.s32.totalorder %s29, 1
      %p376 = por %p374, %p375
      %p377 = scmp.ne.s32.totalorder %s369, %s372
      %p378 = scmp.eq.s32.totalorder %s29, 0
      %p379 = por %p377, %p378
      %p380 = scmp.ne.s32.totalorder %s369, %s372
      %p381 = scmp.eq.s32.totalorder %s34, 1
      %p382 = por %p380, %p381
      %p383 = scmp.ne.s32.totalorder %s372, %s373
      %p384 = scmp.eq.s32.totalorder %s34, 0
      %p385 = por %p383, %p384
      %p386 = scmp.ne.s32.totalorder %s372, %s373
      %p387 = scmp.eq.s32.totalorder %s35, 1
      %p388 = por %p386, %p387
      %p390 = scmp.ne.s32.totalorder %s373, %s389
      %p391 = scmp.eq.s32.totalorder %s35, 0
      %p392 = por %p390, %p391
      %p393 = scmp.le.s32.totalorder 1, %s29
      %p394 = scmp.lt.s32.totalorder %s29, 3
      %p395 = pnand %p393, %p394
      %p396 = pneg %p395
      // Predicated region
      $region9: #{tpu_custom_call.1} parent=5 // pred_check
        _
      $region10: #{tpu_custom_call.1} parent=5 // pred_check_branch
        %398 = sbr.rel (%p395) target = $region12
      $region11: #{tpu_custom_call.1} parent=5 // pred_region
        %s399 = ssub.s32 %s29, 1
        // Predicated region
        $region13: #{tpu_custom_call.1} parent=11 // pred_check
          %p400 = pneg %p128
        $region14: #{tpu_custom_call.1} parent=11 // pred_check_branch
          %402 = sbr.rel (%p400) target = $region16
        $region15: #{tpu_custom_call.1} parent=11 // pred_region
          _
        $region16: #{tpu_custom_call.1} parent=11 // pred_fallthru
          _
        // Predicated region
        $region17: #{tpu_custom_call.1} parent=11 // pred_check
          %p403 = pneg %p149
        $region18: #{tpu_custom_call.1} parent=11 // pred_check_branch
          %405 = sbr.rel (%p403) target = $region20
        $region19: #{tpu_custom_call.1} parent=11 // pred_region
          %407 = vsyncadd [#allocation6], 0
          %s409 = sshll.u32 %s4, 4
          %s410 = int_to_ptr.hbm [resolvable:$true] %s409
          %s411 = sshll.u32 [#allocation5], 4
          %s412 = int_to_ptr.vmem [resolvable:$true] %s411
          %414 = dma.hbm_to_vmem [thread:$0]  %s410, 16, %s412, [#allocation6]
        $region20: #{tpu_custom_call.1} parent=11 // pred_fallthru
          _
        // Predicated region
        $region21: #{tpu_custom_call.1} parent=11 // pred_check
          %p415 = pneg %p170
        $region22: #{tpu_custom_call.1} parent=11 // pred_check_branch
          %417 = sbr.rel (%p415) target = $region24
        $region23: #{tpu_custom_call.1} parent=11 // pred_region
          _
        $region24: #{tpu_custom_call.1} parent=11 // pred_fallthru
          _
        // Predicated region
        $region25: #{tpu_custom_call.1} parent=11 // pred_check
          %p418 = pneg %p191
        $region26: #{tpu_custom_call.1} parent=11 // pred_check_branch
          %420 = sbr.rel (%p418) target = $region28
        $region27: #{tpu_custom_call.1} parent=11 // pred_region
          _
        $region28: #{tpu_custom_call.1} parent=11 // pred_fallthru
          _
        // Predicated region
        $region29: #{tpu_custom_call.1} parent=11 // pred_check
          %p421 = pneg %p212
        $region30: #{tpu_custom_call.1} parent=11 // pred_check_branch
          %423 = sbr.rel (%p421) target = $region32
        $region31: #{tpu_custom_call.1} parent=11 // pred_region
          %425 = vsyncadd [#allocation6], 0
          %s426 = sshll.u32 %s7, 4
          %s427 = int_to_ptr.hbm [resolvable:$true] %s426
          %s428 = sshll.u32 [#allocation7], 4
          %s429 = int_to_ptr.vmem [resolvable:$true] %s428
          %434 = dma.hbm_to_vmem [thread:$0]  %s427, 256, %s429, [#allocation6], 64, 64, 4
        $region32: #{tpu_custom_call.1} parent=11 // pred_fallthru
          _
        // Predicated region
        $region33: #{tpu_custom_call.1} parent=11 // pred_check
          %p435 = pneg %p233
        $region34: #{tpu_custom_call.1} parent=11 // pred_check_branch
          %437 = sbr.rel (%p435) target = $region36
        $region35: #{tpu_custom_call.1} parent=11 // pred_region
          _
        $region36: #{tpu_custom_call.1} parent=11 // pred_fallthru
          _
        // Predicated region
        $region37: #{tpu_custom_call.1} parent=11 // pred_check
          %p438 = pneg %p254
        $region38: #{tpu_custom_call.1} parent=11 // pred_check_branch
          %440 = sbr.rel (%p438) target = $region40
        $region39: #{tpu_custom_call.1} parent=11 // pred_region
          %442 = vsyncadd [#allocation9], 0
          %s443 = sshll.u32 %s9, 4
          %s444 = int_to_ptr.hbm [resolvable:$true] %s443
          %s445 = sshll.u32 [#allocation8], 4
          %s446 = int_to_ptr.vmem [resolvable:$true] %s445
          %451 = dma.hbm_to_vmem [thread:$0]  %s444, 256, %s446, [#allocation9], 64, 64, 4
        $region40: #{tpu_custom_call.1} parent=11 // pred_fallthru
          _
        // Predicated region
        $region41: #{tpu_custom_call.1} parent=11 // pred_check
          %p452 = pneg %p275
        $region42: #{tpu_custom_call.1} parent=11 // pred_check_branch
          %454 = sbr.rel (%p452) target = $region44
        $region43: #{tpu_custom_call.1} parent=11 // pred_region
          _
        $region44: #{tpu_custom_call.1} parent=11 // pred_fallthru
          _
        // Predicated region
        $region45: #{tpu_custom_call.1} parent=11 // pred_check
          %p455 = pneg %p296
        $region46: #{tpu_custom_call.1} parent=11 // pred_check_branch
          %457 = sbr.rel (%p455) target = $region48
        $region47: #{tpu_custom_call.1} parent=11 // pred_region
          _
        $region48: #{tpu_custom_call.1} parent=11 // pred_fallthru
          _
        // Predicated region
        $region49: #{tpu_custom_call.1} parent=11 // pred_check
          %p458 = pneg %p317
        $region50: #{tpu_custom_call.1} parent=11 // pred_check_branch
          %460 = sbr.rel (%p458) target = $region52
        $region51: #{tpu_custom_call.1} parent=11 // pred_region
          _
        $region52: #{tpu_custom_call.1} parent=11 // pred_fallthru
          _
        // Predicated region
        $region53: #{tpu_custom_call.1} parent=11 // pred_check
          %p461 = pneg %p338
        $region54: #{tpu_custom_call.1} parent=11 // pred_check_branch
          %463 = sbr.rel (%p461) target = $region56
        $region55: #{tpu_custom_call.1} parent=11 // pred_region
          _
        $region56: #{tpu_custom_call.1} parent=11 // pred_fallthru
          _
        // Predicated region
        $region57: #{tpu_custom_call.1} parent=11 // pred_check
          %p464 = pneg %p359
        $region58: #{tpu_custom_call.1} parent=11 // pred_check_branch
          %466 = sbr.rel (%p464) target = $region60
        $region59: #{tpu_custom_call.1} parent=11 // pred_region
          _
        $region60: #{tpu_custom_call.1} parent=11 // pred_fallthru
          _
      $region12: #{tpu_custom_call.1} parent=5 // pred_fallthru
        _
      %p467 = scmp.lt.s32.totalorder %s29, 2
      // Predicated region
      $region61: #{tpu_custom_call.1} parent=5 // pred_check
        %p468 = pneg %p467
      $region62: #{tpu_custom_call.1} parent=5 // pred_check_branch
        %470 = sbr.rel (%p468) target = $region64
      $region63: #{tpu_custom_call.1} parent=5 // pred_region
        // Predicated region
        $region65: #{tpu_custom_call.1} parent=63 // pred_check
          %p471 = pneg %p49
        $region66: #{tpu_custom_call.1} parent=63 // pred_check_branch
          %473 = sbr.rel (%p471) target = $region68
        $region67: #{tpu_custom_call.1} parent=63 // pred_region
          %s474 = smul.u32 2, %s29
          %p475 = scmp.lt.s32.totalorder %s474, 3
          %s476 = scalar_select %p475, %s474, 3
          %s477 = smul.addr %s476, 8
          %s478 = scalar_lea.vmem %s0, %s477
          %s479 = smul.u32 2, %s29
        $region68: #{tpu_custom_call.1} parent=63 // pred_fallthru
          _
        // Predicated region
        $region69: #{tpu_custom_call.1} parent=63 // pred_check
          %p480 = pneg %p75
        $region70: #{tpu_custom_call.1} parent=63 // pred_check_branch
          %482 = sbr.rel (%p480) target = $region72
        $region71: #{tpu_custom_call.1} parent=63 // pred_region
          %s483 = smul.u32 2, %s29
          %p484 = scmp.lt.s32.totalorder %s483, 3
          %s485 = scalar_select %p484, %s483, 3
          %s486 = smul.addr %s485, 8
          %s487 = scalar_lea.vmem %s1, %s486
          %s488 = smul.u32 2, %s29
        $region72: #{tpu_custom_call.1} parent=63 // pred_fallthru
          _
        // Predicated region
        $region73: #{tpu_custom_call.1} parent=63 // pred_check
          %p489 = pneg %p101
        $region74: #{tpu_custom_call.1} parent=63 // pred_check_branch
          %491 = sbr.rel (%p489) target = $region76
        $region75: #{tpu_custom_call.1} parent=63 // pred_region
          %s492 = sand.u32 %s91, 1
          %s493 = scalar_lea.sflag [#allocation3], %s492
          %s494 = sand.u32 %s91, 1
          %s495 = smul.addr %s494, 128
          %s496 = scalar_lea.vmem [#allocation2], %s495
          %s497 = smul.u32 16, %s29
          %499 = vsyncadd %s493, 0
          %s500 = smul.addr %s497, 8
          %s501 = scalar_lea.hbm %s2, %s500
          %s502 = sshll.u32 %s501, 4
          %s503 = int_to_ptr.hbm [resolvable:$true] %s502
          %s504 = sshll.u32 %s496, 4
          %s505 = int_to_ptr.vmem [resolvable:$true] %s504
          %510 = dma.hbm_to_vmem [thread:$0]  %s503, 2048, %s505, %s493, 128, 128, 8
        $region76: #{tpu_custom_call.1} parent=63 // pred_fallthru
          _
      $region64: #{tpu_custom_call.1} parent=5 // pred_fallthru
        _
      %p511 = scmp.le.s32.totalorder 1, %s29
      %p512 = scmp.lt.s32.totalorder %s29, 3
      %p513 = pnand %p511, %p512
      %p514 = pneg %p513
      // Predicated region
      $region77: #{tpu_custom_call.1} parent=5 // pred_check
        _
      $region78: #{tpu_custom_call.1} parent=5 // pred_check_branch
        %516 = sbr.rel (%p513) target = $region80
      $region79: #{tpu_custom_call.1} parent=5 // pred_region
        %s517 = ssub.s32 %s29, 1
        %s518 = sand.u32 %s94, 1
        %s519 = scalar_lea.sflag [#allocation3], %s518
        %s520 = sand.u32 %s94, 1
        %s521 = smul.addr %s520, 128
        %s522 = scalar_lea.vmem [#allocation2], %s521
        // Predicated region
        $region81: #{tpu_custom_call.1} parent=79 // pred_check
          %p523 = pneg %p107
        $region82: #{tpu_custom_call.1} parent=79 // pred_check_branch
          %525 = sbr.rel (%p523) target = $region84
        $region83: #{tpu_custom_call.1} parent=79 // pred_region
          %527 = dma.done %s519, 2048
        $region84: #{tpu_custom_call.1} parent=79 // pred_fallthru
          _
        // Predicated region
        $region85: #{tpu_custom_call.1} parent=79 // pred_check
          %p528 = pneg %p149
        $region86: #{tpu_custom_call.1} parent=79 // pred_check_branch
          %530 = sbr.rel (%p528) target = $region88
        $region87: #{tpu_custom_call.1} parent=79 // pred_region
          %532 = dma.done [#allocation6], 16
        $region88: #{tpu_custom_call.1} parent=79 // pred_fallthru
          _
        // Predicated region
        $region89: #{tpu_custom_call.1} parent=79 // pred_check
          %p533 = pneg %p212
        $region90: #{tpu_custom_call.1} parent=79 // pred_check_branch
          %535 = sbr.rel (%p533) target = $region92
        $region91: #{tpu_custom_call.1} parent=79 // pred_region
          %537 = dma.done [#allocation6], 256
        $region92: #{tpu_custom_call.1} parent=79 // pred_fallthru
          _
        // Predicated region
        $region93: #{tpu_custom_call.1} parent=79 // pred_check
          %p538 = pneg %p254
        $region94: #{tpu_custom_call.1} parent=79 // pred_check_branch
          %540 = sbr.rel (%p538) target = $region96
        $region95: #{tpu_custom_call.1} parent=79 // pred_region
          %542 = dma.done [#allocation9], 256
        $region96: #{tpu_custom_call.1} parent=79 // pred_fallthru
          _
        %s543 = smul.u32 2, %s34
        %p544 = scmp.lt.s32.totalorder %s543, 3
        %s545 = scalar_select %p544, %s543, 3
        %s546 = smul.addr %s545, 8
        %s547 = scalar_lea.vmem %s0, %s546
        %p548 = pneg %p55
        %p549 = pneg %p52
        %s550 = smul.u32 2, %s34
        %p551 = scmp.lt.s32.totalorder %s550, 3
        %s552 = scalar_select %p551, %s550, 3
        %s553 = smul.addr %s552, 8
        %s554 = scalar_lea.vmem %s1, %s553
        %p555 = pneg %p81
        %p556 = pneg %p78
        %s557 = sand.u32 %s94, 1
        %s558 = scalar_lea.sflag [#allocation3], %s557
        %s559 = sand.u32 %s94, 1
        %s560 = smul.addr %s559, 128
        %s561 = scalar_lea.vmem [#allocation2], %s560
        %p562 = pneg %p107
        %p563 = pneg %p104
        %p564 = pneg %p128
        %p565 = pneg %p125
        %p566 = pneg %p149
        %p567 = pneg %p146
        %p568 = pneg %p170
        %p569 = pneg %p167
        %p570 = pneg %p191
        %p571 = pneg %p188
        %p572 = pneg %p212
        %p573 = pneg %p209
        %p574 = pneg %p233
        %p575 = pneg %p230
        %p576 = pneg %p254
        %p577 = pneg %p251
        %p578 = pneg %p275
        %p579 = pneg %p272
        %p580 = pneg %p296
        %p581 = pneg %p293
        %p582 = pneg %p317
        %p583 = pneg %p314
        %p584 = pneg %p338
        %p585 = pneg %p335
        %p586 = pneg %p359
        %p587 = pneg %p356
        %p588 = pneg %p385
        %p589 = pneg %p382
        %s590 = sand.u32 %s372, 1
        %s591 = scalar_lea.sflag [#allocation4], %s590
        %s592 = sand.u32 %s372, 1
        %s593 = smul.addr %s592, 128
        %s594 = scalar_lea.vmem [#allocation10], %s593
        %s595 = smul.u32 2, %s34
        %p596 = scmp.lt.s32.totalorder %s595, 3
        %s597 = scalar_select %p596, %s595, 3
        %s598 = smul.addr %s597, 8
        %s599 = scalar_lea.vmem %s0, %s598
        %s600 = smul.u32 2, %s34
        %s601 = smul.u32 2, %s34
        %p602 = scmp.lt.s32.totalorder %s601, 3
        %s603 = scalar_select %p602, %s601, 3
        %s604 = smul.addr %s603, 8
        %s605 = scalar_lea.vmem %s1, %s604
        %s606 = smul.u32 2, %s34
        %s607 = smul.u32 16, %s34
        %s608 = smul.u32 16, %s34
        %v610 = vld [vmem:[%s522] sm:$0xff]
        %v611 = vld [vmem:[%s522 + $0x8] sm:$0xff]
        %v612 = vld [vmem:[%s522 + $0x10] sm:$0xff]
        %v613 = vld [vmem:[%s522 + $0x18] sm:$0xff]
        %v614 = vld [vmem:[%s522 + $0x20] sm:$0xff]
        %v615 = vld [vmem:[%s522 + $0x28] sm:$0xff]
        %v616 = vld [vmem:[%s522 + $0x30] sm:$0xff]
        %v617 = vld [vmem:[%s522 + $0x38] sm:$0xff]
        %v618 = vld [vmem:[%s522 + $0x40] sm:$0xff]
        %v619 = vld [vmem:[%s522 + $0x48] sm:$0xff]
        %v620 = vld [vmem:[%s522 + $0x50] sm:$0xff]
        %v621 = vld [vmem:[%s522 + $0x58] sm:$0xff]
        %v622 = vld [vmem:[%s522 + $0x60] sm:$0xff]
        %v623 = vld [vmem:[%s522 + $0x68] sm:$0xff]
        %v624 = vld [vmem:[%s522 + $0x70] sm:$0xff]
        %v625 = vld [vmem:[%s522 + $0x78] sm:$0xff]
        %v626 = vpack.c.bf16 %v611, %v610
        %v627 = vpack.c.bf16 %v613, %v612
        %v628 = vpack.c.bf16 %v615, %v614
        %v629 = vpack.c.bf16 %v617, %v616
        %v630 = vpack.c.bf16 %v619, %v618
        %v631 = vpack.c.bf16 %v621, %v620
        %v632 = vpack.c.bf16 %v623, %v622
        %v633 = vpack.c.bf16 %v625, %v624
        %v634 = vld [vmem:[%s605] sm:$0xff]
        %v635 = vld [vmem:[%s605 + $0x8] sm:$0xff]
        %v636 = vpack.c.bf16 %v635, %v634
        %v637 = vld [vmem:[%s3] sm:$0xf]
        %v638 = vld [vmem:[%s3 + $0x4] sm:$0xf]
        %v639 = vld [vmem:[%s3 + $0x8] sm:$0xf]
        %v640 = vld [vmem:[%s3 + $0xc] sm:$0xf]
        %v641 = vld [vmem:[#allocation5] sm:$0x1]
        %v643 = vperm.slane %v641, 0
        %v649 = vunpack.c.l.b16 %v637
        %v650 = vunpack.c.l.b16 %v638
        %v651 = vunpack.c.l.b16 %v639
        %v652 = vunpack.c.l.b16 %v640
        %v653 = vpack.c.b16 %v650, %v649
        %v654 = vpack.c.b16 %v652, %v651
        %vm657 = vcmask 261120
        %v659 = vsel %vm657, %v636, 0
        %661 = vmatpush.bf16.msra.mxu0 0
        %662 = vmatpush.bf16.msra.mxu0 0
        %663 = vmatpush.bf16.msra.mxu0 0
        %664 = vmatpush.bf16.msra.mxu0 0
        %665 = vmatpush.bf16.msra.mxu0 0
        %666 = vmatpush.bf16.msra.mxu0 0
        %667 = vmatpush.bf16.msra.mxu0 %v654
        %668 = vmatpush.bf16.msra.mxu0 %v653
        %669 = vmatmul.bf16.gmra.mxu0 %v659
        %v670 = vpop.f32.mrf.mxu0
        %v671 = vadd.f32 %v643, %v670
        %v672 = vpop.f32.mrf.mxu0
        %v673 = vadd.f32 %v643, %v672
        %674 = vdwg.mxu0
        %v675 = vld [vmem:[%s5] sm:$0xf]
        %v676 = vld [vmem:[%s5 + $0x4] sm:$0xf]
        %v677 = vld [vmem:[%s5 + $0x8] sm:$0xf]
        %v678 = vld [vmem:[%s5 + $0xc] sm:$0xf]
        %v679 = vld [vmem:[%s6] sm:$0x1]
        %v681 = vperm.slane %v679, 0
        %v687 = vunpack.c.l.b16 %v675
        %v688 = vunpack.c.l.b16 %v676
        %v689 = vunpack.c.l.b16 %v677
        %v690 = vunpack.c.l.b16 %v678
        %v691 = vpack.c.b16 %v688, %v687
        %v692 = vpack.c.b16 %v690, %v689
        %v696 = vsel %vm657, %v626, 0
        %v699 = vsel %vm657, %v627, 0
        %v702 = vsel %vm657, %v628, 0
        %v705 = vsel %vm657, %v629, 0
        %v708 = vsel %vm657, %v630, 0
        %v711 = vsel %vm657, %v631, 0
        %v714 = vsel %vm657, %v632, 0
        %v717 = vsel %vm657, %v633, 0
        %719 = vmatpush.bf16.msra.mxu0 0
        %720 = vmatpush.bf16.msra.mxu0 0
        %721 = vmatpush.bf16.msra.mxu0 0
        %722 = vmatpush.bf16.msra.mxu0 0
        %723 = vmatpush.bf16.msra.mxu0 0
        %724 = vmatpush.bf16.msra.mxu0 0
        %725 = vmatpush.bf16.msra.mxu0 %v692
        %726 = vmatpush.bf16.msra.mxu0 %v691
        %727 = vmatmul.bf16.gmra.mxu0 %v696
        %v728 = vpop.f32.mrf.mxu0
        %v729 = vadd.f32 %v681, %v728
        %v730 = vpop.f32.mrf.mxu0
        %v731 = vadd.f32 %v681, %v730
        %732 = vmatmul.bf16.gmra.mxu0 %v699
        %v733 = vpop.f32.mrf.mxu0
        %v734 = vadd.f32 %v681, %v733
        %v735 = vpop.f32.mrf.mxu0
        %v736 = vadd.f32 %v681, %v735
        %737 = vmatmul.bf16.gmra.mxu0 %v702
        %v738 = vpop.f32.mrf.mxu0
        %v739 = vadd.f32 %v681, %v738
        %v740 = vpop.f32.mrf.mxu0
        %v741 = vadd.f32 %v681, %v740
        %742 = vmatmul.bf16.gmra.mxu0 %v705
        %v743 = vpop.f32.mrf.mxu0
        %v744 = vadd.f32 %v681, %v743
        %v745 = vpop.f32.mrf.mxu0
        %v746 = vadd.f32 %v681, %v745
        %747 = vmatmul.bf16.gmra.mxu0 %v708
        %v748 = vpop.f32.mrf.mxu0
        %v749 = vadd.f32 %v681, %v748
        %v750 = vpop.f32.mrf.mxu0
        %v751 = vadd.f32 %v681, %v750
        %752 = vmatmul.bf16.gmra.mxu0 %v711
        %v753 = vpop.f32.mrf.mxu0
        %v754 = vadd.f32 %v681, %v753
        %v755 = vpop.f32.mrf.mxu0
        %v756 = vadd.f32 %v681, %v755
        %757 = vmatmul.bf16.gmra.mxu0 %v714
        %v758 = vpop.f32.mrf.mxu0
        %v759 = vadd.f32 %v681, %v758
        %v760 = vpop.f32.mrf.mxu0
        %v761 = vadd.f32 %v681, %v760
        %762 = vmatmul.bf16.gmra.mxu0 %v717
        %v763 = vpop.f32.mrf.mxu0
        %v764 = vadd.f32 %v681, %v763
        %v765 = vpop.f32.mrf.mxu0
        %v766 = vadd.f32 %v681, %v765
        %767 = vdwg.mxu0
        %v768 = vld [vmem:[#allocation7] sm:$0xf]
        %v769 = vld [vmem:[#allocation7 + $0x4] sm:$0xf]
        %v770 = vld [vmem:[#allocation7 + $0x8] sm:$0xf]
        %v771 = vld [vmem:[#allocation7 + $0xc] sm:$0xf]
        %v772 = vld [vmem:[%s8] sm:$0x1]
        %v774 = vperm.slane %v772, 0
        %v780 = vunpack.c.l.b16 %v768
        %v781 = vunpack.c.l.b16 %v769
        %v782 = vunpack.c.l.b16 %v770
        %v783 = vunpack.c.l.b16 %v771
        %v784 = vpack.c.b16 %v781, %v780
        %v785 = vpack.c.b16 %v783, %v782
        %788 = vmatpush.bf16.msra.mxu0 0
        %789 = vmatpush.bf16.msra.mxu0 0
        %790 = vmatpush.bf16.msra.mxu0 0
        %791 = vmatpush.bf16.msra.mxu0 0
        %792 = vmatpush.bf16.msra.mxu0 0
        %793 = vmatpush.bf16.msra.mxu0 0
        %794 = vmatpush.bf16.msra.mxu0 %v785
        %795 = vmatpush.bf16.msra.mxu0 %v784
        %796 = vmatmul.bf16.gmra.mxu0 %v696
        %v797 = vpop.f32.mrf.mxu0
        %v798 = vadd.f32 %v774, %v797
        %v799 = vpop.f32.mrf.mxu0
        %v800 = vadd.f32 %v774, %v799
        %801 = vmatmul.bf16.gmra.mxu0 %v699
        %v802 = vpop.f32.mrf.mxu0
        %v803 = vadd.f32 %v774, %v802
        %v804 = vpop.f32.mrf.mxu0
        %v805 = vadd.f32 %v774, %v804
        %806 = vmatmul.bf16.gmra.mxu0 %v702
        %v807 = vpop.f32.mrf.mxu0
        %v808 = vadd.f32 %v774, %v807
        %v809 = vpop.f32.mrf.mxu0
        %v810 = vadd.f32 %v774, %v809
        %811 = vmatmul.bf16.gmra.mxu0 %v705
        %v812 = vpop.f32.mrf.mxu0
        %v813 = vadd.f32 %v774, %v812
        %v814 = vpop.f32.mrf.mxu0
        %v815 = vadd.f32 %v774, %v814
        %816 = vmatmul.bf16.gmra.mxu0 %v708
        %v817 = vpop.f32.mrf.mxu0
        %v818 = vadd.f32 %v774, %v817
        %v819 = vpop.f32.mrf.mxu0
        %v820 = vadd.f32 %v774, %v819
        %821 = vmatmul.bf16.gmra.mxu0 %v711
        %v822 = vpop.f32.mrf.mxu0
        %v823 = vadd.f32 %v774, %v822
        %v824 = vpop.f32.mrf.mxu0
        %v825 = vadd.f32 %v774, %v824
        %826 = vmatmul.bf16.gmra.mxu0 %v714
        %v827 = vpop.f32.mrf.mxu0
        %v828 = vadd.f32 %v774, %v827
        %v829 = vpop.f32.mrf.mxu0
        %v830 = vadd.f32 %v774, %v829
        %831 = vmatmul.bf16.gmra.mxu0 %v717
        %v832 = vpop.f32.mrf.mxu0
        %v833 = vadd.f32 %v774, %v832
        %v834 = vpop.f32.mrf.mxu0
        %v835 = vadd.f32 %v774, %v834
        %836 = vdwg.mxu0
        %v839 = vrot.slane %v671, 1
        %v840 = vrot.slane %v671, 2
        %v841 = vrot.slane %v671, 3
        %v842 = vrot.slane %v671, 4
        %v843 = vrot.slane %v671, 5
        %v844 = vrot.slane %v671, 6
        %v845 = vrot.slane %v671, 7
        %v846 = vrot.slane %v673, 1
        %v847 = vrot.slane %v673, 2
        %v848 = vrot.slane %v673, 3
        %v849 = vrot.slane %v673, 4
        %v850 = vrot.slane %v673, 5
        %v851 = vrot.slane %v673, 6
        %v852 = vrot.slane %v673, 7
        %v853 = vperm.slane %v671, 0
        %v854 = vperm.slane %v839, 0
        %v855 = vperm.slane %v840, 0
        %v856 = vperm.slane %v841, 0
        %v857 = vperm.slane %v842, 0
        %v858 = vperm.slane %v843, 0
        %v859 = vperm.slane %v844, 0
        %v860 = vperm.slane %v845, 0
        %v861 = vperm.slane %v673, 0
        %v862 = vperm.slane %v846, 0
        %v863 = vperm.slane %v847, 0
        %v864 = vperm.slane %v848, 0
        %v865 = vperm.slane %v849, 0
        %v866 = vperm.slane %v850, 0
        %v867 = vperm.slane %v851, 0
        %v868 = vperm.slane %v852, 0
        %v885 = vmul.f32 %v729, %v853
        %v886 = vmul.f32 %v731, %v854
        %v887 = vmul.f32 %v734, %v855
        %v888 = vmul.f32 %v736, %v856
        %v889 = vmul.f32 %v739, %v857
        %v890 = vmul.f32 %v741, %v858
        %v891 = vmul.f32 %v744, %v859
        %v892 = vmul.f32 %v746, %v860
        %v893 = vmul.f32 %v749, %v861
        %v894 = vmul.f32 %v751, %v862
        %v895 = vmul.f32 %v754, %v863
        %v896 = vmul.f32 %v756, %v864
        %v897 = vmul.f32 %v759, %v865
        %v898 = vmul.f32 %v761, %v866
        %v899 = vmul.f32 %v764, %v867
        %v900 = vmul.f32 %v766, %v868
        %v901 = vld [vmem:[%s13] sm:$0xff]
        %v902 = vld [vmem:[%s13 + $0x8] sm:$0xff]
        %v903 = vld [vmem:[%s13 + $0x10] sm:$0xff]
        %v904 = vld [vmem:[%s13 + $0x18] sm:$0xff]
        %v906 = vsel %vm657, %v885, 0
        %v909 = vsel %vm657, %v886, 0
        %v912 = vsel %vm657, %v887, 0
        %v915 = vsel %vm657, %v888, 0
        %v918 = vsel %vm657, %v889, 0
        %v921 = vsel %vm657, %v890, 0
        %v924 = vsel %vm657, %v891, 0
        %v927 = vsel %vm657, %v892, 0
        %v930 = vsel %vm657, %v893, 0
        %v933 = vsel %vm657, %v894, 0
        %v936 = vsel %vm657, %v895, 0
        %v939 = vsel %vm657, %v896, 0
        %v942 = vsel %vm657, %v897, 0
        %v945 = vsel %vm657, %v898, 0
        %v948 = vsel %vm657, %v899, 0
        %v951 = vsel %vm657, %v900, 0
        %953 = vmatpush.msra.mxu0 0.0
        %954 = vmatpush.msra.mxu0 0.0
        %955 = vmatpush.msra.mxu0 0.0
        %956 = vmatpush.msra.mxu0 0.0
        %957 = vmatpush.msra.mxu0 0.0
        %958 = vmatpush.msra.mxu0 0.0
        %959 = vmatpush.msra.mxu0 0.0
        %960 = vmatpush.msra.mxu0 0.0
        %961 = vmatpush.msra.mxu0 0.0
        %962 = vmatpush.msra.mxu0 0.0
        %963 = vmatpush.msra.mxu0 0.0
        %964 = vmatpush.msra.mxu0 0.0
        %965 = vmatpush.msra.mxu0 %v904
        %966 = vmatpush.msra.mxu0 %v903
        %967 = vmatpush.msra.mxu0 %v902
        %968 = vmatpush.msra.mxu0 %v901
        %969 = vmatmul.f32.gmra.mxu0 %v906
        %v970 = vpop.f32.mrf.mxu0
        %v971 = vadd.f32 0.0, %v970
        %972 = vmatmul.f32.gmra.mxu0 %v909
        %v973 = vpop.f32.mrf.mxu0
        %v974 = vadd.f32 0.0, %v973
        %975 = vmatmul.f32.gmra.mxu0 %v912
        %v976 = vpop.f32.mrf.mxu0
        %v977 = vadd.f32 0.0, %v976
        %978 = vmatmul.f32.gmra.mxu0 %v915
        %v979 = vpop.f32.mrf.mxu0
        %v980 = vadd.f32 0.0, %v979
        %981 = vmatmul.f32.gmra.mxu0 %v918
        %v982 = vpop.f32.mrf.mxu0
        %v983 = vadd.f32 0.0, %v982
        %984 = vmatmul.f32.gmra.mxu0 %v921
        %v985 = vpop.f32.mrf.mxu0
        %v986 = vadd.f32 0.0, %v985
        %987 = vmatmul.f32.gmra.mxu0 %v924
        %v988 = vpop.f32.mrf.mxu0
        %v989 = vadd.f32 0.0, %v988
        %990 = vmatmul.f32.gmra.mxu0 %v927
        %v991 = vpop.f32.mrf.mxu0
        %v992 = vadd.f32 0.0, %v991
        %993 = vmatmul.f32.gmra.mxu0 %v930
        %v994 = vpop.f32.mrf.mxu0
        %v995 = vadd.f32 0.0, %v994
        %996 = vmatmul.f32.gmra.mxu0 %v933
        %v997 = vpop.f32.mrf.mxu0
        %v998 = vadd.f32 0.0, %v997
        %999 = vmatmul.f32.gmra.mxu0 %v936
        %v1000 = vpop.f32.mrf.mxu0
        %v1001 = vadd.f32 0.0, %v1000
        %1002 = vmatmul.f32.gmra.mxu0 %v939
        %v1003 = vpop.f32.mrf.mxu0
        %v1004 = vadd.f32 0.0, %v1003
        %1005 = vmatmul.f32.gmra.mxu0 %v942
        %v1006 = vpop.f32.mrf.mxu0
        %v1007 = vadd.f32 0.0, %v1006
        %1008 = vmatmul.f32.gmra.mxu0 %v945
        %v1009 = vpop.f32.mrf.mxu0
        %v1010 = vadd.f32 0.0, %v1009
        %1011 = vmatmul.f32.gmra.mxu0 %v948
        %v1012 = vpop.f32.mrf.mxu0
        %v1013 = vadd.f32 0.0, %v1012
        %1014 = vmatmul.f32.gmra.mxu0 %v951
        %v1015 = vpop.f32.mrf.mxu0
        %v1016 = vadd.f32 0.0, %v1015
        %1017 = vdwg.mxu0
        %v1018 = vld [vmem:[%s599] sm:$0xff]
        %v1019 = vld [vmem:[%s599 + $0x8] sm:$0xff]
        %v1020 = vlaneseq
        %v1021 = vshrl.u32 %v1020, 7
        %v1022 = vrot.slane %v1018, 1
        %v1023 = vrot.slane %v1018, 2
        %v1024 = vrot.slane %v1018, 3
        %v1025 = vrot.slane %v1018, 4
        %v1026 = vrot.slane %v1018, 5
        %v1027 = vrot.slane %v1018, 6
        %v1028 = vrot.slane %v1018, 7
        %v1029 = vrot.slane %v1019, 1
        %v1030 = vrot.slane %v1019, 2
        %v1031 = vrot.slane %v1019, 3
        %v1032 = vrot.slane %v1019, 4
        %v1033 = vrot.slane %v1019, 5
        %v1034 = vrot.slane %v1019, 6
        %v1035 = vrot.slane %v1019, 7
        %v1036 = vperm.slane %v1018, 0
        %v1037 = vperm.slane %v1022, 0
        %v1038 = vperm.slane %v1023, 0
        %v1039 = vperm.slane %v1024, 0
        %v1040 = vperm.slane %v1025, 0
        %v1041 = vperm.slane %v1026, 0
        %v1042 = vperm.slane %v1027, 0
        %v1043 = vperm.slane %v1028, 0
        %v1044 = vperm.slane %v1019, 0
        %v1045 = vperm.slane %v1029, 0
        %v1046 = vperm.slane %v1030, 0
        %v1047 = vperm.slane %v1031, 0
        %v1048 = vperm.slane %v1032, 0
        %v1049 = vperm.slane %v1033, 0
        %v1050 = vperm.slane %v1034, 0
        %v1051 = vperm.slane %v1035, 0
        %vm1052 = vcmp.ge.s32.totalorder %v1021, %v1036
        %vm1053 = vcmp.ge.s32.totalorder %v1021, %v1037
        %vm1054 = vcmp.ge.s32.totalorder %v1021, %v1038
        %vm1055 = vcmp.ge.s32.totalorder %v1021, %v1039
        %vm1056 = vcmp.ge.s32.totalorder %v1021, %v1040
        %vm1057 = vcmp.ge.s32.totalorder %v1021, %v1041
        %vm1058 = vcmp.ge.s32.totalorder %v1021, %v1042
        %vm1059 = vcmp.ge.s32.totalorder %v1021, %v1043
        %vm1060 = vcmp.ge.s32.totalorder %v1021, %v1044
        %vm1061 = vcmp.ge.s32.totalorder %v1021, %v1045
        %vm1062 = vcmp.ge.s32.totalorder %v1021, %v1046
        %vm1063 = vcmp.ge.s32.totalorder %v1021, %v1047
        %vm1064 = vcmp.ge.s32.totalorder %v1021, %v1048
        %vm1065 = vcmp.ge.s32.totalorder %v1021, %v1049
        %vm1066 = vcmp.ge.s32.totalorder %v1021, %v1050
        %vm1067 = vcmp.ge.s32.totalorder %v1021, %v1051
        %v1068 = vsel %vm1052, 1, 0
        %v1069 = vsel %vm1053, 1, 0
        %v1070 = vsel %vm1054, 1, 0
        %v1071 = vsel %vm1055, 1, 0
        %v1072 = vsel %vm1056, 1, 0
        %v1073 = vsel %vm1057, 1, 0
        %v1074 = vsel %vm1058, 1, 0
        %v1075 = vsel %vm1059, 1, 0
        %v1076 = vsel %vm1060, 1, 0
        %v1077 = vsel %vm1061, 1, 0
        %v1078 = vsel %vm1062, 1, 0
        %v1079 = vsel %vm1063, 1, 0
        %v1080 = vsel %vm1064, 1, 0
        %v1081 = vsel %vm1065, 1, 0
        %v1082 = vsel %vm1066, 1, 0
        %v1083 = vsel %vm1067, 1, 0
        %1084 = vset.pattern.permute.xlu0 0
        %1085 = vperm.xlu0 %1084, %v1068
        %v1086 = vpop.permute.xlu0 %1085
        %1087 = vset.pattern.permute.xlu0 0
        %1088 = vperm.xlu0 %1087, %v1069
        %v1089 = vpop.permute.xlu0 %1088
        %1090 = vset.pattern.permute.xlu0 0
        %1091 = vperm.xlu0 %1090, %v1070
        %v1092 = vpop.permute.xlu0 %1091
        %1093 = vset.pattern.permute.xlu0 0
        %1094 = vperm.xlu0 %1093, %v1071
        %v1095 = vpop.permute.xlu0 %1094
        %1096 = vset.pattern.permute.xlu0 0
        %1097 = vperm.xlu0 %1096, %v1072
        %v1098 = vpop.permute.xlu0 %1097
        %1099 = vset.pattern.permute.xlu0 0
        %1100 = vperm.xlu0 %1099, %v1073
        %v1101 = vpop.permute.xlu0 %1100
        %1102 = vset.pattern.permute.xlu0 0
        %1103 = vperm.xlu0 %1102, %v1074
        %v1104 = vpop.permute.xlu0 %1103
        %1105 = vset.pattern.permute.xlu0 0
        %1106 = vperm.xlu0 %1105, %v1075
        %v1107 = vpop.permute.xlu0 %1106
        %1108 = vset.pattern.permute.xlu0 0
        %1109 = vperm.xlu0 %1108, %v1076
        %v1110 = vpop.permute.xlu0 %1109
        %1111 = vset.pattern.permute.xlu0 0
        %1112 = vperm.xlu0 %1111, %v1077
        %v1113 = vpop.permute.xlu0 %1112
        %1114 = vset.pattern.permute.xlu0 0
        %1115 = vperm.xlu0 %1114, %v1078
        %v1116 = vpop.permute.xlu0 %1115
        %1117 = vset.pattern.permute.xlu0 0
        %1118 = vperm.xlu0 %1117, %v1079
        %v1119 = vpop.permute.xlu0 %1118
        %1120 = vset.pattern.permute.xlu0 0
        %1121 = vperm.xlu0 %1120, %v1080
        %v1122 = vpop.permute.xlu0 %1121
        %1123 = vset.pattern.permute.xlu0 0
        %1124 = vperm.xlu0 %1123, %v1081
        %v1125 = vpop.permute.xlu0 %1124
        %1126 = vset.pattern.permute.xlu0 0
        %1127 = vperm.xlu0 %1126, %v1082
        %v1128 = vpop.permute.xlu0 %1127
        %1129 = vset.pattern.permute.xlu0 0
        %1130 = vperm.xlu0 %1129, %v1083
        %v1131 = vpop.permute.xlu0 %1130
        %vm1132 = vcmp.eq.s32.totalorder %v1086, 1
        %vm1133 = vcmp.eq.s32.totalorder %v1089, 1
        %vm1134 = vcmp.eq.s32.totalorder %v1092, 1
        %vm1135 = vcmp.eq.s32.totalorder %v1095, 1
        %vm1136 = vcmp.eq.s32.totalorder %v1098, 1
        %vm1137 = vcmp.eq.s32.totalorder %v1101, 1
        %vm1138 = vcmp.eq.s32.totalorder %v1104, 1
        %vm1139 = vcmp.eq.s32.totalorder %v1107, 1
        %vm1140 = vcmp.eq.s32.totalorder %v1110, 1
        %vm1141 = vcmp.eq.s32.totalorder %v1113, 1
        %vm1142 = vcmp.eq.s32.totalorder %v1116, 1
        %vm1143 = vcmp.eq.s32.totalorder %v1119, 1
        %vm1144 = vcmp.eq.s32.totalorder %v1122, 1
        %vm1145 = vcmp.eq.s32.totalorder %v1125, 1
        %vm1146 = vcmp.eq.s32.totalorder %v1128, 1
        %vm1147 = vcmp.eq.s32.totalorder %v1131, 1
        %v1148 = vsel %vm1132, -1e+30, %v971
        %v1149 = vsel %vm1133, -1e+30, %v974
        %v1150 = vsel %vm1134, -1e+30, %v977
        %v1151 = vsel %vm1135, -1e+30, %v980
        %v1152 = vsel %vm1136, -1e+30, %v983
        %v1153 = vsel %vm1137, -1e+30, %v986
        %v1154 = vsel %vm1138, -1e+30, %v989
        %v1155 = vsel %vm1139, -1e+30, %v992
        %v1156 = vsel %vm1140, -1e+30, %v995
        %v1157 = vsel %vm1141, -1e+30, %v998
        %v1158 = vsel %vm1142, -1e+30, %v1001
        %v1159 = vsel %vm1143, -1e+30, %v1004
        %v1160 = vsel %vm1144, -1e+30, %v1007
        %v1161 = vsel %vm1145, -1e+30, %v1010
        %v1162 = vsel %vm1146, -1e+30, %v1013
        %v1163 = vsel %vm1147, -1e+30, %v1016
        %vm1164 = vcmask 31744
        %v1165 = vsel %vm1164, %v1148, -inf
        %v1166 = vrot.slane %v1165, 4
        %v1167 = vmax.f32 %v1165, %v1166
        %v1168 = vrot.slane %v1167, 2
        %v1169 = vmax.f32 %v1167, %v1168
        %v1170 = vrot.slane %v1169, 1
        %v1171 = vmax.f32 %v1169, %v1170
        %v1172 = vsel %vm1164, %v1149, -inf
        %v1173 = vrot.slane %v1172, 4
        %v1174 = vmax.f32 %v1172, %v1173
        %v1175 = vrot.slane %v1174, 2
        %v1176 = vmax.f32 %v1174, %v1175
        %v1177 = vrot.slane %v1176, 1
        %v1178 = vmax.f32 %v1176, %v1177
        %v1179 = vsel %vm1164, %v1150, -inf
        %v1180 = vrot.slane %v1179, 4
        %v1181 = vmax.f32 %v1179, %v1180
        %v1182 = vrot.slane %v1181, 2
        %v1183 = vmax.f32 %v1181, %v1182
        %v1184 = vrot.slane %v1183, 1
        %v1185 = vmax.f32 %v1183, %v1184
        %v1186 = vsel %vm1164, %v1151, -inf
        %v1187 = vrot.slane %v1186, 4
        %v1188 = vmax.f32 %v1186, %v1187
        %v1189 = vrot.slane %v1188, 2
        %v1190 = vmax.f32 %v1188, %v1189
        %v1191 = vrot.slane %v1190, 1
        %v1192 = vmax.f32 %v1190, %v1191
        %v1193 = vsel %vm1164, %v1152, -inf
        %v1194 = vrot.slane %v1193, 4
        %v1195 = vmax.f32 %v1193, %v1194
        %v1196 = vrot.slane %v1195, 2
        %v1197 = vmax.f32 %v1195, %v1196
        %v1198 = vrot.slane %v1197, 1
        %v1199 = vmax.f32 %v1197, %v1198
        %v1200 = vsel %vm1164, %v1153, -inf
        %v1201 = vrot.slane %v1200, 4
        %v1202 = vmax.f32 %v1200, %v1201
        %v1203 = vrot.slane %v1202, 2
        %v1204 = vmax.f32 %v1202, %v1203
        %v1205 = vrot.slane %v1204, 1
        %v1206 = vmax.f32 %v1204, %v1205
        %v1207 = vsel %vm1164, %v1154, -inf
        %v1208 = vrot.slane %v1207, 4
        %v1209 = vmax.f32 %v1207, %v1208
        %v1210 = vrot.slane %v1209, 2
        %v1211 = vmax.f32 %v1209, %v1210
        %v1212 = vrot.slane %v1211, 1
        %v1213 = vmax.f32 %v1211, %v1212
        %v1214 = vsel %vm1164, %v1155, -inf
        %v1215 = vrot.slane %v1214, 4
        %v1216 = vmax.f32 %v1214, %v1215
        %v1217 = vrot.slane %v1216, 2
        %v1218 = vmax.f32 %v1216, %v1217
        %v1219 = vrot.slane %v1218, 1
        %v1220 = vmax.f32 %v1218, %v1219
        %v1221 = vsel %vm1164, %v1156, -inf
        %v1222 = vrot.slane %v1221, 4
        %v1223 = vmax.f32 %v1221, %v1222
        %v1224 = vrot.slane %v1223, 2
        %v1225 = vmax.f32 %v1223, %v1224
        %v1226 = vrot.slane %v1225, 1
        %v1227 = vmax.f32 %v1225, %v1226
        %v1228 = vsel %vm1164, %v1157, -inf
        %v1229 = vrot.slane %v1228, 4
        %v1230 = vmax.f32 %v1228, %v1229
        %v1231 = vrot.slane %v1230, 2
        %v1232 = vmax.f32 %v1230, %v1231
        %v1233 = vrot.slane %v1232, 1
        %v1234 = vmax.f32 %v1232, %v1233
        %v1235 = vsel %vm1164, %v1158, -inf
        %v1236 = vrot.slane %v1235, 4
        %v1237 = vmax.f32 %v1235, %v1236
        %v1238 = vrot.slane %v1237, 2
        %v1239 = vmax.f32 %v1237, %v1238
        %v1240 = vrot.slane %v1239, 1
        %v1241 = vmax.f32 %v1239, %v1240
        %v1242 = vsel %vm1164, %v1159, -inf
        %v1243 = vrot.slane %v1242, 4
        %v1244 = vmax.f32 %v1242, %v1243
        %v1245 = vrot.slane %v1244, 2
        %v1246 = vmax.f32 %v1244, %v1245
        %v1247 = vrot.slane %v1246, 1
        %v1248 = vmax.f32 %v1246, %v1247
        %v1249 = vsel %vm1164, %v1160, -inf
        %v1250 = vrot.slane %v1249, 4
        %v1251 = vmax.f32 %v1249, %v1250
        %v1252 = vrot.slane %v1251, 2
        %v1253 = vmax.f32 %v1251, %v1252
        %v1254 = vrot.slane %v1253, 1
        %v1255 = vmax.f32 %v1253, %v1254
        %v1256 = vsel %vm1164, %v1161, -inf
        %v1257 = vrot.slane %v1256, 4
        %v1258 = vmax.f32 %v1256, %v1257
        %v1259 = vrot.slane %v1258, 2
        %v1260 = vmax.f32 %v1258, %v1259
        %v1261 = vrot.slane %v1260, 1
        %v1262 = vmax.f32 %v1260, %v1261
        %v1263 = vsel %vm1164, %v1162, -inf
        %v1264 = vrot.slane %v1263, 4
        %v1265 = vmax.f32 %v1263, %v1264
        %v1266 = vrot.slane %v1265, 2
        %v1267 = vmax.f32 %v1265, %v1266
        %v1268 = vrot.slane %v1267, 1
        %v1269 = vmax.f32 %v1267, %v1268
        %v1270 = vsel %vm1164, %v1163, -inf
        %v1271 = vrot.slane %v1270, 4
        %v1272 = vmax.f32 %v1270, %v1271
        %v1273 = vrot.slane %v1272, 2
        %v1274 = vmax.f32 %v1272, %v1273
        %v1275 = vrot.slane %v1274, 1
        %v1276 = vmax.f32 %v1274, %v1275
        %v1277 = vsub.f32 %v1148, %v1171
        %v1278 = vsub.f32 %v1149, %v1178
        %v1279 = vsub.f32 %v1150, %v1185
        %v1280 = vsub.f32 %v1151, %v1192
        %v1281 = vsub.f32 %v1152, %v1199
        %v1282 = vsub.f32 %v1153, %v1206
        %v1283 = vsub.f32 %v1154, %v1213
        %v1284 = vsub.f32 %v1155, %v1220
        %v1285 = vsub.f32 %v1156, %v1227
        %v1286 = vsub.f32 %v1157, %v1234
        %v1287 = vsub.f32 %v1158, %v1241
        %v1288 = vsub.f32 %v1159, %v1248
        %v1289 = vsub.f32 %v1160, %v1255
        %v1290 = vsub.f32 %v1161, %v1262
        %v1291 = vsub.f32 %v1162, %v1269
        %v1292 = vsub.f32 %v1163, %v1276
        %v1293 = vmul.f32 %v1277, 1.442695
        %v1294 = vpow.pop %v1293
        %v1295 = vmul.f32 %v1278, 1.442695
        %v1296 = vpow.pop %v1295
        %v1297 = vmul.f32 %v1279, 1.442695
        %v1298 = vpow.pop %v1297
        %v1299 = vmul.f32 %v1280, 1.442695
        %v1300 = vpow.pop %v1299
        %v1301 = vmul.f32 %v1281, 1.442695
        %v1302 = vpow.pop %v1301
        %v1303 = vmul.f32 %v1282, 1.442695
        %v1304 = vpow.pop %v1303
        %v1305 = vmul.f32 %v1283, 1.442695
        %v1306 = vpow.pop %v1305
        %v1307 = vmul.f32 %v1284, 1.442695
        %v1308 = vpow.pop %v1307
        %v1309 = vmul.f32 %v1285, 1.442695
        %v1310 = vpow.pop %v1309
        %v1311 = vmul.f32 %v1286, 1.442695
        %v1312 = vpow.pop %v1311
        %v1313 = vmul.f32 %v1287, 1.442695
        %v1314 = vpow.pop %v1313
        %v1315 = vmul.f32 %v1288, 1.442695
        %v1316 = vpow.pop %v1315
        %v1317 = vmul.f32 %v1289, 1.442695
        %v1318 = vpow.pop %v1317
        %v1319 = vmul.f32 %v1290, 1.442695
        %v1320 = vpow.pop %v1319
        %v1321 = vmul.f32 %v1291, 1.442695
        %v1322 = vpow.pop %v1321
        %v1323 = vmul.f32 %v1292, 1.442695
        %v1324 = vpow.pop %v1323
        %v1325 = vsel %vm1132, 0.0, %v1294
        %v1326 = vsel %vm1133, 0.0, %v1296
        %v1327 = vsel %vm1134, 0.0, %v1298
        %v1328 = vsel %vm1135, 0.0, %v1300
        %v1329 = vsel %vm1136, 0.0, %v1302
        %v1330 = vsel %vm1137, 0.0, %v1304
        %v1331 = vsel %vm1138, 0.0, %v1306
        %v1332 = vsel %vm1139, 0.0, %v1308
        %v1333 = vsel %vm1140, 0.0, %v1310
        %v1334 = vsel %vm1141, 0.0, %v1312
        %v1335 = vsel %vm1142, 0.0, %v1314
        %v1336 = vsel %vm1143, 0.0, %v1316
        %v1337 = vsel %vm1144, 0.0, %v1318
        %v1338 = vsel %vm1145, 0.0, %v1320
        %v1339 = vsel %vm1146, 0.0, %v1322
        %v1340 = vsel %vm1147, 0.0, %v1324
        %v1341 = vsel %vm1164, %v1325, 0.0
        %v1342 = vrot.slane %v1341, 4
        %v1343 = vadd.f32 %v1341, %v1342
        %v1344 = vrot.slane %v1343, 2
        %v1345 = vadd.f32 %v1343, %v1344
        %v1346 = vrot.slane %v1345, 1
        %v1347 = vadd.f32 %v1345, %v1346
        %v1348 = vsel %vm1164, %v1326, 0.0
        %v1349 = vrot.slane %v1348, 4
        %v1350 = vadd.f32 %v1348, %v1349
        %v1351 = vrot.slane %v1350, 2
        %v1352 = vadd.f32 %v1350, %v1351
        %v1353 = vrot.slane %v1352, 1
        %v1354 = vadd.f32 %v1352, %v1353
        %v1355 = vsel %vm1164, %v1327, 0.0
        %v1356 = vrot.slane %v1355, 4
        %v1357 = vadd.f32 %v1355, %v1356
        %v1358 = vrot.slane %v1357, 2
        %v1359 = vadd.f32 %v1357, %v1358
        %v1360 = vrot.slane %v1359, 1
        %v1361 = vadd.f32 %v1359, %v1360
        %v1362 = vsel %vm1164, %v1328, 0.0
        %v1363 = vrot.slane %v1362, 4
        %v1364 = vadd.f32 %v1362, %v1363
        %v1365 = vrot.slane %v1364, 2
        %v1366 = vadd.f32 %v1364, %v1365
        %v1367 = vrot.slane %v1366, 1
        %v1368 = vadd.f32 %v1366, %v1367
        %v1369 = vsel %vm1164, %v1329, 0.0
        %v1370 = vrot.slane %v1369, 4
        %v1371 = vadd.f32 %v1369, %v1370
        %v1372 = vrot.slane %v1371, 2
        %v1373 = vadd.f32 %v1371, %v1372
        %v1374 = vrot.slane %v1373, 1
        %v1375 = vadd.f32 %v1373, %v1374
        %v1376 = vsel %vm1164, %v1330, 0.0
        %v1377 = vrot.slane %v1376, 4
        %v1378 = vadd.f32 %v1376, %v1377
        %v1379 = vrot.slane %v1378, 2
        %v1380 = vadd.f32 %v1378, %v1379
        %v1381 = vrot.slane %v1380, 1
        %v1382 = vadd.f32 %v1380, %v1381
        %v1383 = vsel %vm1164, %v1331, 0.0
        %v1384 = vrot.slane %v1383, 4
        %v1385 = vadd.f32 %v1383, %v1384
        %v1386 = vrot.slane %v1385, 2
        %v1387 = vadd.f32 %v1385, %v1386
        %v1388 = vrot.slane %v1387, 1
        %v1389 = vadd.f32 %v1387, %v1388
        %v1390 = vsel %vm1164, %v1332, 0.0
        %v1391 = vrot.slane %v1390, 4
        %v1392 = vadd.f32 %v1390, %v1391
        %v1393 = vrot.slane %v1392, 2
        %v1394 = vadd.f32 %v1392, %v1393
        %v1395 = vrot.slane %v1394, 1
        %v1396 = vadd.f32 %v1394, %v1395
        %v1397 = vsel %vm1164, %v1333, 0.0
        %v1398 = vrot.slane %v1397, 4
        %v1399 = vadd.f32 %v1397, %v1398
        %v1400 = vrot.slane %v1399, 2
        %v1401 = vadd.f32 %v1399, %v1400
        %v1402 = vrot.slane %v1401, 1
        %v1403 = vadd.f32 %v1401, %v1402
        %v1404 = vsel %vm1164, %v1334, 0.0
        %v1405 = vrot.slane %v1404, 4
        %v1406 = vadd.f32 %v1404, %v1405
        %v1407 = vrot.slane %v1406, 2
        %v1408 = vadd.f32 %v1406, %v1407
        %v1409 = vrot.slane %v1408, 1
        %v1410 = vadd.f32 %v1408, %v1409
        %v1411 = vsel %vm1164, %v1335, 0.0
        %v1412 = vrot.slane %v1411, 4
        %v1413 = vadd.f32 %v1411, %v1412
        %v1414 = vrot.slane %v1413, 2
        %v1415 = vadd.f32 %v1413, %v1414
        %v1416 = vrot.slane %v1415, 1
        %v1417 = vadd.f32 %v1415, %v1416
        %v1418 = vsel %vm1164, %v1336, 0.0
        %v1419 = vrot.slane %v1418, 4
        %v1420 = vadd.f32 %v1418, %v1419
        %v1421 = vrot.slane %v1420, 2
        %v1422 = vadd.f32 %v1420, %v1421
        %v1423 = vrot.slane %v1422, 1
        %v1424 = vadd.f32 %v1422, %v1423
        %v1425 = vsel %vm1164, %v1337, 0.0
        %v1426 = vrot.slane %v1425, 4
        %v1427 = vadd.f32 %v1425, %v1426
        %v1428 = vrot.slane %v1427, 2
        %v1429 = vadd.f32 %v1427, %v1428
        %v1430 = vrot.slane %v1429, 1
        %v1431 = vadd.f32 %v1429, %v1430
        %v1432 = vsel %vm1164, %v1338, 0.0
        %v1433 = vrot.slane %v1432, 4
        %v1434 = vadd.f32 %v1432, %v1433
        %v1435 = vrot.slane %v1434, 2
        %v1436 = vadd.f32 %v1434, %v1435
        %v1437 = vrot.slane %v1436, 1
        %v1438 = vadd.f32 %v1436, %v1437
        %v1439 = vsel %vm1164, %v1339, 0.0
        %v1440 = vrot.slane %v1439, 4
        %v1441 = vadd.f32 %v1439, %v1440
        %v1442 = vrot.slane %v1441, 2
        %v1443 = vadd.f32 %v1441, %v1442
        %v1444 = vrot.slane %v1443, 1
        %v1445 = vadd.f32 %v1443, %v1444
        %v1446 = vsel %vm1164, %v1340, 0.0
        %v1447 = vrot.slane %v1446, 4
        %v1448 = vadd.f32 %v1446, %v1447
        %v1449 = vrot.slane %v1448, 2
        %v1450 = vadd.f32 %v1448, %v1449
        %v1451 = vrot.slane %v1450, 1
        %v1452 = vadd.f32 %v1450, %v1451
        %v1453 = vrcp.pop %v1347
        %v1454 = vrcp.pop %v1354
        %v1455 = vrcp.pop %v1361
        %v1456 = vrcp.pop %v1368
        %v1457 = vrcp.pop %v1375
        %v1458 = vrcp.pop %v1382
        %v1459 = vrcp.pop %v1389
        %v1460 = vrcp.pop %v1396
        %v1461 = vrcp.pop %v1403
        %v1462 = vrcp.pop %v1410
        %v1463 = vrcp.pop %v1417
        %v1464 = vrcp.pop %v1424
        %v1465 = vrcp.pop %v1431
        %v1466 = vrcp.pop %v1438
        %v1467 = vrcp.pop %v1445
        %v1468 = vrcp.pop %v1452
        %v1469 = vmul.f32 %v1325, %v1453
        %v1470 = vmul.f32 %v1326, %v1454
        %v1471 = vmul.f32 %v1327, %v1455
        %v1472 = vmul.f32 %v1328, %v1456
        %v1473 = vmul.f32 %v1329, %v1457
        %v1474 = vmul.f32 %v1330, %v1458
        %v1475 = vmul.f32 %v1331, %v1459
        %v1476 = vmul.f32 %v1332, %v1460
        %v1477 = vmul.f32 %v1333, %v1461
        %v1478 = vmul.f32 %v1334, %v1462
        %v1479 = vmul.f32 %v1335, %v1463
        %v1480 = vmul.f32 %v1336, %v1464
        %v1481 = vmul.f32 %v1337, %v1465
        %v1482 = vmul.f32 %v1338, %v1466
        %v1483 = vmul.f32 %v1339, %v1467
        %v1484 = vmul.f32 %v1340, %v1468
        %v1485 = vld [vmem:[%s14] sm:$0xf]
        %v1487 = vsel %vm1164, %v1469, 0
        %v1490 = vsel %vm1164, %v1470, 0
        %v1493 = vsel %vm1164, %v1471, 0
        %v1496 = vsel %vm1164, %v1472, 0
        %v1499 = vsel %vm1164, %v1473, 0
        %v1502 = vsel %vm1164, %v1474, 0
        %v1505 = vsel %vm1164, %v1475, 0
        %v1508 = vsel %vm1164, %v1476, 0
        %v1511 = vsel %vm1164, %v1477, 0
        %v1514 = vsel %vm1164, %v1478, 0
        %v1517 = vsel %vm1164, %v1479, 0
        %v1520 = vsel %vm1164, %v1480, 0
        %v1523 = vsel %vm1164, %v1481, 0
        %v1526 = vsel %vm1164, %v1482, 0
        %v1529 = vsel %vm1164, %v1483, 0
        %v1532 = vsel %vm1164, %v1484, 0
        %vm1534 = vcmask 1043456
        %v1536 = vsel %vm1534, %v1485, 0
        %1538 = vmatpush.msra.mxu0 0.0
        %1539 = vmatpush.msra.mxu0 0.0
        %1540 = vmatpush.msra.mxu0 0.0
        %1541 = vmatpush.msra.mxu0 0.0
        %1542 = vmatpush.msra.mxu0 0.0
        %1543 = vmatpush.msra.mxu0 0.0
        %1544 = vmatpush.msra.mxu0 0.0
        %1545 = vmatpush.msra.mxu0 0.0
        %1546 = vmatpush.msra.mxu0 0.0
        %1547 = vmatpush.msra.mxu0 0.0
        %1548 = vmatpush.msra.mxu0 0.0
        %1549 = vmatpush.msra.mxu0 0.0
        %1550 = vmatpush.msra.mxu0 0.0
        %1551 = vmatpush.msra.mxu0 0.0
        %1552 = vmatpush.msra.mxu0 0.0
        %1553 = vmatpush.msra.mxu0 %v1536
        %1554 = vmatmul.f32.gmra.mxu0 %v1487
        %v1555 = vpop.f32.mrf.mxu0
        %v1556 = vadd.f32 0.0, %v1555
        %1557 = vmatmul.f32.gmra.mxu0 %v1490
        %v1558 = vpop.f32.mrf.mxu0
        %v1559 = vadd.f32 0.0, %v1558
        %1560 = vmatmul.f32.gmra.mxu0 %v1493
        %v1561 = vpop.f32.mrf.mxu0
        %v1562 = vadd.f32 0.0, %v1561
        %1563 = vmatmul.f32.gmra.mxu0 %v1496
        %v1564 = vpop.f32.mrf.mxu0
        %v1565 = vadd.f32 0.0, %v1564
        %1566 = vmatmul.f32.gmra.mxu0 %v1499
        %v1567 = vpop.f32.mrf.mxu0
        %v1568 = vadd.f32 0.0, %v1567
        %1569 = vmatmul.f32.gmra.mxu0 %v1502
        %v1570 = vpop.f32.mrf.mxu0
        %v1571 = vadd.f32 0.0, %v1570
        %1572 = vmatmul.f32.gmra.mxu0 %v1505
        %v1573 = vpop.f32.mrf.mxu0
        %v1574 = vadd.f32 0.0, %v1573
        %1575 = vmatmul.f32.gmra.mxu0 %v1508
        %v1576 = vpop.f32.mrf.mxu0
        %v1577 = vadd.f32 0.0, %v1576
        %1578 = vmatmul.f32.gmra.mxu0 %v1511
        %v1579 = vpop.f32.mrf.mxu0
        %v1580 = vadd.f32 0.0, %v1579
        %1581 = vmatmul.f32.gmra.mxu0 %v1514
        %v1582 = vpop.f32.mrf.mxu0
        %v1583 = vadd.f32 0.0, %v1582
        %1584 = vmatmul.f32.gmra.mxu0 %v1517
        %v1585 = vpop.f32.mrf.mxu0
        %v1586 = vadd.f32 0.0, %v1585
        %1587 = vmatmul.f32.gmra.mxu0 %v1520
        %v1588 = vpop.f32.mrf.mxu0
        %v1589 = vadd.f32 0.0, %v1588
        %1590 = vmatmul.f32.gmra.mxu0 %v1523
        %v1591 = vpop.f32.mrf.mxu0
        %v1592 = vadd.f32 0.0, %v1591
        %1593 = vmatmul.f32.gmra.mxu0 %v1526
        %v1594 = vpop.f32.mrf.mxu0
        %v1595 = vadd.f32 0.0, %v1594
        %1596 = vmatmul.f32.gmra.mxu0 %v1529
        %v1597 = vpop.f32.mrf.mxu0
        %v1598 = vadd.f32 0.0, %v1597
        %1599 = vmatmul.f32.gmra.mxu0 %v1532
        %v1600 = vpop.f32.mrf.mxu0
        %v1601 = vadd.f32 0.0, %v1600
        %1602 = vdwg.mxu0
        %v1603 = vmul.f32 %v1556, %v798
        %v1604 = vmul.f32 %v1559, %v800
        %v1605 = vmul.f32 %v1562, %v803
        %v1606 = vmul.f32 %v1565, %v805
        %v1607 = vmul.f32 %v1568, %v808
        %v1608 = vmul.f32 %v1571, %v810
        %v1609 = vmul.f32 %v1574, %v813
        %v1610 = vmul.f32 %v1577, %v815
        %v1611 = vmul.f32 %v1580, %v818
        %v1612 = vmul.f32 %v1583, %v820
        %v1613 = vmul.f32 %v1586, %v823
        %v1614 = vmul.f32 %v1589, %v825
        %v1615 = vmul.f32 %v1592, %v828
        %v1616 = vmul.f32 %v1595, %v830
        %v1617 = vmul.f32 %v1598, %v833
        %v1618 = vmul.f32 %v1601, %v835
        %v1619 = vpack.c.bf16 %v1604, %v1603
        %v1620 = vpack.c.bf16 %v1606, %v1605
        %v1621 = vpack.c.bf16 %v1608, %v1607
        %v1622 = vpack.c.bf16 %v1610, %v1609
        %v1623 = vpack.c.bf16 %v1612, %v1611
        %v1624 = vpack.c.bf16 %v1614, %v1613
        %v1625 = vpack.c.bf16 %v1616, %v1615
        %v1626 = vpack.c.bf16 %v1618, %v1617
        %v1627 = vld [vmem:[#allocation8] sm:$0xf]
        %v1628 = vld [vmem:[#allocation8 + $0x4] sm:$0xf]
        %v1629 = vld [vmem:[#allocation8 + $0x8] sm:$0xf]
        %v1630 = vld [vmem:[#allocation8 + $0xc] sm:$0xf]
        %v1631 = vld [vmem:[%s10] sm:$0x1]
        %v1633 = vperm.slane %v1631, 0
        %v1639 = vunpack.c.l.b16 %v1627
        %v1640 = vunpack.c.l.b16 %v1628
        %v1641 = vunpack.c.l.b16 %v1629
        %v1642 = vunpack.c.l.b16 %v1630
        %v1643 = vpack.c.b16 %v1640, %v1639
        %v1644 = vpack.c.b16 %v1642, %v1641
        %v1648 = vsel %vm657, %v1619, 0
        %v1651 = vsel %vm657, %v1620, 0
        %v1654 = vsel %vm657, %v1621, 0
        %v1657 = vsel %vm657, %v1622, 0
        %v1660 = vsel %vm657, %v1623, 0
        %v1663 = vsel %vm657, %v1624, 0
        %v1666 = vsel %vm657, %v1625, 0
        %v1669 = vsel %vm657, %v1626, 0
        %1671 = vmatpush.bf16.msra.mxu0 0
        %1672 = vmatpush.bf16.msra.mxu0 0
        %1673 = vmatpush.bf16.msra.mxu0 0
        %1674 = vmatpush.bf16.msra.mxu0 0
        %1675 = vmatpush.bf16.msra.mxu0 0
        %1676 = vmatpush.bf16.msra.mxu0 0
        %1677 = vmatpush.bf16.msra.mxu0 %v1644
        %1678 = vmatpush.bf16.msra.mxu0 %v1643
        %1679 = vmatmul.bf16.gmra.mxu0 %v1648
        %v1680 = vpop.f32.mrf.mxu0
        %v1681 = vadd.f32 %v1633, %v1680
        %v1682 = vpop.f32.mrf.mxu0
        %v1683 = vadd.f32 %v1633, %v1682
        %1684 = vmatmul.bf16.gmra.mxu0 %v1651
        %v1685 = vpop.f32.mrf.mxu0
        %v1686 = vadd.f32 %v1633, %v1685
        %v1687 = vpop.f32.mrf.mxu0
        %v1688 = vadd.f32 %v1633, %v1687
        %1689 = vmatmul.bf16.gmra.mxu0 %v1654
        %v1690 = vpop.f32.mrf.mxu0
        %v1691 = vadd.f32 %v1633, %v1690
        %v1692 = vpop.f32.mrf.mxu0
        %v1693 = vadd.f32 %v1633, %v1692
        %1694 = vmatmul.bf16.gmra.mxu0 %v1657
        %v1695 = vpop.f32.mrf.mxu0
        %v1696 = vadd.f32 %v1633, %v1695
        %v1697 = vpop.f32.mrf.mxu0
        %v1698 = vadd.f32 %v1633, %v1697
        %1699 = vmatmul.bf16.gmra.mxu0 %v1660
        %v1700 = vpop.f32.mrf.mxu0
        %v1701 = vadd.f32 %v1633, %v1700
        %v1702 = vpop.f32.mrf.mxu0
        %v1703 = vadd.f32 %v1633, %v1702
        %1704 = vmatmul.bf16.gmra.mxu0 %v1663
        %v1705 = vpop.f32.mrf.mxu0
        %v1706 = vadd.f32 %v1633, %v1705
        %v1707 = vpop.f32.mrf.mxu0
        %v1708 = vadd.f32 %v1633, %v1707
        %1709 = vmatmul.bf16.gmra.mxu0 %v1666
        %v1710 = vpop.f32.mrf.mxu0
        %v1711 = vadd.f32 %v1633, %v1710
        %v1712 = vpop.f32.mrf.mxu0
        %v1713 = vadd.f32 %v1633, %v1712
        %1714 = vmatmul.bf16.gmra.mxu0 %v1669
        %v1715 = vpop.f32.mrf.mxu0
        %v1716 = vadd.f32 %v1633, %v1715
        %v1717 = vpop.f32.mrf.mxu0
        %v1718 = vadd.f32 %v1633, %v1717
        %1719 = vdwg.mxu0
        %v1720 = vadd.f32 %v610, %v1681
        %v1721 = vadd.f32 %v611, %v1683
        %v1722 = vadd.f32 %v612, %v1686
        %v1723 = vadd.f32 %v613, %v1688
        %v1724 = vadd.f32 %v614, %v1691
        %v1725 = vadd.f32 %v615, %v1693
        %v1726 = vadd.f32 %v616, %v1696
        %v1727 = vadd.f32 %v617, %v1698
        %v1728 = vadd.f32 %v618, %v1701
        %v1729 = vadd.f32 %v619, %v1703
        %v1730 = vadd.f32 %v620, %v1706
        %v1731 = vadd.f32 %v621, %v1708
        %v1732 = vadd.f32 %v622, %v1711
        %v1733 = vadd.f32 %v623, %v1713
        %v1734 = vadd.f32 %v624, %v1716
        %v1735 = vadd.f32 %v625, %v1718
        %v1736 = vsel %vm657, %v1720, 0.0
        %1737 = vadd.xlane.f32.xlu0 %v1736
        %v1738 = vpop.xlane.xlu0 %1737
        %v1739 = vsel %vm657, %v1721, 0.0
        %1740 = vadd.xlane.f32.xlu0 %v1739
        %v1741 = vpop.xlane.xlu0 %1740
        %v1742 = vsel %vm657, %v1722, 0.0
        %1743 = vadd.xlane.f32.xlu0 %v1742
        %v1744 = vpop.xlane.xlu0 %1743
        %v1745 = vsel %vm657, %v1723, 0.0
        %1746 = vadd.xlane.f32.xlu0 %v1745
        %v1747 = vpop.xlane.xlu0 %1746
        %v1748 = vsel %vm657, %v1724, 0.0
        %1749 = vadd.xlane.f32.xlu0 %v1748
        %v1750 = vpop.xlane.xlu0 %1749
        %v1751 = vsel %vm657, %v1725, 0.0
        %1752 = vadd.xlane.f32.xlu0 %v1751
        %v1753 = vpop.xlane.xlu0 %1752
        %v1754 = vsel %vm657, %v1726, 0.0
        %1755 = vadd.xlane.f32.xlu0 %v1754
        %v1756 = vpop.xlane.xlu0 %1755
        %v1757 = vsel %vm657, %v1727, 0.0
        %1758 = vadd.xlane.f32.xlu0 %v1757
        %v1759 = vpop.xlane.xlu0 %1758
        %v1760 = vsel %vm657, %v1728, 0.0
        %1761 = vadd.xlane.f32.xlu0 %v1760
        %v1762 = vpop.xlane.xlu0 %1761
        %v1763 = vsel %vm657, %v1729, 0.0
        %1764 = vadd.xlane.f32.xlu0 %v1763
        %v1765 = vpop.xlane.xlu0 %1764
        %v1766 = vsel %vm657, %v1730, 0.0
        %1767 = vadd.xlane.f32.xlu0 %v1766
        %v1768 = vpop.xlane.xlu0 %1767
        %v1769 = vsel %vm657, %v1731, 0.0
        %1770 = vadd.xlane.f32.xlu0 %v1769
        %v1771 = vpop.xlane.xlu0 %1770
        %v1772 = vsel %vm657, %v1732, 0.0
        %1773 = vadd.xlane.f32.xlu0 %v1772
        %v1774 = vpop.xlane.xlu0 %1773
        %v1775 = vsel %vm657, %v1733, 0.0
        %1776 = vadd.xlane.f32.xlu0 %v1775
        %v1777 = vpop.xlane.xlu0 %1776
        %v1778 = vsel %vm657, %v1734, 0.0
        %1779 = vadd.xlane.f32.xlu0 %v1778
        %v1780 = vpop.xlane.xlu0 %1779
        %v1781 = vsel %vm657, %v1735, 0.0
        %1782 = vadd.xlane.f32.xlu0 %v1781
        %v1783 = vpop.xlane.xlu0 %1782
        %v1784 = vmul.f32 %v1738, 0.03125
        %v1785 = vmul.f32 %v1741, 0.03125
        %v1786 = vmul.f32 %v1744, 0.03125
        %v1787 = vmul.f32 %v1747, 0.03125
        %v1788 = vmul.f32 %v1750, 0.03125
        %v1789 = vmul.f32 %v1753, 0.03125
        %v1790 = vmul.f32 %v1756, 0.03125
        %v1791 = vmul.f32 %v1759, 0.03125
        %v1792 = vmul.f32 %v1762, 0.03125
        %v1793 = vmul.f32 %v1765, 0.03125
        %v1794 = vmul.f32 %v1768, 0.03125
        %v1795 = vmul.f32 %v1771, 0.03125
        %v1796 = vmul.f32 %v1774, 0.03125
        %v1797 = vmul.f32 %v1777, 0.03125
        %v1798 = vmul.f32 %v1780, 0.03125
        %v1799 = vmul.f32 %v1783, 0.03125
        %v1800 = vsub.f32 %v1720, %v1784
        %v1801 = vsub.f32 %v1721, %v1785
        %v1802 = vsub.f32 %v1722, %v1786
        %v1803 = vsub.f32 %v1723, %v1787
        %v1804 = vsub.f32 %v1724, %v1788
        %v1805 = vsub.f32 %v1725, %v1789
        %v1806 = vsub.f32 %v1726, %v1790
        %v1807 = vsub.f32 %v1727, %v1791
        %v1808 = vsub.f32 %v1728, %v1792
        %v1809 = vsub.f32 %v1729, %v1793
        %v1810 = vsub.f32 %v1730, %v1794
        %v1811 = vsub.f32 %v1731, %v1795
        %v1812 = vsub.f32 %v1732, %v1796
        %v1813 = vsub.f32 %v1733, %v1797
        %v1814 = vsub.f32 %v1734, %v1798
        %v1815 = vsub.f32 %v1735, %v1799
        %v1816 = vmul.f32 %v1800, %v1800
        %v1817 = vmul.f32 %v1801, %v1801
        %v1818 = vmul.f32 %v1802, %v1802
        %v1819 = vmul.f32 %v1803, %v1803
        %v1820 = vmul.f32 %v1804, %v1804
        %v1821 = vmul.f32 %v1805, %v1805
        %v1822 = vmul.f32 %v1806, %v1806
        %v1823 = vmul.f32 %v1807, %v1807
        %v1824 = vmul.f32 %v1808, %v1808
        %v1825 = vmul.f32 %v1809, %v1809
        %v1826 = vmul.f32 %v1810, %v1810
        %v1827 = vmul.f32 %v1811, %v1811
        %v1828 = vmul.f32 %v1812, %v1812
        %v1829 = vmul.f32 %v1813, %v1813
        %v1830 = vmul.f32 %v1814, %v1814
        %v1831 = vmul.f32 %v1815, %v1815
        %v1832 = vsel %vm657, %v1816, 0.0
        %1833 = vadd.xlane.f32.xlu0 %v1832
        %v1834 = vpop.xlane.xlu0 %1833
        %v1835 = vsel %vm657, %v1817, 0.0
        %1836 = vadd.xlane.f32.xlu0 %v1835
        %v1837 = vpop.xlane.xlu0 %1836
        %v1838 = vsel %vm657, %v1818, 0.0
        %1839 = vadd.xlane.f32.xlu0 %v1838
        %v1840 = vpop.xlane.xlu0 %1839
        %v1841 = vsel %vm657, %v1819, 0.0
        %1842 = vadd.xlane.f32.xlu0 %v1841
        %v1843 = vpop.xlane.xlu0 %1842
        %v1844 = vsel %vm657, %v1820, 0.0
        %1845 = vadd.xlane.f32.xlu0 %v1844
        %v1846 = vpop.xlane.xlu0 %1845
        %v1847 = vsel %vm657, %v1821, 0.0
        %1848 = vadd.xlane.f32.xlu0 %v1847
        %v1849 = vpop.xlane.xlu0 %1848
        %v1850 = vsel %vm657, %v1822, 0.0
        %1851 = vadd.xlane.f32.xlu0 %v1850
        %v1852 = vpop.xlane.xlu0 %1851
        %v1853 = vsel %vm657, %v1823, 0.0
        %1854 = vadd.xlane.f32.xlu0 %v1853
        %v1855 = vpop.xlane.xlu0 %1854
        %v1856 = vsel %vm657, %v1824, 0.0
        %1857 = vadd.xlane.f32.xlu0 %v1856
        %v1858 = vpop.xlane.xlu0 %1857
        %v1859 = vsel %vm657, %v1825, 0.0
        %1860 = vadd.xlane.f32.xlu0 %v1859
        %v1861 = vpop.xlane.xlu0 %1860
        %v1862 = vsel %vm657, %v1826, 0.0
        %1863 = vadd.xlane.f32.xlu0 %v1862
        %v1864 = vpop.xlane.xlu0 %1863
        %v1865 = vsel %vm657, %v1827, 0.0
        %1866 = vadd.xlane.f32.xlu0 %v1865
        %v1867 = vpop.xlane.xlu0 %1866
        %v1868 = vsel %vm657, %v1828, 0.0
        %1869 = vadd.xlane.f32.xlu0 %v1868
        %v1870 = vpop.xlane.xlu0 %1869
        %v1871 = vsel %vm657, %v1829, 0.0
        %1872 = vadd.xlane.f32.xlu0 %v1871
        %v1873 = vpop.xlane.xlu0 %1872
        %v1874 = vsel %vm657, %v1830, 0.0
        %1875 = vadd.xlane.f32.xlu0 %v1874
        %v1876 = vpop.xlane.xlu0 %1875
        %v1877 = vsel %vm657, %v1831, 0.0
        %1878 = vadd.xlane.f32.xlu0 %v1877
        %v1879 = vpop.xlane.xlu0 %1878
        %v1880 = vmul.f32 %v1834, 0.032258064
        %v1881 = vmul.f32 %v1837, 0.032258064
        %v1882 = vmul.f32 %v1840, 0.032258064
        %v1883 = vmul.f32 %v1843, 0.032258064
        %v1884 = vmul.f32 %v1846, 0.032258064
        %v1885 = vmul.f32 %v1849, 0.032258064
        %v1886 = vmul.f32 %v1852, 0.032258064
        %v1887 = vmul.f32 %v1855, 0.032258064
        %v1888 = vmul.f32 %v1858, 0.032258064
        %v1889 = vmul.f32 %v1861, 0.032258064
        %v1890 = vmul.f32 %v1864, 0.032258064
        %v1891 = vmul.f32 %v1867, 0.032258064
        %v1892 = vmul.f32 %v1870, 0.032258064
        %v1893 = vmul.f32 %v1873, 0.032258064
        %v1894 = vmul.f32 %v1876, 0.032258064
        %v1895 = vmul.f32 %v1879, 0.032258064
        %v1896 = vrsqrt.pop %v1880
        %v1897 = vmul.f32 %v1896, %v1880
        %v1898 = vmul.f32 %v1897, %v1896
        %v1899 = vmul.f32 0.5, %v1898
        %v1900 = vsub.f32 1.5, %v1899
        %v1901 = vmul.f32 %v1896, %v1900
        %v1902 = vmul.f32 %v1880, %v1901
        %vm1903 = vcmp.eq.f32.partialorder %v1880, inf
        %v1904 = vsel %vm1903, %v1880, %v1902
        %vm1905 = vcmp.eq.f32.partialorder %v1880, 0.0
        %v1906 = vand.u32 %v1880, 2147483648
        %v1907 = vsel %vm1905, %v1906, %v1904
        %v1908 = vrsqrt.pop %v1881
        %v1909 = vmul.f32 %v1908, %v1881
        %v1910 = vmul.f32 %v1909, %v1908
        %v1911 = vmul.f32 0.5, %v1910
        %v1912 = vsub.f32 1.5, %v1911
        %v1913 = vmul.f32 %v1908, %v1912
        %v1914 = vmul.f32 %v1881, %v1913
        %vm1915 = vcmp.eq.f32.partialorder %v1881, inf
        %v1916 = vsel %vm1915, %v1881, %v1914
        %vm1917 = vcmp.eq.f32.partialorder %v1881, 0.0
        %v1918 = vand.u32 %v1881, 2147483648
        %v1919 = vsel %vm1917, %v1918, %v1916
        %v1920 = vrsqrt.pop %v1882
        %v1921 = vmul.f32 %v1920, %v1882
        %v1922 = vmul.f32 %v1921, %v1920
        %v1923 = vmul.f32 0.5, %v1922
        %v1924 = vsub.f32 1.5, %v1923
        %v1925 = vmul.f32 %v1920, %v1924
        %v1926 = vmul.f32 %v1882, %v1925
        %vm1927 = vcmp.eq.f32.partialorder %v1882, inf
        %v1928 = vsel %vm1927, %v1882, %v1926
        %vm1929 = vcmp.eq.f32.partialorder %v1882, 0.0
        %v1930 = vand.u32 %v1882, 2147483648
        %v1931 = vsel %vm1929, %v1930, %v1928
        %v1932 = vrsqrt.pop %v1883
        %v1933 = vmul.f32 %v1932, %v1883
        %v1934 = vmul.f32 %v1933, %v1932
        %v1935 = vmul.f32 0.5, %v1934
        %v1936 = vsub.f32 1.5, %v1935
        %v1937 = vmul.f32 %v1932, %v1936
        %v1938 = vmul.f32 %v1883, %v1937
        %vm1939 = vcmp.eq.f32.partialorder %v1883, inf
        %v1940 = vsel %vm1939, %v1883, %v1938
        %vm1941 = vcmp.eq.f32.partialorder %v1883, 0.0
        %v1942 = vand.u32 %v1883, 2147483648
        %v1943 = vsel %vm1941, %v1942, %v1940
        %v1944 = vrsqrt.pop %v1884
        %v1945 = vmul.f32 %v1944, %v1884
        %v1946 = vmul.f32 %v1945, %v1944
        %v1947 = vmul.f32 0.5, %v1946
        %v1948 = vsub.f32 1.5, %v1947
        %v1949 = vmul.f32 %v1944, %v1948
        %v1950 = vmul.f32 %v1884, %v1949
        %vm1951 = vcmp.eq.f32.partialorder %v1884, inf
        %v1952 = vsel %vm1951, %v1884, %v1950
        %vm1953 = vcmp.eq.f32.partialorder %v1884, 0.0
        %v1954 = vand.u32 %v1884, 2147483648
        %v1955 = vsel %vm1953, %v1954, %v1952
        %v1956 = vrsqrt.pop %v1885
        %v1957 = vmul.f32 %v1956, %v1885
        %v1958 = vmul.f32 %v1957, %v1956
        %v1959 = vmul.f32 0.5, %v1958
        %v1960 = vsub.f32 1.5, %v1959
        %v1961 = vmul.f32 %v1956, %v1960
        %v1962 = vmul.f32 %v1885, %v1961
        %vm1963 = vcmp.eq.f32.partialorder %v1885, inf
        %v1964 = vsel %vm1963, %v1885, %v1962
        %vm1965 = vcmp.eq.f32.partialorder %v1885, 0.0
        %v1966 = vand.u32 %v1885, 2147483648
        %v1967 = vsel %vm1965, %v1966, %v1964
        %v1968 = vrsqrt.pop %v1886
        %v1969 = vmul.f32 %v1968, %v1886
        %v1970 = vmul.f32 %v1969, %v1968
        %v1971 = vmul.f32 0.5, %v1970
        %v1972 = vsub.f32 1.5, %v1971
        %v1973 = vmul.f32 %v1968, %v1972
        %v1974 = vmul.f32 %v1886, %v1973
        %vm1975 = vcmp.eq.f32.partialorder %v1886, inf
        %v1976 = vsel %vm1975, %v1886, %v1974
        %vm1977 = vcmp.eq.f32.partialorder %v1886, 0.0
        %v1978 = vand.u32 %v1886, 2147483648
        %v1979 = vsel %vm1977, %v1978, %v1976
        %v1980 = vrsqrt.pop %v1887
        %v1981 = vmul.f32 %v1980, %v1887
        %v1982 = vmul.f32 %v1981, %v1980
        %v1983 = vmul.f32 0.5, %v1982
        %v1984 = vsub.f32 1.5, %v1983
        %v1985 = vmul.f32 %v1980, %v1984
        %v1986 = vmul.f32 %v1887, %v1985
        %vm1987 = vcmp.eq.f32.partialorder %v1887, inf
        %v1988 = vsel %vm1987, %v1887, %v1986
        %vm1989 = vcmp.eq.f32.partialorder %v1887, 0.0
        %v1990 = vand.u32 %v1887, 2147483648
        %v1991 = vsel %vm1989, %v1990, %v1988
        %v1992 = vrsqrt.pop %v1888
        %v1993 = vmul.f32 %v1992, %v1888
        %v1994 = vmul.f32 %v1993, %v1992
        %v1995 = vmul.f32 0.5, %v1994
        %v1996 = vsub.f32 1.5, %v1995
        %v1997 = vmul.f32 %v1992, %v1996
        %v1998 = vmul.f32 %v1888, %v1997
        %vm1999 = vcmp.eq.f32.partialorder %v1888, inf
        %v2000 = vsel %vm1999, %v1888, %v1998
        %vm2001 = vcmp.eq.f32.partialorder %v1888, 0.0
        %v2002 = vand.u32 %v1888, 2147483648
        %v2003 = vsel %vm2001, %v2002, %v2000
        %v2004 = vrsqrt.pop %v1889
        %v2005 = vmul.f32 %v2004, %v1889
        %v2006 = vmul.f32 %v2005, %v2004
        %v2007 = vmul.f32 0.5, %v2006
        %v2008 = vsub.f32 1.5, %v2007
        %v2009 = vmul.f32 %v2004, %v2008
        %v2010 = vmul.f32 %v1889, %v2009
        %vm2011 = vcmp.eq.f32.partialorder %v1889, inf
        %v2012 = vsel %vm2011, %v1889, %v2010
        %vm2013 = vcmp.eq.f32.partialorder %v1889, 0.0
        %v2014 = vand.u32 %v1889, 2147483648
        %v2015 = vsel %vm2013, %v2014, %v2012
        %v2016 = vrsqrt.pop %v1890
        %v2017 = vmul.f32 %v2016, %v1890
        %v2018 = vmul.f32 %v2017, %v2016
        %v2019 = vmul.f32 0.5, %v2018
        %v2020 = vsub.f32 1.5, %v2019
        %v2021 = vmul.f32 %v2016, %v2020
        %v2022 = vmul.f32 %v1890, %v2021
        %vm2023 = vcmp.eq.f32.partialorder %v1890, inf
        %v2024 = vsel %vm2023, %v1890, %v2022
        %vm2025 = vcmp.eq.f32.partialorder %v1890, 0.0
        %v2026 = vand.u32 %v1890, 2147483648
        %v2027 = vsel %vm2025, %v2026, %v2024
        %v2028 = vrsqrt.pop %v1891
        %v2029 = vmul.f32 %v2028, %v1891
        %v2030 = vmul.f32 %v2029, %v2028
        %v2031 = vmul.f32 0.5, %v2030
        %v2032 = vsub.f32 1.5, %v2031
        %v2033 = vmul.f32 %v2028, %v2032
        %v2034 = vmul.f32 %v1891, %v2033
        %vm2035 = vcmp.eq.f32.partialorder %v1891, inf
        %v2036 = vsel %vm2035, %v1891, %v2034
        %vm2037 = vcmp.eq.f32.partialorder %v1891, 0.0
        %v2038 = vand.u32 %v1891, 2147483648
        %v2039 = vsel %vm2037, %v2038, %v2036
        %v2040 = vrsqrt.pop %v1892
        %v2041 = vmul.f32 %v2040, %v1892
        %v2042 = vmul.f32 %v2041, %v2040
        %v2043 = vmul.f32 0.5, %v2042
        %v2044 = vsub.f32 1.5, %v2043
        %v2045 = vmul.f32 %v2040, %v2044
        %v2046 = vmul.f32 %v1892, %v2045
        %vm2047 = vcmp.eq.f32.partialorder %v1892, inf
        %v2048 = vsel %vm2047, %v1892, %v2046
        %vm2049 = vcmp.eq.f32.partialorder %v1892, 0.0
        %v2050 = vand.u32 %v1892, 2147483648
        %v2051 = vsel %vm2049, %v2050, %v2048
        %v2052 = vrsqrt.pop %v1893
        %v2053 = vmul.f32 %v2052, %v1893
        %v2054 = vmul.f32 %v2053, %v2052
        %v2055 = vmul.f32 0.5, %v2054
        %v2056 = vsub.f32 1.5, %v2055
        %v2057 = vmul.f32 %v2052, %v2056
        %v2058 = vmul.f32 %v1893, %v2057
        %vm2059 = vcmp.eq.f32.partialorder %v1893, inf
        %v2060 = vsel %vm2059, %v1893, %v2058
        %vm2061 = vcmp.eq.f32.partialorder %v1893, 0.0
        %v2062 = vand.u32 %v1893, 2147483648
        %v2063 = vsel %vm2061, %v2062, %v2060
        %v2064 = vrsqrt.pop %v1894
        %v2065 = vmul.f32 %v2064, %v1894
        %v2066 = vmul.f32 %v2065, %v2064
        %v2067 = vmul.f32 0.5, %v2066
        %v2068 = vsub.f32 1.5, %v2067
        %v2069 = vmul.f32 %v2064, %v2068
        %v2070 = vmul.f32 %v1894, %v2069
        %vm2071 = vcmp.eq.f32.partialorder %v1894, inf
        %v2072 = vsel %vm2071, %v1894, %v2070
        %vm2073 = vcmp.eq.f32.partialorder %v1894, 0.0
        %v2074 = vand.u32 %v1894, 2147483648
        %v2075 = vsel %vm2073, %v2074, %v2072
        %v2076 = vrsqrt.pop %v1895
        %v2077 = vmul.f32 %v2076, %v1895
        %v2078 = vmul.f32 %v2077, %v2076
        %v2079 = vmul.f32 0.5, %v2078
        %v2080 = vsub.f32 1.5, %v2079
        %v2081 = vmul.f32 %v2076, %v2080
        %v2082 = vmul.f32 %v1895, %v2081
        %vm2083 = vcmp.eq.f32.partialorder %v1895, inf
        %v2084 = vsel %vm2083, %v1895, %v2082
        %vm2085 = vcmp.eq.f32.partialorder %v1895, 0.0
        %v2086 = vand.u32 %v1895, 2147483648
        %v2087 = vsel %vm2085, %v2086, %v2084
        %v2088 = vadd.f32 %v1907, 1e-06
        %v2089 = vadd.f32 %v1919, 1e-06
        %v2090 = vadd.f32 %v1931, 1e-06
        %v2091 = vadd.f32 %v1943, 1e-06
        %v2092 = vadd.f32 %v1955, 1e-06
        %v2093 = vadd.f32 %v1967, 1e-06
        %v2094 = vadd.f32 %v1979, 1e-06
        %v2095 = vadd.f32 %v1991, 1e-06
        %v2096 = vadd.f32 %v2003, 1e-06
        %v2097 = vadd.f32 %v2015, 1e-06
        %v2098 = vadd.f32 %v2027, 1e-06
        %v2099 = vadd.f32 %v2039, 1e-06
        %v2100 = vadd.f32 %v2051, 1e-06
        %v2101 = vadd.f32 %v2063, 1e-06
        %v2102 = vadd.f32 %v2075, 1e-06
        %v2103 = vadd.f32 %v2087, 1e-06
        %v2104 = vrcp.pop %v2088
        %v2105 = vmul.f32 %v2088, %v2104
        %v2106 = vsub.f32 1.0, %v2105
        %v2107 = vmul.f32 %v2104, %v2106
        %v2108 = vadd.f32 %v2104, %v2107
        %vm2109 = vweird.f32 %v2088
        %vm2110 = vweird.f32 %v2104
        %vm2111 = vmor %vm2109, %vm2110
        %v2112 = vsel %vm2111, %v2104, %v2108
        %v2113 = vand.u32 2147483647, %v2088
        %vm2114 = vcmp.eq.f32.partialorder %v2113, 8.507059e+37
        %v2115 = vand.u32 %v2088, 2147483648
        %v2116 = vor.u32 1.1754944e-38, %v2115
        %v2117 = vsel %vm2114, %v2116, %v2112
        %v2118 = vrcp.pop %v2089
        %v2119 = vmul.f32 %v2089, %v2118
        %v2120 = vsub.f32 1.0, %v2119
        %v2121 = vmul.f32 %v2118, %v2120
        %v2122 = vadd.f32 %v2118, %v2121
        %vm2123 = vweird.f32 %v2089
        %vm2124 = vweird.f32 %v2118
        %vm2125 = vmor %vm2123, %vm2124
        %v2126 = vsel %vm2125, %v2118, %v2122
        %v2127 = vand.u32 2147483647, %v2089
        %vm2128 = vcmp.eq.f32.partialorder %v2127, 8.507059e+37
        %v2129 = vand.u32 %v2089, 2147483648
        %v2130 = vor.u32 1.1754944e-38, %v2129
        %v2131 = vsel %vm2128, %v2130, %v2126
        %v2132 = vrcp.pop %v2090
        %v2133 = vmul.f32 %v2090, %v2132
        %v2134 = vsub.f32 1.0, %v2133
        %v2135 = vmul.f32 %v2132, %v2134
        %v2136 = vadd.f32 %v2132, %v2135
        %vm2137 = vweird.f32 %v2090
        %vm2138 = vweird.f32 %v2132
        %vm2139 = vmor %vm2137, %vm2138
        %v2140 = vsel %vm2139, %v2132, %v2136
        %v2141 = vand.u32 2147483647, %v2090
        %vm2142 = vcmp.eq.f32.partialorder %v2141, 8.507059e+37
        %v2143 = vand.u32 %v2090, 2147483648
        %v2144 = vor.u32 1.1754944e-38, %v2143
        %v2145 = vsel %vm2142, %v2144, %v2140
        %v2146 = vrcp.pop %v2091
        %v2147 = vmul.f32 %v2091, %v2146
        %v2148 = vsub.f32 1.0, %v2147
        %v2149 = vmul.f32 %v2146, %v2148
        %v2150 = vadd.f32 %v2146, %v2149
        %vm2151 = vweird.f32 %v2091
        %vm2152 = vweird.f32 %v2146
        %vm2153 = vmor %vm2151, %vm2152
        %v2154 = vsel %vm2153, %v2146, %v2150
        %v2155 = vand.u32 2147483647, %v2091
        %vm2156 = vcmp.eq.f32.partialorder %v2155, 8.507059e+37
        %v2157 = vand.u32 %v2091, 2147483648
        %v2158 = vor.u32 1.1754944e-38, %v2157
        %v2159 = vsel %vm2156, %v2158, %v2154
        %v2160 = vrcp.pop %v2092
        %v2161 = vmul.f32 %v2092, %v2160
        %v2162 = vsub.f32 1.0, %v2161
        %v2163 = vmul.f32 %v2160, %v2162
        %v2164 = vadd.f32 %v2160, %v2163
        %vm2165 = vweird.f32 %v2092
        %vm2166 = vweird.f32 %v2160
        %vm2167 = vmor %vm2165, %vm2166
        %v2168 = vsel %vm2167, %v2160, %v2164
        %v2169 = vand.u32 2147483647, %v2092
        %vm2170 = vcmp.eq.f32.partialorder %v2169, 8.507059e+37
        %v2171 = vand.u32 %v2092, 2147483648
        %v2172 = vor.u32 1.1754944e-38, %v2171
        %v2173 = vsel %vm2170, %v2172, %v2168
        %v2174 = vrcp.pop %v2093
        %v2175 = vmul.f32 %v2093, %v2174
        %v2176 = vsub.f32 1.0, %v2175
        %v2177 = vmul.f32 %v2174, %v2176
        %v2178 = vadd.f32 %v2174, %v2177
        %vm2179 = vweird.f32 %v2093
        %vm2180 = vweird.f32 %v2174
        %vm2181 = vmor %vm2179, %vm2180
        %v2182 = vsel %vm2181, %v2174, %v2178
        %v2183 = vand.u32 2147483647, %v2093
        %vm2184 = vcmp.eq.f32.partialorder %v2183, 8.507059e+37
        %v2185 = vand.u32 %v2093, 2147483648
        %v2186 = vor.u32 1.1754944e-38, %v2185
        %v2187 = vsel %vm2184, %v2186, %v2182
        %v2188 = vrcp.pop %v2094
        %v2189 = vmul.f32 %v2094, %v2188
        %v2190 = vsub.f32 1.0, %v2189
        %v2191 = vmul.f32 %v2188, %v2190
        %v2192 = vadd.f32 %v2188, %v2191
        %vm2193 = vweird.f32 %v2094
        %vm2194 = vweird.f32 %v2188
        %vm2195 = vmor %vm2193, %vm2194
        %v2196 = vsel %vm2195, %v2188, %v2192
        %v2197 = vand.u32 2147483647, %v2094
        %vm2198 = vcmp.eq.f32.partialorder %v2197, 8.507059e+37
        %v2199 = vand.u32 %v2094, 2147483648
        %v2200 = vor.u32 1.1754944e-38, %v2199
        %v2201 = vsel %vm2198, %v2200, %v2196
        %v2202 = vrcp.pop %v2095
        %v2203 = vmul.f32 %v2095, %v2202
        %v2204 = vsub.f32 1.0, %v2203
        %v2205 = vmul.f32 %v2202, %v2204
        %v2206 = vadd.f32 %v2202, %v2205
        %vm2207 = vweird.f32 %v2095
        %vm2208 = vweird.f32 %v2202
        %vm2209 = vmor %vm2207, %vm2208
        %v2210 = vsel %vm2209, %v2202, %v2206
        %v2211 = vand.u32 2147483647, %v2095
        %vm2212 = vcmp.eq.f32.partialorder %v2211, 8.507059e+37
        %v2213 = vand.u32 %v2095, 2147483648
        %v2214 = vor.u32 1.1754944e-38, %v2213
        %v2215 = vsel %vm2212, %v2214, %v2210
        %v2216 = vrcp.pop %v2096
        %v2217 = vmul.f32 %v2096, %v2216
        %v2218 = vsub.f32 1.0, %v2217
        %v2219 = vmul.f32 %v2216, %v2218
        %v2220 = vadd.f32 %v2216, %v2219
        %vm2221 = vweird.f32 %v2096
        %vm2222 = vweird.f32 %v2216
        %vm2223 = vmor %vm2221, %vm2222
        %v2224 = vsel %vm2223, %v2216, %v2220
        %v2225 = vand.u32 2147483647, %v2096
        %vm2226 = vcmp.eq.f32.partialorder %v2225, 8.507059e+37
        %v2227 = vand.u32 %v2096, 2147483648
        %v2228 = vor.u32 1.1754944e-38, %v2227
        %v2229 = vsel %vm2226, %v2228, %v2224
        %v2230 = vrcp.pop %v2097
        %v2231 = vmul.f32 %v2097, %v2230
        %v2232 = vsub.f32 1.0, %v2231
        %v2233 = vmul.f32 %v2230, %v2232
        %v2234 = vadd.f32 %v2230, %v2233
        %vm2235 = vweird.f32 %v2097
        %vm2236 = vweird.f32 %v2230
        %vm2237 = vmor %vm2235, %vm2236
        %v2238 = vsel %vm2237, %v2230, %v2234
        %v2239 = vand.u32 2147483647, %v2097
        %vm2240 = vcmp.eq.f32.partialorder %v2239, 8.507059e+37
        %v2241 = vand.u32 %v2097, 2147483648
        %v2242 = vor.u32 1.1754944e-38, %v2241
        %v2243 = vsel %vm2240, %v2242, %v2238
        %v2244 = vrcp.pop %v2098
        %v2245 = vmul.f32 %v2098, %v2244
        %v2246 = vsub.f32 1.0, %v2245
        %v2247 = vmul.f32 %v2244, %v2246
        %v2248 = vadd.f32 %v2244, %v2247
        %vm2249 = vweird.f32 %v2098
        %vm2250 = vweird.f32 %v2244
        %vm2251 = vmor %vm2249, %vm2250
        %v2252 = vsel %vm2251, %v2244, %v2248
        %v2253 = vand.u32 2147483647, %v2098
        %vm2254 = vcmp.eq.f32.partialorder %v2253, 8.507059e+37
        %v2255 = vand.u32 %v2098, 2147483648
        %v2256 = vor.u32 1.1754944e-38, %v2255
        %v2257 = vsel %vm2254, %v2256, %v2252
        %v2258 = vrcp.pop %v2099
        %v2259 = vmul.f32 %v2099, %v2258
        %v2260 = vsub.f32 1.0, %v2259
        %v2261 = vmul.f32 %v2258, %v2260
        %v2262 = vadd.f32 %v2258, %v2261
        %vm2263 = vweird.f32 %v2099
        %vm2264 = vweird.f32 %v2258
        %vm2265 = vmor %vm2263, %vm2264
        %v2266 = vsel %vm2265, %v2258, %v2262
        %v2267 = vand.u32 2147483647, %v2099
        %vm2268 = vcmp.eq.f32.partialorder %v2267, 8.507059e+37
        %v2269 = vand.u32 %v2099, 2147483648
        %v2270 = vor.u32 1.1754944e-38, %v2269
        %v2271 = vsel %vm2268, %v2270, %v2266
        %v2272 = vrcp.pop %v2100
        %v2273 = vmul.f32 %v2100, %v2272
        %v2274 = vsub.f32 1.0, %v2273
        %v2275 = vmul.f32 %v2272, %v2274
        %v2276 = vadd.f32 %v2272, %v2275
        %vm2277 = vweird.f32 %v2100
        %vm2278 = vweird.f32 %v2272
        %vm2279 = vmor %vm2277, %vm2278
        %v2280 = vsel %vm2279, %v2272, %v2276
        %v2281 = vand.u32 2147483647, %v2100
        %vm2282 = vcmp.eq.f32.partialorder %v2281, 8.507059e+37
        %v2283 = vand.u32 %v2100, 2147483648
        %v2284 = vor.u32 1.1754944e-38, %v2283
        %v2285 = vsel %vm2282, %v2284, %v2280
        %v2286 = vrcp.pop %v2101
        %v2287 = vmul.f32 %v2101, %v2286
        %v2288 = vsub.f32 1.0, %v2287
        %v2289 = vmul.f32 %v2286, %v2288
        %v2290 = vadd.f32 %v2286, %v2289
        %vm2291 = vweird.f32 %v2101
        %vm2292 = vweird.f32 %v2286
        %vm2293 = vmor %vm2291, %vm2292
        %v2294 = vsel %vm2293, %v2286, %v2290
        %v2295 = vand.u32 2147483647, %v2101
        %vm2296 = vcmp.eq.f32.partialorder %v2295, 8.507059e+37
        %v2297 = vand.u32 %v2101, 2147483648
        %v2298 = vor.u32 1.1754944e-38, %v2297
        %v2299 = vsel %vm2296, %v2298, %v2294
        %v2300 = vrcp.pop %v2102
        %v2301 = vmul.f32 %v2102, %v2300
        %v2302 = vsub.f32 1.0, %v2301
        %v2303 = vmul.f32 %v2300, %v2302
        %v2304 = vadd.f32 %v2300, %v2303
        %vm2305 = vweird.f32 %v2102
        %vm2306 = vweird.f32 %v2300
        %vm2307 = vmor %vm2305, %vm2306
        %v2308 = vsel %vm2307, %v2300, %v2304
        %v2309 = vand.u32 2147483647, %v2102
        %vm2310 = vcmp.eq.f32.partialorder %v2309, 8.507059e+37
        %v2311 = vand.u32 %v2102, 2147483648
        %v2312 = vor.u32 1.1754944e-38, %v2311
        %v2313 = vsel %vm2310, %v2312, %v2308
        %v2314 = vrcp.pop %v2103
        %v2315 = vmul.f32 %v2103, %v2314
        %v2316 = vsub.f32 1.0, %v2315
        %v2317 = vmul.f32 %v2314, %v2316
        %v2318 = vadd.f32 %v2314, %v2317
        %vm2319 = vweird.f32 %v2103
        %vm2320 = vweird.f32 %v2314
        %vm2321 = vmor %vm2319, %vm2320
        %v2322 = vsel %vm2321, %v2314, %v2318
        %v2323 = vand.u32 2147483647, %v2103
        %vm2324 = vcmp.eq.f32.partialorder %v2323, 8.507059e+37
        %v2325 = vand.u32 %v2103, 2147483648
        %v2326 = vor.u32 1.1754944e-38, %v2325
        %v2327 = vsel %vm2324, %v2326, %v2322
        %v2328 = vld [vmem:[%s11] sm:$0x1]
        %v2329 = vmul.f32 %v1800, %v2117
        %v2330 = vmul.f32 %v1801, %v2131
        %v2331 = vmul.f32 %v1802, %v2145
        %v2332 = vmul.f32 %v1803, %v2159
        %v2333 = vmul.f32 %v1804, %v2173
        %v2334 = vmul.f32 %v1805, %v2187
        %v2335 = vmul.f32 %v1806, %v2201
        %v2336 = vmul.f32 %v1807, %v2215
        %v2337 = vmul.f32 %v1808, %v2229
        %v2338 = vmul.f32 %v1809, %v2243
        %v2339 = vmul.f32 %v1810, %v2257
        %v2340 = vmul.f32 %v1811, %v2271
        %v2341 = vmul.f32 %v1812, %v2285
        %v2342 = vmul.f32 %v1813, %v2299
        %v2343 = vmul.f32 %v1814, %v2313
        %v2344 = vmul.f32 %v1815, %v2327
        %v2346 = vperm.slane %v2328, 0
        %v2348 = vmul.f32 %v2346, %v2329
        %v2349 = vmul.f32 %v2346, %v2330
        %v2350 = vmul.f32 %v2346, %v2331
        %v2351 = vmul.f32 %v2346, %v2332
        %v2352 = vmul.f32 %v2346, %v2333
        %v2353 = vmul.f32 %v2346, %v2334
        %v2354 = vmul.f32 %v2346, %v2335
        %v2355 = vmul.f32 %v2346, %v2336
        %v2356 = vmul.f32 %v2346, %v2337
        %v2357 = vmul.f32 %v2346, %v2338
        %v2358 = vmul.f32 %v2346, %v2339
        %v2359 = vmul.f32 %v2346, %v2340
        %v2360 = vmul.f32 %v2346, %v2341
        %v2361 = vmul.f32 %v2346, %v2342
        %v2362 = vmul.f32 %v2346, %v2343
        %v2363 = vmul.f32 %v2346, %v2344
        %v2364 = vld [vmem:[%s12] sm:$0x1]
        %v2366 = vperm.slane %v2364, 0
        %v2368 = vadd.f32 %v2348, %v2366
        %v2369 = vadd.f32 %v2349, %v2366
        %v2370 = vadd.f32 %v2350, %v2366
        %v2371 = vadd.f32 %v2351, %v2366
        %v2372 = vadd.f32 %v2352, %v2366
        %v2373 = vadd.f32 %v2353, %v2366
        %v2374 = vadd.f32 %v2354, %v2366
        %v2375 = vadd.f32 %v2355, %v2366
        %v2376 = vadd.f32 %v2356, %v2366
        %v2377 = vadd.f32 %v2357, %v2366
        %v2378 = vadd.f32 %v2358, %v2366
        %v2379 = vadd.f32 %v2359, %v2366
        %v2380 = vadd.f32 %v2360, %v2366
        %v2381 = vadd.f32 %v2361, %v2366
        %v2382 = vadd.f32 %v2362, %v2366
        %v2383 = vadd.f32 %v2363, %v2366
        %v2384 = vsel %vm1132, 0.0, %v2368
        %v2385 = vsel %vm1133, 0.0, %v2369
        %v2386 = vsel %vm1134, 0.0, %v2370
        %v2387 = vsel %vm1135, 0.0, %v2371
        %v2388 = vsel %vm1136, 0.0, %v2372
        %v2389 = vsel %vm1137, 0.0, %v2373
        %v2390 = vsel %vm1138, 0.0, %v2374
        %v2391 = vsel %vm1139, 0.0, %v2375
        %v2392 = vsel %vm1140, 0.0, %v2376
        %v2393 = vsel %vm1141, 0.0, %v2377
        %v2394 = vsel %vm1142, 0.0, %v2378
        %v2395 = vsel %vm1143, 0.0, %v2379
        %v2396 = vsel %vm1144, 0.0, %v2380
        %v2397 = vsel %vm1145, 0.0, %v2381
        %v2398 = vsel %vm1146, 0.0, %v2382
        %v2399 = vsel %vm1147, 0.0, %v2383
        %2400 = vst.msk [vmem:[%s594] sm:$0xff] %vm657, %v2384
        %2401 = vst.msk [vmem:[%s594 + $0x8] sm:$0xff] %vm657, %v2385
        %2402 = vst.msk [vmem:[%s594 + $0x10] sm:$0xff] %vm657, %v2386
        %2403 = vst.msk [vmem:[%s594 + $0x18] sm:$0xff] %vm657, %v2387
        %2404 = vst.msk [vmem:[%s594 + $0x20] sm:$0xff] %vm657, %v2388
        %2405 = vst.msk [vmem:[%s594 + $0x28] sm:$0xff] %vm657, %v2389
        %2406 = vst.msk [vmem:[%s594 + $0x30] sm:$0xff] %vm657, %v2390
        %2407 = vst.msk [vmem:[%s594 + $0x38] sm:$0xff] %vm657, %v2391
        %2408 = vst.msk [vmem:[%s594 + $0x40] sm:$0xff] %vm657, %v2392
        %2409 = vst.msk [vmem:[%s594 + $0x48] sm:$0xff] %vm657, %v2393
        %2410 = vst.msk [vmem:[%s594 + $0x50] sm:$0xff] %vm657, %v2394
        %2411 = vst.msk [vmem:[%s594 + $0x58] sm:$0xff] %vm657, %v2395
        %2412 = vst.msk [vmem:[%s594 + $0x60] sm:$0xff] %vm657, %v2396
        %2413 = vst.msk [vmem:[%s594 + $0x68] sm:$0xff] %vm657, %v2397
        %2414 = vst.msk [vmem:[%s594 + $0x70] sm:$0xff] %vm657, %v2398
        %2415 = vst.msk [vmem:[%s594 + $0x78] sm:$0xff] %vm657, %v2399
        %s2416 = sand.u32 %s372, 1
        %s2417 = scalar_lea.sflag [#allocation4], %s2416
        %s2418 = sand.u32 %s372, 1
        %s2419 = smul.addr %s2418, 128
        %s2420 = scalar_lea.vmem [#allocation10], %s2419
        // Predicated region
        $region97: #{tpu_custom_call.1} parent=79 // pred_check
          %p2421 = pneg %p382
        $region98: #{tpu_custom_call.1} parent=79 // pred_check_branch
          %2423 = sbr.rel (%p2421) target = $region100
        $region99: #{tpu_custom_call.1} parent=79 // pred_region
          %s2424 = smul.u32 16, %s34
          %2426 = vsyncadd %s2417, 0
          %s2427 = smul.addr %s2424, 8
          %s2428 = scalar_lea.hbm %s15, %s2427
          %s2429 = sshll.u32 %s2420, 4
          %s2430 = int_to_ptr.vmem [resolvable:$true] %s2429
          %s2431 = sshll.u32 %s2428, 4
          %s2432 = int_to_ptr.hbm [resolvable:$true] %s2431
          %2437 = dma.vmem_to_hbm [thread:$0]  %s2430, 2048, %s2432, %s2417, 128, 128, 8
        $region100: #{tpu_custom_call.1} parent=79 // pred_fallthru
          _
      $region80: #{tpu_custom_call.1} parent=5 // pred_fallthru
        _
      %p2438 = scmp.le.s32.totalorder 2, %s29
      // Predicated region
      $region101: #{tpu_custom_call.1} parent=5 // pred_check
        %p2439 = pneg %p2438
      $region102: #{tpu_custom_call.1} parent=5 // pred_check_branch
        %2441 = sbr.rel (%p2439) target = $region104
      $region103: #{tpu_custom_call.1} parent=5 // pred_region
        %s2442 = ssub.s32 %s29, 2
        // Predicated region
        $region105: #{tpu_custom_call.1} parent=103 // pred_check
          %p2443 = pneg %p388
        $region106: #{tpu_custom_call.1} parent=103 // pred_check_branch
          %2445 = sbr.rel (%p2443) target = $region108
        $region107: #{tpu_custom_call.1} parent=103 // pred_region
          %s2446 = sand.u32 %s373, 1
          %s2447 = scalar_lea.sflag [#allocation4], %s2446
          %s2448 = sand.u32 %s373, 1
          %s2449 = smul.addr %s2448, 128
          %s2450 = scalar_lea.vmem [#allocation10], %s2449
          %2452 = dma.done %s2447, 2048
        $region108: #{tpu_custom_call.1} parent=103 // pred_fallthru
          _
      $region104: #{tpu_custom_call.1} parent=5 // pred_fallthru
        _
    $region6: #{tpu_custom_call.1} parent=1 // loop_footer
      %s33 = sadd.s32 1, %s29
    $region7: #{tpu_custom_call.1} parent=1 // loop_footer_branch
      %28 = sbr.rel target = $region3
    $region8: #{tpu_custom_call.1} parent=1 // loop_exit
      _
    %2453 = vsyncpa [#allocation3], 1
    %s2454 = scalar_lea.sflag [#allocation3], 1
    %2455 = vsyncpa %s2454, 1
    %2456 = vsyncpa [#allocation6], 1
    %2457 = vsyncpa [#allocation9], 1
    %2458 = vsyncpa [#allocation4], 1
    %s2459 = scalar_lea.sflag [#allocation4], 1
    %2460 = vsyncpa %s2459, 1

</llo_original>
